<compile_context>
chip_gen: v7x
topology: tpu7x:2x2x1
jax: 0.10.0
libtpu: 0.0.40
codegen_flags: <defaults>
</compile_context>

<pallas_src>
import math
import functools

import jax
import jax.numpy as jnp
from jax.experimental import pallas as pl
from jax.experimental.pallas import tpu as pltpu


def _round_up(n, m):
    return ((n + m - 1) // m) * m


# ---------------------------------------------------------------------------
# Kernel: single grid step, whole batch, all heads fused.
# ---------------------------------------------------------------------------
def _mha_kernel(x_ref, w_ref, bp_ref, o_ref, qkv_ref, *,
                num_head, seq_len, batch):
    """
    x_ref   : (BSp, Dp)      f32  flattened (batch*seq) tokens; column D holds
                                  the constant 1.0 (bias lane), rest zero-pad.
    w_ref   : (Dp, 3*H*HB)   f32  packed fused weight.  For head h:
                                    lanes [ h*HB      : +dph] = Wq_h / sqrt(dph)
                                    lanes [(H+h)*HB   : +dph] = Wk_h
                                    lanes [(2H+h)*HB  : +D  ] = Wv_h @ Wp_h
                                  row D of each block = matching folded bias.
    bp_ref  : (1, Dp)        f32  output-projection bias (zero padded).
    o_ref   : (BSp, Dp)      f32
    qkv_ref : (BSp, 3*H*HB)  f32  VMEM scratch for the fused projection.
    """
    H = num_head
    S = seq_len
    HB = w_ref.shape[1] // (3 * H)            # 128-lane block per head / stream

    # ONE fused MXU matmul produces Q, K and the already-projected V' for all
    # heads and all batch elements; scale and biases are pre-folded (ones-lane).
    qkv_ref[...] = jnp.dot(x_ref[...], w_ref[...],
                           preferred_element_type=jnp.float32)

    bp = bp_ref[...]                          # (1, Dp)

    for b in range(batch):                    # static unroll: B*H tiny tiles
        r0 = b * S
        acc = jnp.zeros((S, o_ref.shape[1]), jnp.float32)
        for h in range(H):
            # Full-lane (128) / 8-sublane-aligned static slices of the scratch
            # ref: plain vector loads, no lane shuffles.
            q = qkv_ref[r0:r0 + S, h * HB:(h + 1) * HB]                    # (S,HB)
            k = qkv_ref[r0:r0 + S, (H + h) * HB:(H + h + 1) * HB]          # (S,HB)
            v = qkv_ref[r0:r0 + S, (2 * H + h) * HB:(2 * H + h + 1) * HB]  # (S,HB)

            # scores = (Q/sqrt(d)) @ K^T ; zero-padded lanes contribute 0.
            s = jnp.einsum('qe,ke->qk', q, k,
                           preferred_element_type=jnp.float32)             # (S,S)
            m = jnp.max(s, axis=-1, keepdims=True)
            e = jnp.exp(s - m)
            attn = e / jnp.sum(e, axis=-1, keepdims=True)                  # exact softmax

            # v already carries this head's slice of the output projection.
            acc = acc + jnp.dot(attn, v, preferred_element_type=jnp.float32)

        # Lane-dense store, written exactly once per batch element.
        o_ref[r0:r0 + S, :] = (acc + bp).astype(o_ref.dtype)


# ---------------------------------------------------------------------------
# Per-call wrapper (only pads x; weights arrive pre-packed).
# ---------------------------------------------------------------------------
@functools.partial(jax.jit, static_argnames=("num_head",))
def multi_head_attention(x, w_fused, bp_pad, *, num_head):
    """x: (B, S, D) float32.  w_fused / bp_pad come from pack_params()."""
    B, S, D = x.shape
    Dp, Ef = w_fused.shape
    BS = B * S
    BSp = _round_up(BS, 8)                    # sublane-aligned token count

    # Per-call work: flatten tokens, zero-pad the model dim to 128 lanes and
    # set the bias lane (column D) to 1.0 so the fused matmul adds the biases.
    x_p = jnp.zeros((BSp, Dp), x.dtype)
    x_p = x_p.at[:BS, :D].set(x.reshape(BS, D))
    x_p = x_p.at[:BS, D].set(1.0)

    kernel = functools.partial(_mha_kernel, num_head=num_head,
                               seq_len=S, batch=B)

    out_p = pl.pallas_call(
        kernel,
        out_shape=jax.ShapeDtypeStruct((BSp, Dp), x.dtype),
        grid=(1,),                            # whole batch in one grid step
        in_specs=[
            pl.BlockSpec((BSp, Dp), lambda i: (0, 0)),   # tokens
            pl.BlockSpec((Dp, Ef),  lambda i: (0, 0)),   # fused packed weight
            pl.BlockSpec((1, Dp),   lambda i: (0, 0)),   # projection bias
        ],
        out_specs=pl.BlockSpec((BSp, Dp), lambda i: (0, 0)),
        scratch_shapes=[pltpu.VMEM((BSp, Ef), jnp.float32)],
        compiler_params=pltpu.CompilerParams(
            dimension_semantics=("arbitrary",)),
    )(x_p, w_fused, bp_pad)

    return out_p[:BS, :D].reshape(B, S, D)


# ---------------------------------------------------------------------------
# One-time (init-path) weight packing.
# ---------------------------------------------------------------------------
def pack_params(params):
    """Fold scale, all Q/K/V biases and the output projection Wp into a single
    (Dp, 3*H*128) matrix; runs once at init, NOT in the per-call path."""
    wq, bq = params['wq'], params['bq']       # (H, D, dph), (H, 1, dph)
    wk, bk = params['wk'], params['bk']
    wv, bv = params['wv'], params['bv']
    wp, bp = params['wp'], params['bp']       # (H, dph, D), (1, D)
    H, D, dph = wq.shape
    scale = 1.0 / math.sqrt(dph)

    HB = _round_up(D + 1, 128)                # per-head lane block; bias row @ D
    Ef = 3 * H * HB

    w = jnp.zeros((HB, Ef), jnp.float32)
    for h in range(H):
        qc, kc, vc = h * HB, (H + h) * HB, (2 * H + h) * HB
        w = w.at[:D, qc:qc + dph].set(wq[h] * scale)     # pre-scaled Q weights
        w = w.at[D,  qc:qc + dph].set(bq[h][0] * scale)  # pre-scaled Q bias
        w = w.at[:D, kc:kc + dph].set(wk[h])
        w = w.at[D,  kc:kc + dph].set(bk[h][0])
        w = w.at[:D, vc:vc + D].set(wv[h] @ wp[h])       # fold Wp into Wv
        w = w.at[D,  vc:vc + D].set(bv[h][0] @ wp[h])    # fold Wp into bv
    bp_pad = jnp.zeros((1, HB), jnp.float32).at[:, :D].set(bp)
    return {'w_fused': w, 'bp': bp_pad, 'num_head': H}


# ---------------------------------------------------------------------------
# Parameters + pure-JAX reference (mirrors the PyTorch module exactly).
# ---------------------------------------------------------------------------
def init_params(key, dim_model, num_head):
    """PyTorch Linear(in, out).weight is (out, in); we store (in, out), stacked
    over heads, so y = x @ W + b matches torch's x @ W^T + b."""
    dph = dim_model // num_head
    keys = jax.random.split(key, 8)

    def u(k, shape, fan_in):
        bound = 1.0 / math.sqrt(fan_in)
        return jax.random.uniform(k, shape, jnp.float32, -bound, bound)

    return dict(
        wq=u(keys[0], (num_head, dim_model, dph), dim_model),
        bq=u(keys[1], (num_head, 1, dph), dim_model),
        wk=u(keys[2], (num_head, dim_model, dph), dim_model),
        bk=u(keys[3], (num_head, 1, dph), dim_model),
        wv=u(keys[4], (num_head, dim_model, dph), dim_model),
        bv=u(keys[5], (num_head, 1, dph), dim_model),
        wp=u(keys[6], (num_head * dph, dim_model), num_head * dph).reshape(
            num_head, dph, dim_model),
        bp=u(keys[7], (1, dim_model), num_head * dph),
    )


def reference_mha(x, params):
    H, D, dph = params['wq'].shape
    heads = []
    for h in range(H):
        q = x @ params['wq'][h] + params['bq'][h][0]
        k = x @ params['wk'][h] + params['bk'][h][0]
        v = x @ params['wv'][h] + params['bv'][h][0]
        scores = jnp.einsum('bqe,bke->bqk', q, k) / math.sqrt(dph)
        attn = jax.nn.softmax(scores, axis=2)
        heads.append(jnp.einsum('bqk,bke->bqe', attn, v))
    cat = jnp.concatenate(heads, axis=-1)                # (B, S, H*dph)
    wp_full = params['wp'].reshape(H * dph, D)
    return cat @ wp_full + params['bp'][0]


if __name__ == "__main__":
    B, S = 2, 8
    num_head = 9
    dim_model = 36                      # dim_per_head = 4
    key = jax.random.PRNGKey(0)
    k_x, k_p = jax.random.split(key)

    x = jax.random.normal(k_x, (B, S, dim_model), jnp.float32)
    params = init_params(k_p, dim_model, num_head)

    packed = pack_params(params)        # init-time packing (not per-call)

    out = multi_head_attention(x, packed['w_fused'], packed['bp'],
                               num_head=packed['num_head'])
    out = jax.block_until_ready(out)

    ref = reference_mha(x, params)
    assert out.shape == (B, S, dim_model)
    err = jnp.max(jnp.abs(out - ref))
    assert jnp.allclose(out, ref, rtol=1e-3, atol=1e-3), f"max abs err = {err}"

    print("KERNEL_OK")
</pallas_src>

<mosaic_0001>
module attributes {stable_mosaic.version = 11 : i64} {
  func.func @_mha_kernel(%arg0: i32, %arg1: memref<16x128xf32, #tpu.memory_space<vmem>>, %arg2: memref<128x3456xf32, #tpu.memory_space<vmem>>, %arg3: memref<1x128xf32, #tpu.memory_space<vmem>>, %arg4: memref<16x128xf32, #tpu.memory_space<vmem>>, %arg5: memref<16x3456xf32, #tpu.memory_space<vmem>>) attributes {dimension_semantics = [#tpu.dimension_semantics<arbitrary>], iteration_bounds = array<i64: 1>, scalar_prefetch = 0 : i64, scratch_operands = 1 : i64, tpu.core_type = #tpu.core_type<tc>, window_params = [{pipeline_mode = #tpu.pipeline_mode<synchronous>, transform_indices = @transform_0, window_bounds = array<i64: 16, 128>}, {pipeline_mode = #tpu.pipeline_mode<synchronous>, transform_indices = @transform_1, window_bounds = array<i64: 128, 3456>}, {pipeline_mode = #tpu.pipeline_mode<synchronous>, transform_indices = @transform_2, window_bounds = array<i64: 1, 128>}, {pipeline_mode = #tpu.pipeline_mode<synchronous>, transform_indices = @transform_3, window_bounds = array<i64: 16, 128>}]} {
    %c0 = arith.constant 0 : index
    %c0_0 = arith.constant 0 : index
    %0 = vector.load %arg1[%c0, %c0_0] : memref<16x128xf32, #tpu.memory_space<vmem>>, vector<16x128xf32>
    %c0_1 = arith.constant 0 : index
    %c0_2 = arith.constant 0 : index
    %1 = vector.load %arg2[%c0_1, %c0_2] : memref<128x3456xf32, #tpu.memory_space<vmem>>, vector<128x3456xf32>
    %cst = arith.constant dense<0.000000e+00> : vector<16x3456xf32>
    %2 = tpu.matmul %0, %1, %cst {dimension_numbers = #tpu.dot_dimension_numbers<[1], [0], [0], [1], [0, 0, 1, 1], [], []>} : vector<16x128xf32>, vector<128x3456xf32>, vector<16x3456xf32> -> vector<16x3456xf32>
    %c0_3 = arith.constant 0 : index
    %c0_4 = arith.constant 0 : index
    %3 = vector.load %arg5[%c0_3, %c0_4] : memref<16x3456xf32, #tpu.memory_space<vmem>>, vector<16x3456xf32>
    tpu.vector_store %arg5[%c0_3, %c0_4], %2 {strides = array<i32>} : memref<16x3456xf32, #tpu.memory_space<vmem>>, vector<16x3456xf32>,
    %c0_5 = arith.constant 0 : index
    %c0_6 = arith.constant 0 : index
    %4 = vector.load %arg3[%c0_5, %c0_6] : memref<1x128xf32, #tpu.memory_space<vmem>>, vector<1x128xf32>
    %cst_7 = arith.constant 0.000000e+00 : f32
    %5 = vector.broadcast %cst_7 : f32 to vector<8x128xf32>
    %c0_8 = arith.constant 0 : index
    %c0_9 = arith.constant 0 : index
    %6 = vector.load %arg5[%c0_8, %c0_9] : memref<16x3456xf32, #tpu.memory_space<vmem>>, vector<8x128xf32>
    %c0_10 = arith.constant 0 : index
    %c1152 = arith.constant 1152 : index
    %7 = vector.load %arg5[%c0_10, %c1152] : memref<16x3456xf32, #tpu.memory_space<vmem>>, vector<8x128xf32>
    %c0_11 = arith.constant 0 : index
    %c2304 = arith.constant 2304 : index
    %8 = vector.load %arg5[%c0_11, %c2304] : memref<16x3456xf32, #tpu.memory_space<vmem>>, vector<8x128xf32>
    "tpu.trace_start"() <{level = 10 : i32, message = "qe,ke->qk"}> : () -> ()
    %cst_12 = arith.constant dense<0.000000e+00> : vector<8x8xf32>
    %9 = tpu.matmul %6, %7, %cst_12 {dimension_numbers = #tpu.dot_dimension_numbers<[1], [1], [0], [0], [0, 0, 1, 0], [], []>} : vector<8x128xf32>, vector<8x128xf32>, vector<8x8xf32> -> vector<8x8xf32>
    "tpu.trace_stop"() : () -> ()
    %cst_13 = arith.constant dense<0xFF800000> : vector<8xf32>
    %10 = vector.multi_reduction <maximumf>, %9, %cst_13 [1] : vector<8x8xf32> to vector<8xf32>
    %11 = vector.shape_cast %10 : vector<8xf32> to vector<8x1xf32>
    %12 = vector.broadcast %11 : vector<8x1xf32> to vector<8x8xf32>
    %13 = arith.subf %9, %12 : vector<8x8xf32>
    %14 = math.exp %13 : vector<8x8xf32>
    %cst_14 = arith.constant dense<0.000000e+00> : vector<8xf32>
    %15 = vector.multi_reduction <add>, %14, %cst_14 [1] : vector<8x8xf32> to vector<8xf32>
    %16 = vector.shape_cast %15 : vector<8xf32> to vector<8x1xf32>
    %17 = vector.broadcast %16 : vector<8x1xf32> to vector<8x8xf32>
    %18 = arith.divf %14, %17 : vector<8x8xf32>
    %cst_15 = arith.constant dense<0.000000e+00> : vector<8x128xf32>
    %19 = tpu.matmul %18, %8, %cst_15 {dimension_numbers = #tpu.dot_dimension_numbers<[1], [0], [0], [1], [0, 0, 1, 1], [], []>} : vector<8x8xf32>, vector<8x128xf32>, vector<8x128xf32> -> vector<8x128xf32>
    %20 = arith.addf %5, %19 : vector<8x128xf32>
    %c0_16 = arith.constant 0 : index
    %c128 = arith.constant 128 : index
    %21 = vector.load %arg5[%c0_16, %c128] : memref<16x3456xf32, #tpu.memory_space<vmem>>, vector<8x128xf32>
    %c0_17 = arith.constant 0 : index
    %c1280 = arith.constant 1280 : index
    %22 = vector.load %arg5[%c0_17, %c1280] : memref<16x3456xf32, #tpu.memory_space<vmem>>, vector<8x128xf32>
    %c0_18 = arith.constant 0 : index
    %c2432 = arith.constant 2432 : index
    %23 = vector.load %arg5[%c0_18, %c2432] : memref<16x3456xf32, #tpu.memory_space<vmem>>, vector<8x128xf32>
    "tpu.trace_start"() <{level = 10 : i32, message = "qe,ke->qk"}> : () -> ()
    %cst_19 = arith.constant dense<0.000000e+00> : vector<8x8xf32>
    %24 = tpu.matmul %21, %22, %cst_19 {dimension_numbers = #tpu.dot_dimension_numbers<[1], [1], [0], [0], [0, 0, 1, 0], [], []>} : vector<8x128xf32>, vector<8x128xf32>, vector<8x8xf32> -> vector<8x8xf32>
    "tpu.trace_stop"() : () -> ()
    %cst_20 = arith.constant dense<0xFF800000> : vector<8xf32>
    %25 = vector.multi_reduction <maximumf>, %24, %cst_20 [1] : vector<8x8xf32> to vector<8xf32>
    %26 = vector.shape_cast %25 : vector<8xf32> to vector<8x1xf32>
    %27 = vector.broadcast %26 : vector<8x1xf32> to vector<8x8xf32>
    %28 = arith.subf %24, %27 : vector<8x8xf32>
    %29 = math.exp %28 : vector<8x8xf32>
    %cst_21 = arith.constant dense<0.000000e+00> : vector<8xf32>
    %30 = vector.multi_reduction <add>, %29, %cst_21 [1] : vector<8x8xf32> to vector<8xf32>
    %31 = vector.shape_cast %30 : vector<8xf32> to vector<8x1xf32>
    %32 = vector.broadcast %31 : vector<8x1xf32> to vector<8x8xf32>
    %33 = arith.divf %29, %32 : vector<8x8xf32>
    %cst_22 = arith.constant dense<0.000000e+00> : vector<8x128xf32>
    %34 = tpu.matmul %33, %23, %cst_22 {dimension_numbers = #tpu.dot_dimension_numbers<[1], [0], [0], [1], [0, 0, 1, 1], [], []>} : vector<8x8xf32>, vector<8x128xf32>, vector<8x128xf32> -> vector<8x128xf32>
    %35 = arith.addf %20, %34 : vector<8x128xf32>
    %c0_23 = arith.constant 0 : index
    %c256 = arith.constant 256 : index
    %36 = vector.load %arg5[%c0_23, %c256] : memref<16x3456xf32, #tpu.memory_space<vmem>>, vector<8x128xf32>
    %c0_24 = arith.constant 0 : index
    %c1408 = arith.constant 1408 : index
    %37 = vector.load %arg5[%c0_24, %c1408] : memref<16x3456xf32, #tpu.memory_space<vmem>>, vector<8x128xf32>
    %c0_25 = arith.constant 0 : index
    %c2560 = arith.constant 2560 : index
    %38 = vector.load %arg5[%c0_25, %c2560] : memref<16x3456xf32, #tpu.memory_space<vmem>>, vector<8x128xf32>
    "tpu.trace_start"() <{level = 10 : i32, message = "qe,ke->qk"}> : () -> ()
    %cst_26 = arith.constant dense<0.000000e+00> : vector<8x8xf32>
    %39 = tpu.matmul %36, %37, %cst_26 {dimension_numbers = #tpu.dot_dimension_numbers<[1], [1], [0], [0], [0, 0, 1, 0], [], []>} : vector<8x128xf32>, vector<8x128xf32>, vector<8x8xf32> -> vector<8x8xf32>
    "tpu.trace_stop"() : () -> ()
    %cst_27 = arith.constant dense<0xFF800000> : vector<8xf32>
    %40 = vector.multi_reduction <maximumf>, %39, %cst_27 [1] : vector<8x8xf32> to vector<8xf32>
    %41 = vector.shape_cast %40 : vector<8xf32> to vector<8x1xf32>
    %42 = vector.broadcast %41 : vector<8x1xf32> to vector<8x8xf32>
    %43 = arith.subf %39, %42 : vector<8x8xf32>
    %44 = math.exp %43 : vector<8x8xf32>
    %cst_28 = arith.constant dense<0.000000e+00> : vector<8xf32>
    %45 = vector.multi_reduction <add>, %44, %cst_28 [1] : vector<8x8xf32> to vector<8xf32>
    %46 = vector.shape_cast %45 : vector<8xf32> to vector<8x1xf32>
    %47 = vector.broadcast %46 : vector<8x1xf32> to vector<8x8xf32>
    %48 = arith.divf %44, %47 : vector<8x8xf32>
    %cst_29 = arith.constant dense<0.000000e+00> : vector<8x128xf32>
    %49 = tpu.matmul %48, %38, %cst_29 {dimension_numbers = #tpu.dot_dimension_numbers<[1], [0], [0], [1], [0, 0, 1, 1], [], []>} : vector<8x8xf32>, vector<8x128xf32>, vector<8x128xf32> -> vector<8x128xf32>
    %50 = arith.addf %35, %49 : vector<8x128xf32>
    %c0_30 = arith.constant 0 : index
    %c384 = arith.constant 384 : index
    %51 = vector.load %arg5[%c0_30, %c384] : memref<16x3456xf32, #tpu.memory_space<vmem>>, vector<8x128xf32>
    %c0_31 = arith.constant 0 : index
    %c1536 = arith.constant 1536 : index
    %52 = vector.load %arg5[%c0_31, %c1536] : memref<16x3456xf32, #tpu.memory_space<vmem>>, vector<8x128xf32>
    %c0_32 = arith.constant 0 : index
    %c2688 = arith.constant 2688 : index
    %53 = vector.load %arg5[%c0_32, %c2688] : memref<16x3456xf32, #tpu.memory_space<vmem>>, vector<8x128xf32>
    "tpu.trace_start"() <{level = 10 : i32, message = "qe,ke->qk"}> : () -> ()
    %cst_33 = arith.constant dense<0.000000e+00> : vector<8x8xf32>
    %54 = tpu.matmul %51, %52, %cst_33 {dimension_numbers = #tpu.dot_dimension_numbers<[1], [1], [0], [0], [0, 0, 1, 0], [], []>} : vector<8x128xf32>, vector<8x128xf32>, vector<8x8xf32> -> vector<8x8xf32>
    "tpu.trace_stop"() : () -> ()
    %cst_34 = arith.constant dense<0xFF800000> : vector<8xf32>
    %55 = vector.multi_reduction <maximumf>, %54, %cst_34 [1] : vector<8x8xf32> to vector<8xf32>
    %56 = vector.shape_cast %55 : vector<8xf32> to vector<8x1xf32>
    %57 = vector.broadcast %56 : vector<8x1xf32> to vector<8x8xf32>
    %58 = arith.subf %54, %57 : vector<8x8xf32>
    %59 = math.exp %58 : vector<8x8xf32>
    %cst_35 = arith.constant dense<0.000000e+00> : vector<8xf32>
    %60 = vector.multi_reduction <add>, %59, %cst_35 [1] : vector<8x8xf32> to vector<8xf32>
    %61 = vector.shape_cast %60 : vector<8xf32> to vector<8x1xf32>
    %62 = vector.broadcast %61 : vector<8x1xf32> to vector<8x8xf32>
    %63 = arith.divf %59, %62 : vector<8x8xf32>
    %cst_36 = arith.constant dense<0.000000e+00> : vector<8x128xf32>
    %64 = tpu.matmul %63, %53, %cst_36 {dimension_numbers = #tpu.dot_dimension_numbers<[1], [0], [0], [1], [0, 0, 1, 1], [], []>} : vector<8x8xf32>, vector<8x128xf32>, vector<8x128xf32> -> vector<8x128xf32>
    %65 = arith.addf %50, %64 : vector<8x128xf32>
    %c0_37 = arith.constant 0 : index
    %c512 = arith.constant 512 : index
    %66 = vector.load %arg5[%c0_37, %c512] : memref<16x3456xf32, #tpu.memory_space<vmem>>, vector<8x128xf32>
    %c0_38 = arith.constant 0 : index
    %c1664 = arith.constant 1664 : index
    %67 = vector.load %arg5[%c0_38, %c1664] : memref<16x3456xf32, #tpu.memory_space<vmem>>, vector<8x128xf32>
    %c0_39 = arith.constant 0 : index
    %c2816 = arith.constant 2816 : index
    %68 = vector.load %arg5[%c0_39, %c2816] : memref<16x3456xf32, #tpu.memory_space<vmem>>, vector<8x128xf32>
    "tpu.trace_start"() <{level = 10 : i32, message = "qe,ke->qk"}> : () -> ()
    %cst_40 = arith.constant dense<0.000000e+00> : vector<8x8xf32>
    %69 = tpu.matmul %66, %67, %cst_40 {dimension_numbers = #tpu.dot_dimension_numbers<[1], [1], [0], [0], [0, 0, 1, 0], [], []>} : vector<8x128xf32>, vector<8x128xf32>, vector<8x8xf32> -> vector<8x8xf32>
    "tpu.trace_stop"() : () -> ()
    %cst_41 = arith.constant dense<0xFF800000> : vector<8xf32>
    %70 = vector.multi_reduction <maximumf>, %69, %cst_41 [1] : vector<8x8xf32> to vector<8xf32>
    %71 = vector.shape_cast %70 : vector<8xf32> to vector<8x1xf32>
    %72 = vector.broadcast %71 : vector<8x1xf32> to vector<8x8xf32>
    %73 = arith.subf %69, %72 : vector<8x8xf32>
    %74 = math.exp %73 : vector<8x8xf32>
    %cst_42 = arith.constant dense<0.000000e+00> : vector<8xf32>
    %75 = vector.multi_reduction <add>, %74, %cst_42 [1] : vector<8x8xf32> to vector<8xf32>
    %76 = vector.shape_cast %75 : vector<8xf32> to vector<8x1xf32>
    %77 = vector.broadcast %76 : vector<8x1xf32> to vector<8x8xf32>
    %78 = arith.divf %74, %77 : vector<8x8xf32>
    %cst_43 = arith.constant dense<0.000000e+00> : vector<8x128xf32>
    %79 = tpu.matmul %78, %68, %cst_43 {dimension_numbers = #tpu.dot_dimension_numbers<[1], [0], [0], [1], [0, 0, 1, 1], [], []>} : vector<8x8xf32>, vector<8x128xf32>, vector<8x128xf32> -> vector<8x128xf32>
    %80 = arith.addf %65, %79 : vector<8x128xf32>
    %c0_44 = arith.constant 0 : index
    %c640 = arith.constant 640 : index
    %81 = vector.load %arg5[%c0_44, %c640] : memref<16x3456xf32, #tpu.memory_space<vmem>>, vector<8x128xf32>
    %c0_45 = arith.constant 0 : index
    %c1792 = arith.constant 1792 : index
    %82 = vector.load %arg5[%c0_45, %c1792] : memref<16x3456xf32, #tpu.memory_space<vmem>>, vector<8x128xf32>
    %c0_46 = arith.constant 0 : index
    %c2944 = arith.constant 2944 : index
    %83 = vector.load %arg5[%c0_46, %c2944] : memref<16x3456xf32, #tpu.memory_space<vmem>>, vector<8x128xf32>
    "tpu.trace_start"() <{level = 10 : i32, message = "qe,ke->qk"}> : () -> ()
    %cst_47 = arith.constant dense<0.000000e+00> : vector<8x8xf32>
    %84 = tpu.matmul %81, %82, %cst_47 {dimension_numbers = #tpu.dot_dimension_numbers<[1], [1], [0], [0], [0, 0, 1, 0], [], []>} : vector<8x128xf32>, vector<8x128xf32>, vector<8x8xf32> -> vector<8x8xf32>
    "tpu.trace_stop"() : () -> ()
    %cst_48 = arith.constant dense<0xFF800000> : vector<8xf32>
    %85 = vector.multi_reduction <maximumf>, %84, %cst_48 [1] : vector<8x8xf32> to vector<8xf32>
    %86 = vector.shape_cast %85 : vector<8xf32> to vector<8x1xf32>
    %87 = vector.broadcast %86 : vector<8x1xf32> to vector<8x8xf32>
    %88 = arith.subf %84, %87 : vector<8x8xf32>
    %89 = math.exp %88 : vector<8x8xf32>
    %cst_49 = arith.constant dense<0.000000e+00> : vector<8xf32>
    %90 = vector.multi_reduction <add>, %89, %cst_49 [1] : vector<8x8xf32> to vector<8xf32>
    %91 = vector.shape_cast %90 : vector<8xf32> to vector<8x1xf32>
    %92 = vector.broadcast %91 : vector<8x1xf32> to vector<8x8xf32>
    %93 = arith.divf %89, %92 : vector<8x8xf32>
    %cst_50 = arith.constant dense<0.000000e+00> : vector<8x128xf32>
    %94 = tpu.matmul %93, %83, %cst_50 {dimension_numbers = #tpu.dot_dimension_numbers<[1], [0], [0], [1], [0, 0, 1, 1], [], []>} : vector<8x8xf32>, vector<8x128xf32>, vector<8x128xf32> -> vector<8x128xf32>
    %95 = arith.addf %80, %94 : vector<8x128xf32>
    %c0_51 = arith.constant 0 : index
    %c768 = arith.constant 768 : index
    %96 = vector.load %arg5[%c0_51, %c768] : memref<16x3456xf32, #tpu.memory_space<vmem>>, vector<8x128xf32>
    %c0_52 = arith.constant 0 : index
    %c1920 = arith.constant 1920 : index
    %97 = vector.load %arg5[%c0_52, %c1920] : memref<16x3456xf32, #tpu.memory_space<vmem>>, vector<8x128xf32>
    %c0_53 = arith.constant 0 : index
    %c3072 = arith.constant 3072 : index
    %98 = vector.load %arg5[%c0_53, %c3072] : memref<16x3456xf32, #tpu.memory_space<vmem>>, vector<8x128xf32>
    "tpu.trace_start"() <{level = 10 : i32, message = "qe,ke->qk"}> : () -> ()
    %cst_54 = arith.constant dense<0.000000e+00> : vector<8x8xf32>
    %99 = tpu.matmul %96, %97, %cst_54 {dimension_numbers = #tpu.dot_dimension_numbers<[1], [1], [0], [0], [0, 0, 1, 0], [], []>} : vector<8x128xf32>, vector<8x128xf32>, vector<8x8xf32> -> vector<8x8xf32>
    "tpu.trace_stop"() : () -> ()
    %cst_55 = arith.constant dense<0xFF800000> : vector<8xf32>
    %100 = vector.multi_reduction <maximumf>, %99, %cst_55 [1] : vector<8x8xf32> to vector<8xf32>
    %101 = vector.shape_cast %100 : vector<8xf32> to vector<8x1xf32>
    %102 = vector.broadcast %101 : vector<8x1xf32> to vector<8x8xf32>
    %103 = arith.subf %99, %102 : vector<8x8xf32>
    %104 = math.exp %103 : vector<8x8xf32>
    %cst_56 = arith.constant dense<0.000000e+00> : vector<8xf32>
    %105 = vector.multi_reduction <add>, %104, %cst_56 [1] : vector<8x8xf32> to vector<8xf32>
    %106 = vector.shape_cast %105 : vector<8xf32> to vector<8x1xf32>
    %107 = vector.broadcast %106 : vector<8x1xf32> to vector<8x8xf32>
    %108 = arith.divf %104, %107 : vector<8x8xf32>
    %cst_57 = arith.constant dense<0.000000e+00> : vector<8x128xf32>
    %109 = tpu.matmul %108, %98, %cst_57 {dimension_numbers = #tpu.dot_dimension_numbers<[1], [0], [0], [1], [0, 0, 1, 1], [], []>} : vector<8x8xf32>, vector<8x128xf32>, vector<8x128xf32> -> vector<8x128xf32>
    %110 = arith.addf %95, %109 : vector<8x128xf32>
    %c0_58 = arith.constant 0 : index
    %c896 = arith.constant 896 : index
    %111 = vector.load %arg5[%c0_58, %c896] : memref<16x3456xf32, #tpu.memory_space<vmem>>, vector<8x128xf32>
    %c0_59 = arith.constant 0 : index
    %c2048 = arith.constant 2048 : index
    %112 = vector.load %arg5[%c0_59, %c2048] : memref<16x3456xf32, #tpu.memory_space<vmem>>, vector<8x128xf32>
    %c0_60 = arith.constant 0 : index
    %c3200 = arith.constant 3200 : index
    %113 = vector.load %arg5[%c0_60, %c3200] : memref<16x3456xf32, #tpu.memory_space<vmem>>, vector<8x128xf32>
    "tpu.trace_start"() <{level = 10 : i32, message = "qe,ke->qk"}> : () -> ()
    %cst_61 = arith.constant dense<0.000000e+00> : vector<8x8xf32>
    %114 = tpu.matmul %111, %112, %cst_61 {dimension_numbers = #tpu.dot_dimension_numbers<[1], [1], [0], [0], [0, 0, 1, 0], [], []>} : vector<8x128xf32>, vector<8x128xf32>, vector<8x8xf32> -> vector<8x8xf32>
    "tpu.trace_stop"() : () -> ()
    %cst_62 = arith.constant dense<0xFF800000> : vector<8xf32>
    %115 = vector.multi_reduction <maximumf>, %114, %cst_62 [1] : vector<8x8xf32> to vector<8xf32>
    %116 = vector.shape_cast %115 : vector<8xf32> to vector<8x1xf32>
    %117 = vector.broadcast %116 : vector<8x1xf32> to vector<8x8xf32>
    %118 = arith.subf %114, %117 : vector<8x8xf32>
    %119 = math.exp %118 : vector<8x8xf32>
    %cst_63 = arith.constant dense<0.000000e+00> : vector<8xf32>
    %120 = vector.multi_reduction <add>, %119, %cst_63 [1] : vector<8x8xf32> to vector<8xf32>
    %121 = vector.shape_cast %120 : vector<8xf32> to vector<8x1xf32>
    %122 = vector.broadcast %121 : vector<8x1xf32> to vector<8x8xf32>
    %123 = arith.divf %119, %122 : vector<8x8xf32>
    %cst_64 = arith.constant dense<0.000000e+00> : vector<8x128xf32>
    %124 = tpu.matmul %123, %113, %cst_64 {dimension_numbers = #tpu.dot_dimension_numbers<[1], [0], [0], [1], [0, 0, 1, 1], [], []>} : vector<8x8xf32>, vector<8x128xf32>, vector<8x128xf32> -> vector<8x128xf32>
    %125 = arith.addf %110, %124 : vector<8x128xf32>
    %c0_65 = arith.constant 0 : index
    %c1024 = arith.constant 1024 : index
    %126 = vector.load %arg5[%c0_65, %c1024] : memref<16x3456xf32, #tpu.memory_space<vmem>>, vector<8x128xf32>
    %c0_66 = arith.constant 0 : index
    %c2176 = arith.constant 2176 : index
    %127 = vector.load %arg5[%c0_66, %c2176] : memref<16x3456xf32, #tpu.memory_space<vmem>>, vector<8x128xf32>
    %c0_67 = arith.constant 0 : index
    %c3328 = arith.constant 3328 : index
    %128 = vector.load %arg5[%c0_67, %c3328] : memref<16x3456xf32, #tpu.memory_space<vmem>>, vector<8x128xf32>
    "tpu.trace_start"() <{level = 10 : i32, message = "qe,ke->qk"}> : () -> ()
    %cst_68 = arith.constant dense<0.000000e+00> : vector<8x8xf32>
    %129 = tpu.matmul %126, %127, %cst_68 {dimension_numbers = #tpu.dot_dimension_numbers<[1], [1], [0], [0], [0, 0, 1, 0], [], []>} : vector<8x128xf32>, vector<8x128xf32>, vector<8x8xf32> -> vector<8x8xf32>
    "tpu.trace_stop"() : () -> ()
    %cst_69 = arith.constant dense<0xFF800000> : vector<8xf32>
    %130 = vector.multi_reduction <maximumf>, %129, %cst_69 [1] : vector<8x8xf32> to vector<8xf32>
    %131 = vector.shape_cast %130 : vector<8xf32> to vector<8x1xf32>
    %132 = vector.broadcast %131 : vector<8x1xf32> to vector<8x8xf32>
    %133 = arith.subf %129, %132 : vector<8x8xf32>
    %134 = math.exp %133 : vector<8x8xf32>
    %cst_70 = arith.constant dense<0.000000e+00> : vector<8xf32>
    %135 = vector.multi_reduction <add>, %134, %cst_70 [1] : vector<8x8xf32> to vector<8xf32>
    %136 = vector.shape_cast %135 : vector<8xf32> to vector<8x1xf32>
    %137 = vector.broadcast %136 : vector<8x1xf32> to vector<8x8xf32>
    %138 = arith.divf %134, %137 : vector<8x8xf32>
    %cst_71 = arith.constant dense<0.000000e+00> : vector<8x128xf32>
    %139 = tpu.matmul %138, %128, %cst_71 {dimension_numbers = #tpu.dot_dimension_numbers<[1], [0], [0], [1], [0, 0, 1, 1], [], []>} : vector<8x8xf32>, vector<8x128xf32>, vector<8x128xf32> -> vector<8x128xf32>
    %140 = arith.addf %125, %139 : vector<8x128xf32>
    %141 = vector.broadcast %4 : vector<1x128xf32> to vector<8x128xf32>
    %142 = arith.addf %140, %141 : vector<8x128xf32>
    %c0_72 = arith.constant 0 : index
    %c0_73 = arith.constant 0 : index
    %143 = vector.load %arg4[%c0_72, %c0_73] : memref<16x128xf32, #tpu.memory_space<vmem>>, vector<8x128xf32>
    tpu.vector_store %arg4[%c0_72, %c0_73], %142 {strides = array<i32>} : memref<16x128xf32, #tpu.memory_space<vmem>>, vector<8x128xf32>,
    %cst_74 = arith.constant 0.000000e+00 : f32
    %144 = vector.broadcast %cst_74 : f32 to vector<8x128xf32>
    %c8 = arith.constant 8 : index
    %c0_75 = arith.constant 0 : index
    %145 = vector.load %arg5[%c8, %c0_75] : memref<16x3456xf32, #tpu.memory_space<vmem>>, vector<8x128xf32>
    %c8_76 = arith.constant 8 : index
    %c1152_77 = arith.constant 1152 : index
    %146 = vector.load %arg5[%c8_76, %c1152_77] : memref<16x3456xf32, #tpu.memory_space<vmem>>, vector<8x128xf32>
    %c8_78 = arith.constant 8 : index
    %c2304_79 = arith.constant 2304 : index
    %147 = vector.load %arg5[%c8_78, %c2304_79] : memref<16x3456xf32, #tpu.memory_space<vmem>>, vector<8x128xf32>
    "tpu.trace_start"() <{level = 10 : i32, message = "qe,ke->qk"}> : () -> ()
    %cst_80 = arith.constant dense<0.000000e+00> : vector<8x8xf32>
    %148 = tpu.matmul %145, %146, %cst_80 {dimension_numbers = #tpu.dot_dimension_numbers<[1], [1], [0], [0], [0, 0, 1, 0], [], []>} : vector<8x128xf32>, vector<8x128xf32>, vector<8x8xf32> -> vector<8x8xf32>
    "tpu.trace_stop"() : () -> ()
    %cst_81 = arith.constant dense<0xFF800000> : vector<8xf32>
    %149 = vector.multi_reduction <maximumf>, %148, %cst_81 [1] : vector<8x8xf32> to vector<8xf32>
    %150 = vector.shape_cast %149 : vector<8xf32> to vector<8x1xf32>
    %151 = vector.broadcast %150 : vector<8x1xf32> to vector<8x8xf32>
    %152 = arith.subf %148, %151 : vector<8x8xf32>
    %153 = math.exp %152 : vector<8x8xf32>
    %cst_82 = arith.constant dense<0.000000e+00> : vector<8xf32>
    %154 = vector.multi_reduction <add>, %153, %cst_82 [1] : vector<8x8xf32> to vector<8xf32>
    %155 = vector.shape_cast %154 : vector<8xf32> to vector<8x1xf32>
    %156 = vector.broadcast %155 : vector<8x1xf32> to vector<8x8xf32>
    %157 = arith.divf %153, %156 : vector<8x8xf32>
    %cst_83 = arith.constant dense<0.000000e+00> : vector<8x128xf32>
    %158 = tpu.matmul %157, %147, %cst_83 {dimension_numbers = #tpu.dot_dimension_numbers<[1], [0], [0], [1], [0, 0, 1, 1], [], []>} : vector<8x8xf32>, vector<8x128xf32>, vector<8x128xf32> -> vector<8x128xf32>
    %159 = arith.addf %144, %158 : vector<8x128xf32>
    %c8_84 = arith.constant 8 : index
    %c128_85 = arith.constant 128 : index
    %160 = vector.load %arg5[%c8_84, %c128_85] : memref<16x3456xf32, #tpu.memory_space<vmem>>, vector<8x128xf32>
    %c8_86 = arith.constant 8 : index
    %c1280_87 = arith.constant 1280 : index
    %161 = vector.load %arg5[%c8_86, %c1280_87] : memref<16x3456xf32, #tpu.memory_space<vmem>>, vector<8x128xf32>
    %c8_88 = arith.constant 8 : index
    %c2432_89 = arith.constant 2432 : index
    %162 = vector.load %arg5[%c8_88, %c2432_89] : memref<16x3456xf32, #tpu.memory_space<vmem>>, vector<8x128xf32>
    "tpu.trace_start"() <{level = 10 : i32, message = "qe,ke->qk"}> : () -> ()
    %cst_90 = arith.constant dense<0.000000e+00> : vector<8x8xf32>
    %163 = tpu.matmul %160, %161, %cst_90 {dimension_numbers = #tpu.dot_dimension_numbers<[1], [1], [0], [0], [0, 0, 1, 0], [], []>} : vector<8x128xf32>, vector<8x128xf32>, vector<8x8xf32> -> vector<8x8xf32>
    "tpu.trace_stop"() : () -> ()
    %cst_91 = arith.constant dense<0xFF800000> : vector<8xf32>
    %164 = vector.multi_reduction <maximumf>, %163, %cst_91 [1] : vector<8x8xf32> to vector<8xf32>
    %165 = vector.shape_cast %164 : vector<8xf32> to vector<8x1xf32>
    %166 = vector.broadcast %165 : vector<8x1xf32> to vector<8x8xf32>
    %167 = arith.subf %163, %166 : vector<8x8xf32>
    %168 = math.exp %167 : vector<8x8xf32>
    %cst_92 = arith.constant dense<0.000000e+00> : vector<8xf32>
    %169 = vector.multi_reduction <add>, %168, %cst_92 [1] : vector<8x8xf32> to vector<8xf32>
    %170 = vector.shape_cast %169 : vector<8xf32> to vector<8x1xf32>
    %171 = vector.broadcast %170 : vector<8x1xf32> to vector<8x8xf32>
    %172 = arith.divf %168, %171 : vector<8x8xf32>
    %cst_93 = arith.constant dense<0.000000e+00> : vector<8x128xf32>
    %173 = tpu.matmul %172, %162, %cst_93 {dimension_numbers = #tpu.dot_dimension_numbers<[1], [0], [0], [1], [0, 0, 1, 1], [], []>} : vector<8x8xf32>, vector<8x128xf32>, vector<8x128xf32> -> vector<8x128xf32>
    %174 = arith.addf %159, %173 : vector<8x128xf32>
    %c8_94 = arith.constant 8 : index
    %c256_95 = arith.constant 256 : index
    %175 = vector.load %arg5[%c8_94, %c256_95] : memref<16x3456xf32, #tpu.memory_space<vmem>>, vector<8x128xf32>
    %c8_96 = arith.constant 8 : index
    %c1408_97 = arith.constant 1408 : index
    %176 = vector.load %arg5[%c8_96, %c1408_97] : memref<16x3456xf32, #tpu.memory_space<vmem>>, vector<8x128xf32>
    %c8_98 = arith.constant 8 : index
    %c2560_99 = arith.constant 2560 : index
    %177 = vector.load %arg5[%c8_98, %c2560_99] : memref<16x3456xf32, #tpu.memory_space<vmem>>, vector<8x128xf32>
    "tpu.trace_start"() <{level = 10 : i32, message = "qe,ke->qk"}> : () -> ()
    %cst_100 = arith.constant dense<0.000000e+00> : vector<8x8xf32>
    %178 = tpu.matmul %175, %176, %cst_100 {dimension_numbers = #tpu.dot_dimension_numbers<[1], [1], [0], [0], [0, 0, 1, 0], [], []>} : vector<8x128xf32>, vector<8x128xf32>, vector<8x8xf32> -> vector<8x8xf32>
    "tpu.trace_stop"() : () -> ()
    %cst_101 = arith.constant dense<0xFF800000> : vector<8xf32>
    %179 = vector.multi_reduction <maximumf>, %178, %cst_101 [1] : vector<8x8xf32> to vector<8xf32>
    %180 = vector.shape_cast %179 : vector<8xf32> to vector<8x1xf32>
    %181 = vector.broadcast %180 : vector<8x1xf32> to vector<8x8xf32>
    %182 = arith.subf %178, %181 : vector<8x8xf32>
    %183 = math.exp %182 : vector<8x8xf32>
    %cst_102 = arith.constant dense<0.000000e+00> : vector<8xf32>
    %184 = vector.multi_reduction <add>, %183, %cst_102 [1] : vector<8x8xf32> to vector<8xf32>
    %185 = vector.shape_cast %184 : vector<8xf32> to vector<8x1xf32>
    %186 = vector.broadcast %185 : vector<8x1xf32> to vector<8x8xf32>
    %187 = arith.divf %183, %186 : vector<8x8xf32>
    %cst_103 = arith.constant dense<0.000000e+00> : vector<8x128xf32>
    %188 = tpu.matmul %187, %177, %cst_103 {dimension_numbers = #tpu.dot_dimension_numbers<[1], [0], [0], [1], [0, 0, 1, 1], [], []>} : vector<8x8xf32>, vector<8x128xf32>, vector<8x128xf32> -> vector<8x128xf32>
    %189 = arith.addf %174, %188 : vector<8x128xf32>
    %c8_104 = arith.constant 8 : index
    %c384_105 = arith.constant 384 : index
    %190 = vector.load %arg5[%c8_104, %c384_105] : memref<16x3456xf32, #tpu.memory_space<vmem>>, vector<8x128xf32>
    %c8_106 = arith.constant 8 : index
    %c1536_107 = arith.constant 1536 : index
    %191 = vector.load %arg5[%c8_106, %c1536_107] : memref<16x3456xf32, #tpu.memory_space<vmem>>, vector<8x128xf32>
    %c8_108 = arith.constant 8 : index
    %c2688_109 = arith.constant 2688 : index
    %192 = vector.load %arg5[%c8_108, %c2688_109] : memref<16x3456xf32, #tpu.memory_space<vmem>>, vector<8x128xf32>
    "tpu.trace_start"() <{level = 10 : i32, message = "qe,ke->qk"}> : () -> ()
    %cst_110 = arith.constant dense<0.000000e+00> : vector<8x8xf32>
    %193 = tpu.matmul %190, %191, %cst_110 {dimension_numbers = #tpu.dot_dimension_numbers<[1], [1], [0], [0], [0, 0, 1, 0], [], []>} : vector<8x128xf32>, vector<8x128xf32>, vector<8x8xf32> -> vector<8x8xf32>
    "tpu.trace_stop"() : () -> ()
    %cst_111 = arith.constant dense<0xFF800000> : vector<8xf32>
    %194 = vector.multi_reduction <maximumf>, %193, %cst_111 [1] : vector<8x8xf32> to vector<8xf32>
    %195 = vector.shape_cast %194 : vector<8xf32> to vector<8x1xf32>
    %196 = vector.broadcast %195 : vector<8x1xf32> to vector<8x8xf32>
    %197 = arith.subf %193, %196 : vector<8x8xf32>
    %198 = math.exp %197 : vector<8x8xf32>
    %cst_112 = arith.constant dense<0.000000e+00> : vector<8xf32>
    %199 = vector.multi_reduction <add>, %198, %cst_112 [1] : vector<8x8xf32> to vector<8xf32>
    %200 = vector.shape_cast %199 : vector<8xf32> to vector<8x1xf32>
    %201 = vector.broadcast %200 : vector<8x1xf32> to vector<8x8xf32>
    %202 = arith.divf %198, %201 : vector<8x8xf32>
    %cst_113 = arith.constant dense<0.000000e+00> : vector<8x128xf32>
    %203 = tpu.matmul %202, %192, %cst_113 {dimension_numbers = #tpu.dot_dimension_numbers<[1], [0], [0], [1], [0, 0, 1, 1], [], []>} : vector<8x8xf32>, vector<8x128xf32>, vector<8x128xf32> -> vector<8x128xf32>
    %204 = arith.addf %189, %203 : vector<8x128xf32>
    %c8_114 = arith.constant 8 : index
    %c512_115 = arith.constant 512 : index
    %205 = vector.load %arg5[%c8_114, %c512_115] : memref<16x3456xf32, #tpu.memory_space<vmem>>, vector<8x128xf32>
    %c8_116 = arith.constant 8 : index
    %c1664_117 = arith.constant 1664 : index
    %206 = vector.load %arg5[%c8_116, %c1664_117] : memref<16x3456xf32, #tpu.memory_space<vmem>>, vector<8x128xf32>
    %c8_118 = arith.constant 8 : index
    %c2816_119 = arith.constant 2816 : index
    %207 = vector.load %arg5[%c8_118, %c2816_119] : memref<16x3456xf32, #tpu.memory_space<vmem>>, vector<8x128xf32>
    "tpu.trace_start"() <{level = 10 : i32, message = "qe,ke->qk"}> : () -> ()
    %cst_120 = arith.constant dense<0.000000e+00> : vector<8x8xf32>
    %208 = tpu.matmul %205, %206, %cst_120 {dimension_numbers = #tpu.dot_dimension_numbers<[1], [1], [0], [0], [0, 0, 1, 0], [], []>} : vector<8x128xf32>, vector<8x128xf32>, vector<8x8xf32> -> vector<8x8xf32>
    "tpu.trace_stop"() : () -> ()
    %cst_121 = arith.constant dense<0xFF800000> : vector<8xf32>
    %209 = vector.multi_reduction <maximumf>, %208, %cst_121 [1] : vector<8x8xf32> to vector<8xf32>
    %210 = vector.shape_cast %209 : vector<8xf32> to vector<8x1xf32>
    %211 = vector.broadcast %210 : vector<8x1xf32> to vector<8x8xf32>
    %212 = arith.subf %208, %211 : vector<8x8xf32>
    %213 = math.exp %212 : vector<8x8xf32>
    %cst_122 = arith.constant dense<0.000000e+00> : vector<8xf32>
    %214 = vector.multi_reduction <add>, %213, %cst_122 [1] : vector<8x8xf32> to vector<8xf32>
    %215 = vector.shape_cast %214 : vector<8xf32> to vector<8x1xf32>
    %216 = vector.broadcast %215 : vector<8x1xf32> to vector<8x8xf32>
    %217 = arith.divf %213, %216 : vector<8x8xf32>
    %cst_123 = arith.constant dense<0.000000e+00> : vector<8x128xf32>
    %218 = tpu.matmul %217, %207, %cst_123 {dimension_numbers = #tpu.dot_dimension_numbers<[1], [0], [0], [1], [0, 0, 1, 1], [], []>} : vector<8x8xf32>, vector<8x128xf32>, vector<8x128xf32> -> vector<8x128xf32>
    %219 = arith.addf %204, %218 : vector<8x128xf32>
    %c8_124 = arith.constant 8 : index
    %c640_125 = arith.constant 640 : index
    %220 = vector.load %arg5[%c8_124, %c640_125] : memref<16x3456xf32, #tpu.memory_space<vmem>>, vector<8x128xf32>
    %c8_126 = arith.constant 8 : index
    %c1792_127 = arith.constant 1792 : index
    %221 = vector.load %arg5[%c8_126, %c1792_127] : memref<16x3456xf32, #tpu.memory_space<vmem>>, vector<8x128xf32>
    %c8_128 = arith.constant 8 : index
    %c2944_129 = arith.constant 2944 : index
    %222 = vector.load %arg5[%c8_128, %c2944_129] : memref<16x3456xf32, #tpu.memory_space<vmem>>, vector<8x128xf32>
    "tpu.trace_start"() <{level = 10 : i32, message = "qe,ke->qk"}> : () -> ()
    %cst_130 = arith.constant dense<0.000000e+00> : vector<8x8xf32>
    %223 = tpu.matmul %220, %221, %cst_130 {dimension_numbers = #tpu.dot_dimension_numbers<[1], [1], [0], [0], [0, 0, 1, 0], [], []>} : vector<8x128xf32>, vector<8x128xf32>, vector<8x8xf32> -> vector<8x8xf32>
    "tpu.trace_stop"() : () -> ()
    %cst_131 = arith.constant dense<0xFF800000> : vector<8xf32>
    %224 = vector.multi_reduction <maximumf>, %223, %cst_131 [1] : vector<8x8xf32> to vector<8xf32>
    %225 = vector.shape_cast %224 : vector<8xf32> to vector<8x1xf32>
    %226 = vector.broadcast %225 : vector<8x1xf32> to vector<8x8xf32>
    %227 = arith.subf %223, %226 : vector<8x8xf32>
    %228 = math.exp %227 : vector<8x8xf32>
    %cst_132 = arith.constant dense<0.000000e+00> : vector<8xf32>
    %229 = vector.multi_reduction <add>, %228, %cst_132 [1] : vector<8x8xf32> to vector<8xf32>
    %230 = vector.shape_cast %229 : vector<8xf32> to vector<8x1xf32>
    %231 = vector.broadcast %230 : vector<8x1xf32> to vector<8x8xf32>
    %232 = arith.divf %228, %231 : vector<8x8xf32>
    %cst_133 = arith.constant dense<0.000000e+00> : vector<8x128xf32>
    %233 = tpu.matmul %232, %222, %cst_133 {dimension_numbers = #tpu.dot_dimension_numbers<[1], [0], [0], [1], [0, 0, 1, 1], [], []>} : vector<8x8xf32>, vector<8x128xf32>, vector<8x128xf32> -> vector<8x128xf32>
    %234 = arith.addf %219, %233 : vector<8x128xf32>
    %c8_134 = arith.constant 8 : index
    %c768_135 = arith.constant 768 : index
    %235 = vector.load %arg5[%c8_134, %c768_135] : memref<16x3456xf32, #tpu.memory_space<vmem>>, vector<8x128xf32>
    %c8_136 = arith.constant 8 : index
    %c1920_137 = arith.constant 1920 : index
    %236 = vector.load %arg5[%c8_136, %c1920_137] : memref<16x3456xf32, #tpu.memory_space<vmem>>, vector<8x128xf32>
    %c8_138 = arith.constant 8 : index
    %c3072_139 = arith.constant 3072 : index
    %237 = vector.load %arg5[%c8_138, %c3072_139] : memref<16x3456xf32, #tpu.memory_space<vmem>>, vector<8x128xf32>
    "tpu.trace_start"() <{level = 10 : i32, message = "qe,ke->qk"}> : () -> ()
    %cst_140 = arith.constant dense<0.000000e+00> : vector<8x8xf32>
    %238 = tpu.matmul %235, %236, %cst_140 {dimension_numbers = #tpu.dot_dimension_numbers<[1], [1], [0], [0], [0, 0, 1, 0], [], []>} : vector<8x128xf32>, vector<8x128xf32>, vector<8x8xf32> -> vector<8x8xf32>
    "tpu.trace_stop"() : () -> ()
    %cst_141 = arith.constant dense<0xFF800000> : vector<8xf32>
    %239 = vector.multi_reduction <maximumf>, %238, %cst_141 [1] : vector<8x8xf32> to vector<8xf32>
    %240 = vector.shape_cast %239 : vector<8xf32> to vector<8x1xf32>
    %241 = vector.broadcast %240 : vector<8x1xf32> to vector<8x8xf32>
    %242 = arith.subf %238, %241 : vector<8x8xf32>
    %243 = math.exp %242 : vector<8x8xf32>
    %cst_142 = arith.constant dense<0.000000e+00> : vector<8xf32>
    %244 = vector.multi_reduction <add>, %243, %cst_142 [1] : vector<8x8xf32> to vector<8xf32>
    %245 = vector.shape_cast %244 : vector<8xf32> to vector<8x1xf32>
    %246 = vector.broadcast %245 : vector<8x1xf32> to vector<8x8xf32>
    %247 = arith.divf %243, %246 : vector<8x8xf32>
    %cst_143 = arith.constant dense<0.000000e+00> : vector<8x128xf32>
    %248 = tpu.matmul %247, %237, %cst_143 {dimension_numbers = #tpu.dot_dimension_numbers<[1], [0], [0], [1], [0, 0, 1, 1], [], []>} : vector<8x8xf32>, vector<8x128xf32>, vector<8x128xf32> -> vector<8x128xf32>
    %249 = arith.addf %234, %248 : vector<8x128xf32>
    %c8_144 = arith.constant 8 : index
    %c896_145 = arith.constant 896 : index
    %250 = vector.load %arg5[%c8_144, %c896_145] : memref<16x3456xf32, #tpu.memory_space<vmem>>, vector<8x128xf32>
    %c8_146 = arith.constant 8 : index
    %c2048_147 = arith.constant 2048 : index
    %251 = vector.load %arg5[%c8_146, %c2048_147] : memref<16x3456xf32, #tpu.memory_space<vmem>>, vector<8x128xf32>
    %c8_148 = arith.constant 8 : index
    %c3200_149 = arith.constant 3200 : index
    %252 = vector.load %arg5[%c8_148, %c3200_149] : memref<16x3456xf32, #tpu.memory_space<vmem>>, vector<8x128xf32>
    "tpu.trace_start"() <{level = 10 : i32, message = "qe,ke->qk"}> : () -> ()
    %cst_150 = arith.constant dense<0.000000e+00> : vector<8x8xf32>
    %253 = tpu.matmul %250, %251, %cst_150 {dimension_numbers = #tpu.dot_dimension_numbers<[1], [1], [0], [0], [0, 0, 1, 0], [], []>} : vector<8x128xf32>, vector<8x128xf32>, vector<8x8xf32> -> vector<8x8xf32>
    "tpu.trace_stop"() : () -> ()
    %cst_151 = arith.constant dense<0xFF800000> : vector<8xf32>
    %254 = vector.multi_reduction <maximumf>, %253, %cst_151 [1] : vector<8x8xf32> to vector<8xf32>
    %255 = vector.shape_cast %254 : vector<8xf32> to vector<8x1xf32>
    %256 = vector.broadcast %255 : vector<8x1xf32> to vector<8x8xf32>
    %257 = arith.subf %253, %256 : vector<8x8xf32>
    %258 = math.exp %257 : vector<8x8xf32>
    %cst_152 = arith.constant dense<0.000000e+00> : vector<8xf32>
    %259 = vector.multi_reduction <add>, %258, %cst_152 [1] : vector<8x8xf32> to vector<8xf32>
    %260 = vector.shape_cast %259 : vector<8xf32> to vector<8x1xf32>
    %261 = vector.broadcast %260 : vector<8x1xf32> to vector<8x8xf32>
    %262 = arith.divf %258, %261 : vector<8x8xf32>
    %cst_153 = arith.constant dense<0.000000e+00> : vector<8x128xf32>
    %263 = tpu.matmul %262, %252, %cst_153 {dimension_numbers = #tpu.dot_dimension_numbers<[1], [0], [0], [1], [0, 0, 1, 1], [], []>} : vector<8x8xf32>, vector<8x128xf32>, vector<8x128xf32> -> vector<8x128xf32>
    %264 = arith.addf %249, %263 : vector<8x128xf32>
    %c8_154 = arith.constant 8 : index
    %c1024_155 = arith.constant 1024 : index
    %265 = vector.load %arg5[%c8_154, %c1024_155] : memref<16x3456xf32, #tpu.memory_space<vmem>>, vector<8x128xf32>
    %c8_156 = arith.constant 8 : index
    %c2176_157 = arith.constant 2176 : index
    %266 = vector.load %arg5[%c8_156, %c2176_157] : memref<16x3456xf32, #tpu.memory_space<vmem>>, vector<8x128xf32>
    %c8_158 = arith.constant 8 : index
    %c3328_159 = arith.constant 3328 : index
    %267 = vector.load %arg5[%c8_158, %c3328_159] : memref<16x3456xf32, #tpu.memory_space<vmem>>, vector<8x128xf32>
    "tpu.trace_start"() <{level = 10 : i32, message = "qe,ke->qk"}> : () -> ()
    %cst_160 = arith.constant dense<0.000000e+00> : vector<8x8xf32>
    %268 = tpu.matmul %265, %266, %cst_160 {dimension_numbers = #tpu.dot_dimension_numbers<[1], [1], [0], [0], [0, 0, 1, 0], [], []>} : vector<8x128xf32>, vector<8x128xf32>, vector<8x8xf32> -> vector<8x8xf32>
    "tpu.trace_stop"() : () -> ()
    %cst_161 = arith.constant dense<0xFF800000> : vector<8xf32>
    %269 = vector.multi_reduction <maximumf>, %268, %cst_161 [1] : vector<8x8xf32> to vector<8xf32>
    %270 = vector.shape_cast %269 : vector<8xf32> to vector<8x1xf32>
    %271 = vector.broadcast %270 : vector<8x1xf32> to vector<8x8xf32>
    %272 = arith.subf %268, %271 : vector<8x8xf32>
    %273 = math.exp %272 : vector<8x8xf32>
    %cst_162 = arith.constant dense<0.000000e+00> : vector<8xf32>
    %274 = vector.multi_reduction <add>, %273, %cst_162 [1] : vector<8x8xf32> to vector<8xf32>
    %275 = vector.shape_cast %274 : vector<8xf32> to vector<8x1xf32>
    %276 = vector.broadcast %275 : vector<8x1xf32> to vector<8x8xf32>
    %277 = arith.divf %273, %276 : vector<8x8xf32>
    %cst_163 = arith.constant dense<0.000000e+00> : vector<8x128xf32>
    %278 = tpu.matmul %277, %267, %cst_163 {dimension_numbers = #tpu.dot_dimension_numbers<[1], [0], [0], [1], [0, 0, 1, 1], [], []>} : vector<8x8xf32>, vector<8x128xf32>, vector<8x128xf32> -> vector<8x128xf32>
    %279 = arith.addf %264, %278 : vector<8x128xf32>
    %280 = vector.broadcast %4 : vector<1x128xf32> to vector<8x128xf32>
    %281 = arith.addf %279, %280 : vector<8x128xf32>
    %c8_164 = arith.constant 8 : index
    %c0_165 = arith.constant 0 : index
    %282 = vector.load %arg4[%c8_164, %c0_165] : memref<16x128xf32, #tpu.memory_space<vmem>>, vector<8x128xf32>
    tpu.vector_store %arg4[%c8_164, %c0_165], %281 {strides = array<i32>} : memref<16x128xf32, #tpu.memory_space<vmem>>, vector<8x128xf32>,
    return
  }
  func.func @transform_0(%arg0: i32) -> (i32, i32) {
    %c0_i32 = arith.constant 0 : i32
    %c0_i32_0 = arith.constant 0 : i32
    %c0_i32_1 = arith.constant 0 : i32
    return %c0_i32, %c0_i32_0 : i32, i32
  }
  func.func @transform_1(%arg0: i32) -> (i32, i32) {
    %c0_i32 = arith.constant 0 : i32
    %c0_i32_0 = arith.constant 0 : i32
    %c0_i32_1 = arith.constant 0 : i32
    return %c0_i32, %c0_i32_0 : i32, i32
  }
  func.func @transform_2(%arg0: i32) -> (i32, i32) {
    %c0_i32 = arith.constant 0 : i32
    %c0_i32_0 = arith.constant 0 : i32
    %c0_i32_1 = arith.constant 0 : i32
    return %c0_i32, %c0_i32_0 : i32, i32
  }
  func.func @transform_3(%arg0: i32) -> (i32, i32) {
    %c0_i32 = arith.constant 0 : i32
    %c0_i32_0 = arith.constant 0 : i32
    %c0_i32_1 = arith.constant 0 : i32
    return %c0_i32, %c0_i32_0 : i32, i32
  }
}

</mosaic_0001>

<llo_original>
// kernel: multi_head_attention.1
$region0: #{multi_head_attention.1}
  #allocation0 [shape = 'u32[]', space=smem, size = 0x4, offset = 0x4, fixed_abs, tag = 'smem constant byte address 0x4 - core index']
  #allocation1 [shape = 'u32[144,128]{1,0:T(1,128)}', space=vmem, size = 0x12000, scoped, tag = 'internal scratch']
  #allocation2 [shape = 'f32[16,3456]{1,0:T(8,128)}', space=vmem, size = 0x36000, scoped, tag = 'scratch operand']
  %s0 = inlined_call_operand.vmem [shape: f32[16,128], index: 0, kind: input, shape index: {}]
  %s1 = inlined_call_operand.hbm [shape: f32[128,3456], index: 1, kind: input, shape index: {}]
  %s2 = inlined_call_operand.hbm [shape: f32[1,128], index: 2, kind: input, shape index: {}]
  %s3 = inlined_call_operand.vmem [shape: f32[16,128], index: 3, kind: output, shape index: {}]
  %s4 = sld [smem:[#allocation0]]
  $region30: #{multi_head_attention.1} parent=0
    _
  %s6 = ssub.s32 1, %s4
  %s7 = scalar_select 0, %s6, %s4
  $region1: #{multi_head_attention.1} parent=0
    #allocation3 [shape = 'u8[1769472]{0}', space=vmem, size = 0x1b0000, scoped, tag = 'input window, operand 1, single buffered']
    #allocation4 [shape = 's32[1]{0}', space=sflag, size = 0x4, scoped, tag = 'scoped memory for multi_head_attention.1']
    #allocation5 [shape = 'u8[512]{0}', space=vmem, size = 0x400, scoped, tag = 'input window, operand 2, single buffered']
    #allocation6 [shape = 's32[1]{0}', space=sflag, size = 0x4, scoped, tag = 'scoped memory for multi_head_attention.1']
    %8 = vsyncpa [#allocation4], 0
    %9 = vsyncpa [#allocation6], 0
    // Predicated region
    $region2: #{multi_head_attention.1} parent=1 // pred_check
      _
    $region3: #{multi_head_attention.1} parent=1 // pred_check_branch
      %11 = sbr.rel (0) target = $region5
    $region4: #{multi_head_attention.1} parent=1 // pred_region
      _
    $region5: #{multi_head_attention.1} parent=1 // pred_fallthru
      _
    // Predicated region
    $region6: #{multi_head_attention.1} parent=1 // pred_check
      _
    $region7: #{multi_head_attention.1} parent=1 // pred_check_branch
      %13 = sbr.rel (0) target = $region9
    $region8: #{multi_head_attention.1} parent=1 // pred_region
      %s15 = ssub.s32 55296, 55296
      %16 = vsyncadd [#allocation4], %s15
      %s17 = sshll.u32 [#allocation3], 4
      %s18 = int_to_ptr.vmem [resolvable:$true] %s17
      %23 = dma.hbm_to_vmem [thread:$0]  %s1, 55296, %s18, [#allocation4], 3456, 3456, 216
    $region9: #{multi_head_attention.1} parent=1 // pred_fallthru
      _
    // Predicated region
    $region10: #{multi_head_attention.1} parent=1 // pred_check
      _
    $region11: #{multi_head_attention.1} parent=1 // pred_check_branch
      %25 = sbr.rel (0) target = $region13
    $region12: #{multi_head_attention.1} parent=1 // pred_region
      %s27 = ssub.s32 16, 16
      %28 = vsyncadd [#allocation6], %s27
      %s30 = sshll.u32 [#allocation5], 4
      %s31 = int_to_ptr.vmem [resolvable:$true] %s30
      %33 = dma.hbm_to_vmem [thread:$0]  %s2, 16, %s31, [#allocation6]
    $region13: #{multi_head_attention.1} parent=1 // pred_fallthru
      _
    // Predicated region
    $region14: #{multi_head_attention.1} parent=1 // pred_check
      _
    $region15: #{multi_head_attention.1} parent=1 // pred_check_branch
      %35 = sbr.rel (0) target = $region17
    $region16: #{multi_head_attention.1} parent=1 // pred_region
      %36 = dma.done [#allocation4], 55296
    $region17: #{multi_head_attention.1} parent=1 // pred_fallthru
      _
    // Predicated region
    $region18: #{multi_head_attention.1} parent=1 // pred_check
      _
    $region19: #{multi_head_attention.1} parent=1 // pred_check_branch
      %38 = sbr.rel (0) target = $region21
    $region20: #{multi_head_attention.1} parent=1 // pred_region
      %39 = dma.done [#allocation6], 16
    $region21: #{multi_head_attention.1} parent=1 // pred_fallthru
      _
    %v40 = vld [vmem:[%s0] sm:$0xff]
    %v41 = vld [vmem:[%s0 + $0x8] sm:$0xff]
    %v42 = vld [vmem:[#allocation3] sm:$0xff]
    %v43 = vld [vmem:[#allocation3 + $0x8] sm:$0xff]
    %v44 = vld [vmem:[#allocation3 + $0x10] sm:$0xff]
    %v45 = vld [vmem:[#allocation3 + $0x18] sm:$0xff]
    %v46 = vld [vmem:[#allocation3 + $0x20] sm:$0xff]
    %v47 = vld [vmem:[#allocation3 + $0x28] sm:$0xff]
    %v48 = vld [vmem:[#allocation3 + $0x30] sm:$0xff]
    %v49 = vld [vmem:[#allocation3 + $0x38] sm:$0xff]
    %v50 = vld [vmem:[#allocation3 + $0x40] sm:$0xff]
    %v51 = vld [vmem:[#allocation3 + $0x48] sm:$0xff]
    %v52 = vld [vmem:[#allocation3 + $0x50] sm:$0xff]
    %v53 = vld [vmem:[#allocation3 + $0x58] sm:$0xff]
    %v54 = vld [vmem:[#allocation3 + $0x60] sm:$0xff]
    %v55 = vld [vmem:[#allocation3 + $0x68] sm:$0xff]
    %v56 = vld [vmem:[#allocation3 + $0x70] sm:$0xff]
    %v57 = vld [vmem:[#allocation3 + $0x78] sm:$0xff]
    %v58 = vld [vmem:[#allocation3 + $0x80] sm:$0xff]
    %v59 = vld [vmem:[#allocation3 + $0x88] sm:$0xff]
    %v60 = vld [vmem:[#allocation3 + $0x90] sm:$0xff]
    %v61 = vld [vmem:[#allocation3 + $0x98] sm:$0xff]
    %v62 = vld [vmem:[#allocation3 + $0xa0] sm:$0xff]
    %v63 = vld [vmem:[#allocation3 + $0xa8] sm:$0xff]
    %v64 = vld [vmem:[#allocation3 + $0xb0] sm:$0xff]
    %v65 = vld [vmem:[#allocation3 + $0xb8] sm:$0xff]
    %v66 = vld [vmem:[#allocation3 + $0xc0] sm:$0xff]
    %v67 = vld [vmem:[#allocation3 + $0xc8] sm:$0xff]
    %v68 = vld [vmem:[#allocation3 + $0xd0] sm:$0xff]
    %v69 = vld [vmem:[#allocation3 + $0xd8] sm:$0xff]
    %v70 = vld [vmem:[#allocation3 + $0xe0] sm:$0xff]
    %v71 = vld [vmem:[#allocation3 + $0xe8] sm:$0xff]
    %v72 = vld [vmem:[#allocation3 + $0xf0] sm:$0xff]
    %v73 = vld [vmem:[#allocation3 + $0xf8] sm:$0xff]
    %v74 = vld [vmem:[#allocation3 + $0x100] sm:$0xff]
    %v75 = vld [vmem:[#allocation3 + $0x108] sm:$0xff]
    %v76 = vld [vmem:[#allocation3 + $0x110] sm:$0xff]
    %v77 = vld [vmem:[#allocation3 + $0x118] sm:$0xff]
    %v78 = vld [vmem:[#allocation3 + $0x120] sm:$0xff]
    %v79 = vld [vmem:[#allocation3 + $0x128] sm:$0xff]
    %v80 = vld [vmem:[#allocation3 + $0x130] sm:$0xff]
    %v81 = vld [vmem:[#allocation3 + $0x138] sm:$0xff]
    %v82 = vld [vmem:[#allocation3 + $0x140] sm:$0xff]
    %v83 = vld [vmem:[#allocation3 + $0x148] sm:$0xff]
    %v84 = vld [vmem:[#allocation3 + $0x150] sm:$0xff]
    %v85 = vld [vmem:[#allocation3 + $0x158] sm:$0xff]
    %v86 = vld [vmem:[#allocation3 + $0x160] sm:$0xff]
    %v87 = vld [vmem:[#allocation3 + $0x168] sm:$0xff]
    %v88 = vld [vmem:[#allocation3 + $0x170] sm:$0xff]
    %v89 = vld [vmem:[#allocation3 + $0x178] sm:$0xff]
    %v90 = vld [vmem:[#allocation3 + $0x180] sm:$0xff]
    %v91 = vld [vmem:[#allocation3 + $0x188] sm:$0xff]
    %v92 = vld [vmem:[#allocation3 + $0x190] sm:$0xff]
    %v93 = vld [vmem:[#allocation3 + $0x198] sm:$0xff]
    %v94 = vld [vmem:[#allocation3 + $0x1a0] sm:$0xff]
    %v95 = vld [vmem:[#allocation3 + $0x1a8] sm:$0xff]
    %v96 = vld [vmem:[#allocation3 + $0x1b0] sm:$0xff]
    %v97 = vld [vmem:[#allocation3 + $0x1b8] sm:$0xff]
    %v98 = vld [vmem:[#allocation3 + $0x1c0] sm:$0xff]
    %v99 = vld [vmem:[#allocation3 + $0x1c8] sm:$0xff]
    %v100 = vld [vmem:[#allocation3 + $0x1d0] sm:$0xff]
    %v101 = vld [vmem:[#allocation3 + $0x1d8] sm:$0xff]
    %v102 = vld [vmem:[#allocation3 + $0x1e0] sm:$0xff]
    %v103 = vld [vmem:[#allocation3 + $0x1e8] sm:$0xff]
    %v104 = vld [vmem:[#allocation3 + $0x1f0] sm:$0xff]
    %v105 = vld [vmem:[#allocation3 + $0x1f8] sm:$0xff]
    %v106 = vld [vmem:[#allocation3 + $0x200] sm:$0xff]
    %v107 = vld [vmem:[#allocation3 + $0x208] sm:$0xff]
    %v108 = vld [vmem:[#allocation3 + $0x210] sm:$0xff]
    %v109 = vld [vmem:[#allocation3 + $0x218] sm:$0xff]
    %v110 = vld [vmem:[#allocation3 + $0x220] sm:$0xff]
    %v111 = vld [vmem:[#allocation3 + $0x228] sm:$0xff]
    %v112 = vld [vmem:[#allocation3 + $0x230] sm:$0xff]
    %v113 = vld [vmem:[#allocation3 + $0x238] sm:$0xff]
    %v114 = vld [vmem:[#allocation3 + $0x240] sm:$0xff]
    %v115 = vld [vmem:[#allocation3 + $0x248] sm:$0xff]
    %v116 = vld [vmem:[#allocation3 + $0x250] sm:$0xff]
    %v117 = vld [vmem:[#allocation3 + $0x258] sm:$0xff]
    %v118 = vld [vmem:[#allocation3 + $0x260] sm:$0xff]
    %v119 = vld [vmem:[#allocation3 + $0x268] sm:$0xff]
    %v120 = vld [vmem:[#allocation3 + $0x270] sm:$0xff]
    %v121 = vld [vmem:[#allocation3 + $0x278] sm:$0xff]
    %v122 = vld [vmem:[#allocation3 + $0x280] sm:$0xff]
    %v123 = vld [vmem:[#allocation3 + $0x288] sm:$0xff]
    %v124 = vld [vmem:[#allocation3 + $0x290] sm:$0xff]
    %v125 = vld [vmem:[#allocation3 + $0x298] sm:$0xff]
    %v126 = vld [vmem:[#allocation3 + $0x2a0] sm:$0xff]
    %v127 = vld [vmem:[#allocation3 + $0x2a8] sm:$0xff]
    %v128 = vld [vmem:[#allocation3 + $0x2b0] sm:$0xff]
    %v129 = vld [vmem:[#allocation3 + $0x2b8] sm:$0xff]
    %v130 = vld [vmem:[#allocation3 + $0x2c0] sm:$0xff]
    %v131 = vld [vmem:[#allocation3 + $0x2c8] sm:$0xff]
    %v132 = vld [vmem:[#allocation3 + $0x2d0] sm:$0xff]
    %v133 = vld [vmem:[#allocation3 + $0x2d8] sm:$0xff]
    %v134 = vld [vmem:[#allocation3 + $0x2e0] sm:$0xff]
    %v135 = vld [vmem:[#allocation3 + $0x2e8] sm:$0xff]
    %v136 = vld [vmem:[#allocation3 + $0x2f0] sm:$0xff]
    %v137 = vld [vmem:[#allocation3 + $0x2f8] sm:$0xff]
    %v138 = vld [vmem:[#allocation3 + $0x300] sm:$0xff]
    %v139 = vld [vmem:[#allocation3 + $0x308] sm:$0xff]
    %v140 = vld [vmem:[#allocation3 + $0x310] sm:$0xff]
    %v141 = vld [vmem:[#allocation3 + $0x318] sm:$0xff]
    %v142 = vld [vmem:[#allocation3 + $0x320] sm:$0xff]
    %v143 = vld [vmem:[#allocation3 + $0x328] sm:$0xff]
    %v144 = vld [vmem:[#allocation3 + $0x330] sm:$0xff]
    %v145 = vld [vmem:[#allocation3 + $0x338] sm:$0xff]
    %v146 = vld [vmem:[#allocation3 + $0x340] sm:$0xff]
    %v147 = vld [vmem:[#allocation3 + $0x348] sm:$0xff]
    %v148 = vld [vmem:[#allocation3 + $0x350] sm:$0xff]
    %v149 = vld [vmem:[#allocation3 + $0x358] sm:$0xff]
    %v150 = vld [vmem:[#allocation3 + $0x360] sm:$0xff]
    %v151 = vld [vmem:[#allocation3 + $0x368] sm:$0xff]
    %v152 = vld [vmem:[#allocation3 + $0x370] sm:$0xff]
    %v153 = vld [vmem:[#allocation3 + $0x378] sm:$0xff]
    %v154 = vld [vmem:[#allocation3 + $0x380] sm:$0xff]
    %v155 = vld [vmem:[#allocation3 + $0x388] sm:$0xff]
    %v156 = vld [vmem:[#allocation3 + $0x390] sm:$0xff]
    %v157 = vld [vmem:[#allocation3 + $0x398] sm:$0xff]
    %v158 = vld [vmem:[#allocation3 + $0x3a0] sm:$0xff]
    %v159 = vld [vmem:[#allocation3 + $0x3a8] sm:$0xff]
    %v160 = vld [vmem:[#allocation3 + $0x3b0] sm:$0xff]
    %v161 = vld [vmem:[#allocation3 + $0x3b8] sm:$0xff]
    %v162 = vld [vmem:[#allocation3 + $0x3c0] sm:$0xff]
    %v163 = vld [vmem:[#allocation3 + $0x3c8] sm:$0xff]
    %v164 = vld [vmem:[#allocation3 + $0x3d0] sm:$0xff]
    %v165 = vld [vmem:[#allocation3 + $0x3d8] sm:$0xff]
    %v166 = vld [vmem:[#allocation3 + $0x3e0] sm:$0xff]
    %v167 = vld [vmem:[#allocation3 + $0x3e8] sm:$0xff]
    %v168 = vld [vmem:[#allocation3 + $0x3f0] sm:$0xff]
    %v169 = vld [vmem:[#allocation3 + $0x3f8] sm:$0xff]
    %v170 = vld [vmem:[#allocation3 + $0x400] sm:$0xff]
    %v171 = vld [vmem:[#allocation3 + $0x408] sm:$0xff]
    %v172 = vld [vmem:[#allocation3 + $0x410] sm:$0xff]
    %v173 = vld [vmem:[#allocation3 + $0x418] sm:$0xff]
    %v174 = vld [vmem:[#allocation3 + $0x420] sm:$0xff]
    %v175 = vld [vmem:[#allocation3 + $0x428] sm:$0xff]
    %v176 = vld [vmem:[#allocation3 + $0x430] sm:$0xff]
    %v177 = vld [vmem:[#allocation3 + $0x438] sm:$0xff]
    %v178 = vld [vmem:[#allocation3 + $0x440] sm:$0xff]
    %v179 = vld [vmem:[#allocation3 + $0x448] sm:$0xff]
    %v180 = vld [vmem:[#allocation3 + $0x450] sm:$0xff]
    %v181 = vld [vmem:[#allocation3 + $0x458] sm:$0xff]
    %v182 = vld [vmem:[#allocation3 + $0x460] sm:$0xff]
    %v183 = vld [vmem:[#allocation3 + $0x468] sm:$0xff]
    %v184 = vld [vmem:[#allocation3 + $0x470] sm:$0xff]
    %v185 = vld [vmem:[#allocation3 + $0x478] sm:$0xff]
    %v186 = vld [vmem:[#allocation3 + $0x480] sm:$0xff]
    %v187 = vld [vmem:[#allocation3 + $0x488] sm:$0xff]
    %v188 = vld [vmem:[#allocation3 + $0x490] sm:$0xff]
    %v189 = vld [vmem:[#allocation3 + $0x498] sm:$0xff]
    %v190 = vld [vmem:[#allocation3 + $0x4a0] sm:$0xff]
    %v191 = vld [vmem:[#allocation3 + $0x4a8] sm:$0xff]
    %v192 = vld [vmem:[#allocation3 + $0x4b0] sm:$0xff]
    %v193 = vld [vmem:[#allocation3 + $0x4b8] sm:$0xff]
    %v194 = vld [vmem:[#allocation3 + $0x4c0] sm:$0xff]
    %v195 = vld [vmem:[#allocation3 + $0x4c8] sm:$0xff]
    %v196 = vld [vmem:[#allocation3 + $0x4d0] sm:$0xff]
    %v197 = vld [vmem:[#allocation3 + $0x4d8] sm:$0xff]
    %v198 = vld [vmem:[#allocation3 + $0x4e0] sm:$0xff]
    %v199 = vld [vmem:[#allocation3 + $0x4e8] sm:$0xff]
    %v200 = vld [vmem:[#allocation3 + $0x4f0] sm:$0xff]
    %v201 = vld [vmem:[#allocation3 + $0x4f8] sm:$0xff]
    %v202 = vld [vmem:[#allocation3 + $0x500] sm:$0xff]
    %v203 = vld [vmem:[#allocation3 + $0x508] sm:$0xff]
    %v204 = vld [vmem:[#allocation3 + $0x510] sm:$0xff]
    %v205 = vld [vmem:[#allocation3 + $0x518] sm:$0xff]
    %v206 = vld [vmem:[#allocation3 + $0x520] sm:$0xff]
    %v207 = vld [vmem:[#allocation3 + $0x528] sm:$0xff]
    %v208 = vld [vmem:[#allocation3 + $0x530] sm:$0xff]
    %v209 = vld [vmem:[#allocation3 + $0x538] sm:$0xff]
    %v210 = vld [vmem:[#allocation3 + $0x540] sm:$0xff]
    %v211 = vld [vmem:[#allocation3 + $0x548] sm:$0xff]
    %v212 = vld [vmem:[#allocation3 + $0x550] sm:$0xff]
    %v213 = vld [vmem:[#allocation3 + $0x558] sm:$0xff]
    %v214 = vld [vmem:[#allocation3 + $0x560] sm:$0xff]
    %v215 = vld [vmem:[#allocation3 + $0x568] sm:$0xff]
    %v216 = vld [vmem:[#allocation3 + $0x570] sm:$0xff]
    %v217 = vld [vmem:[#allocation3 + $0x578] sm:$0xff]
    %v218 = vld [vmem:[#allocation3 + $0x580] sm:$0xff]
    %v219 = vld [vmem:[#allocation3 + $0x588] sm:$0xff]
    %v220 = vld [vmem:[#allocation3 + $0x590] sm:$0xff]
    %v221 = vld [vmem:[#allocation3 + $0x598] sm:$0xff]
    %v222 = vld [vmem:[#allocation3 + $0x5a0] sm:$0xff]
    %v223 = vld [vmem:[#allocation3 + $0x5a8] sm:$0xff]
    %v224 = vld [vmem:[#allocation3 + $0x5b0] sm:$0xff]
    %v225 = vld [vmem:[#allocation3 + $0x5b8] sm:$0xff]
    %v226 = vld [vmem:[#allocation3 + $0x5c0] sm:$0xff]
    %v227 = vld [vmem:[#allocation3 + $0x5c8] sm:$0xff]
    %v228 = vld [vmem:[#allocation3 + $0x5d0] sm:$0xff]
    %v229 = vld [vmem:[#allocation3 + $0x5d8] sm:$0xff]
    %v230 = vld [vmem:[#allocation3 + $0x5e0] sm:$0xff]
    %v231 = vld [vmem:[#allocation3 + $0x5e8] sm:$0xff]
    %v232 = vld [vmem:[#allocation3 + $0x5f0] sm:$0xff]
    %v233 = vld [vmem:[#allocation3 + $0x5f8] sm:$0xff]
    %v234 = vld [vmem:[#allocation3 + $0x600] sm:$0xff]
    %v235 = vld [vmem:[#allocation3 + $0x608] sm:$0xff]
    %v236 = vld [vmem:[#allocation3 + $0x610] sm:$0xff]
    %v237 = vld [vmem:[#allocation3 + $0x618] sm:$0xff]
    %v238 = vld [vmem:[#allocation3 + $0x620] sm:$0xff]
    %v239 = vld [vmem:[#allocation3 + $0x628] sm:$0xff]
    %v240 = vld [vmem:[#allocation3 + $0x630] sm:$0xff]
    %v241 = vld [vmem:[#allocation3 + $0x638] sm:$0xff]
    %v242 = vld [vmem:[#allocation3 + $0x640] sm:$0xff]
    %v243 = vld [vmem:[#allocation3 + $0x648] sm:$0xff]
    %v244 = vld [vmem:[#allocation3 + $0x650] sm:$0xff]
    %v245 = vld [vmem:[#allocation3 + $0x658] sm:$0xff]
    %v246 = vld [vmem:[#allocation3 + $0x660] sm:$0xff]
    %v247 = vld [vmem:[#allocation3 + $0x668] sm:$0xff]
    %v248 = vld [vmem:[#allocation3 + $0x670] sm:$0xff]
    %v249 = vld [vmem:[#allocation3 + $0x678] sm:$0xff]
    %v250 = vld [vmem:[#allocation3 + $0x680] sm:$0xff]
    %v251 = vld [vmem:[#allocation3 + $0x688] sm:$0xff]
    %v252 = vld [vmem:[#allocation3 + $0x690] sm:$0xff]
    %v253 = vld [vmem:[#allocation3 + $0x698] sm:$0xff]
    %v254 = vld [vmem:[#allocation3 + $0x6a0] sm:$0xff]
    %v255 = vld [vmem:[#allocation3 + $0x6a8] sm:$0xff]
    %v256 = vld [vmem:[#allocation3 + $0x6b0] sm:$0xff]
    %v257 = vld [vmem:[#allocation3 + $0x6b8] sm:$0xff]
    %v258 = vld [vmem:[#allocation3 + $0x6c0] sm:$0xff]
    %v259 = vld [vmem:[#allocation3 + $0x6c8] sm:$0xff]
    %v260 = vld [vmem:[#allocation3 + $0x6d0] sm:$0xff]
    %v261 = vld [vmem:[#allocation3 + $0x6d8] sm:$0xff]
    %v262 = vld [vmem:[#allocation3 + $0x6e0] sm:$0xff]
    %v263 = vld [vmem:[#allocation3 + $0x6e8] sm:$0xff]
    %v264 = vld [vmem:[#allocation3 + $0x6f0] sm:$0xff]
    %v265 = vld [vmem:[#allocation3 + $0x6f8] sm:$0xff]
    %v266 = vld [vmem:[#allocation3 + $0x700] sm:$0xff]
    %v267 = vld [vmem:[#allocation3 + $0x708] sm:$0xff]
    %v268 = vld [vmem:[#allocation3 + $0x710] sm:$0xff]
    %v269 = vld [vmem:[#allocation3 + $0x718] sm:$0xff]
    %v270 = vld [vmem:[#allocation3 + $0x720] sm:$0xff]
    %v271 = vld [vmem:[#allocation3 + $0x728] sm:$0xff]
    %v272 = vld [vmem:[#allocation3 + $0x730] sm:$0xff]
    %v273 = vld [vmem:[#allocation3 + $0x738] sm:$0xff]
    %v274 = vld [vmem:[#allocation3 + $0x740] sm:$0xff]
    %v275 = vld [vmem:[#allocation3 + $0x748] sm:$0xff]
    %v276 = vld [vmem:[#allocation3 + $0x750] sm:$0xff]
    %v277 = vld [vmem:[#allocation3 + $0x758] sm:$0xff]
    %v278 = vld [vmem:[#allocation3 + $0x760] sm:$0xff]
    %v279 = vld [vmem:[#allocation3 + $0x768] sm:$0xff]
    %v280 = vld [vmem:[#allocation3 + $0x770] sm:$0xff]
    %v281 = vld [vmem:[#allocation3 + $0x778] sm:$0xff]
    %v282 = vld [vmem:[#allocation3 + $0x780] sm:$0xff]
    %v283 = vld [vmem:[#allocation3 + $0x788] sm:$0xff]
    %v284 = vld [vmem:[#allocation3 + $0x790] sm:$0xff]
    %v285 = vld [vmem:[#allocation3 + $0x798] sm:$0xff]
    %v286 = vld [vmem:[#allocation3 + $0x7a0] sm:$0xff]
    %v287 = vld [vmem:[#allocation3 + $0x7a8] sm:$0xff]
    %v288 = vld [vmem:[#allocation3 + $0x7b0] sm:$0xff]
    %v289 = vld [vmem:[#allocation3 + $0x7b8] sm:$0xff]
    %v290 = vld [vmem:[#allocation3 + $0x7c0] sm:$0xff]
    %v291 = vld [vmem:[#allocation3 + $0x7c8] sm:$0xff]
    %v292 = vld [vmem:[#allocation3 + $0x7d0] sm:$0xff]
    %v293 = vld [vmem:[#allocation3 + $0x7d8] sm:$0xff]
    %v294 = vld [vmem:[#allocation3 + $0x7e0] sm:$0xff]
    %v295 = vld [vmem:[#allocation3 + $0x7e8] sm:$0xff]
    %v296 = vld [vmem:[#allocation3 + $0x7f0] sm:$0xff]
    %v297 = vld [vmem:[#allocation3 + $0x7f8] sm:$0xff]
    %v298 = vld [vmem:[#allocation3 + $0x800] sm:$0xff]
    %v299 = vld [vmem:[#allocation3 + $0x808] sm:$0xff]
    %v300 = vld [vmem:[#allocation3 + $0x810] sm:$0xff]
    %v301 = vld [vmem:[#allocation3 + $0x818] sm:$0xff]
    %v302 = vld [vmem:[#allocation3 + $0x820] sm:$0xff]
    %v303 = vld [vmem:[#allocation3 + $0x828] sm:$0xff]
    %v304 = vld [vmem:[#allocation3 + $0x830] sm:$0xff]
    %v305 = vld [vmem:[#allocation3 + $0x838] sm:$0xff]
    %v306 = vld [vmem:[#allocation3 + $0x840] sm:$0xff]
    %v307 = vld [vmem:[#allocation3 + $0x848] sm:$0xff]
    %v308 = vld [vmem:[#allocation3 + $0x850] sm:$0xff]
    %v309 = vld [vmem:[#allocation3 + $0x858] sm:$0xff]
    %v310 = vld [vmem:[#allocation3 + $0x860] sm:$0xff]
    %v311 = vld [vmem:[#allocation3 + $0x868] sm:$0xff]
    %v312 = vld [vmem:[#allocation3 + $0x870] sm:$0xff]
    %v313 = vld [vmem:[#allocation3 + $0x878] sm:$0xff]
    %v314 = vld [vmem:[#allocation3 + $0x880] sm:$0xff]
    %v315 = vld [vmem:[#allocation3 + $0x888] sm:$0xff]
    %v316 = vld [vmem:[#allocation3 + $0x890] sm:$0xff]
    %v317 = vld [vmem:[#allocation3 + $0x898] sm:$0xff]
    %v318 = vld [vmem:[#allocation3 + $0x8a0] sm:$0xff]
    %v319 = vld [vmem:[#allocation3 + $0x8a8] sm:$0xff]
    %v320 = vld [vmem:[#allocation3 + $0x8b0] sm:$0xff]
    %v321 = vld [vmem:[#allocation3 + $0x8b8] sm:$0xff]
    %v322 = vld [vmem:[#allocation3 + $0x8c0] sm:$0xff]
    %v323 = vld [vmem:[#allocation3 + $0x8c8] sm:$0xff]
    %v324 = vld [vmem:[#allocation3 + $0x8d0] sm:$0xff]
    %v325 = vld [vmem:[#allocation3 + $0x8d8] sm:$0xff]
    %v326 = vld [vmem:[#allocation3 + $0x8e0] sm:$0xff]
    %v327 = vld [vmem:[#allocation3 + $0x8e8] sm:$0xff]
    %v328 = vld [vmem:[#allocation3 + $0x8f0] sm:$0xff]
    %v329 = vld [vmem:[#allocation3 + $0x8f8] sm:$0xff]
    %v330 = vld [vmem:[#allocation3 + $0x900] sm:$0xff]
    %v331 = vld [vmem:[#allocation3 + $0x908] sm:$0xff]
    %v332 = vld [vmem:[#allocation3 + $0x910] sm:$0xff]
    %v333 = vld [vmem:[#allocation3 + $0x918] sm:$0xff]
    %v334 = vld [vmem:[#allocation3 + $0x920] sm:$0xff]
    %v335 = vld [vmem:[#allocation3 + $0x928] sm:$0xff]
    %v336 = vld [vmem:[#allocation3 + $0x930] sm:$0xff]
    %v337 = vld [vmem:[#allocation3 + $0x938] sm:$0xff]
    %v338 = vld [vmem:[#allocation3 + $0x940] sm:$0xff]
    %v339 = vld [vmem:[#allocation3 + $0x948] sm:$0xff]
    %v340 = vld [vmem:[#allocation3 + $0x950] sm:$0xff]
    %v341 = vld [vmem:[#allocation3 + $0x958] sm:$0xff]
    %v342 = vld [vmem:[#allocation3 + $0x960] sm:$0xff]
    %v343 = vld [vmem:[#allocation3 + $0x968] sm:$0xff]
    %v344 = vld [vmem:[#allocation3 + $0x970] sm:$0xff]
    %v345 = vld [vmem:[#allocation3 + $0x978] sm:$0xff]
    %v346 = vld [vmem:[#allocation3 + $0x980] sm:$0xff]
    %v347 = vld [vmem:[#allocation3 + $0x988] sm:$0xff]
    %v348 = vld [vmem:[#allocation3 + $0x990] sm:$0xff]
    %v349 = vld [vmem:[#allocation3 + $0x998] sm:$0xff]
    %v350 = vld [vmem:[#allocation3 + $0x9a0] sm:$0xff]
    %v351 = vld [vmem:[#allocation3 + $0x9a8] sm:$0xff]
    %v352 = vld [vmem:[#allocation3 + $0x9b0] sm:$0xff]
    %v353 = vld [vmem:[#allocation3 + $0x9b8] sm:$0xff]
    %v354 = vld [vmem:[#allocation3 + $0x9c0] sm:$0xff]
    %v355 = vld [vmem:[#allocation3 + $0x9c8] sm:$0xff]
    %v356 = vld [vmem:[#allocation3 + $0x9d0] sm:$0xff]
    %v357 = vld [vmem:[#allocation3 + $0x9d8] sm:$0xff]
    %v358 = vld [vmem:[#allocation3 + $0x9e0] sm:$0xff]
    %v359 = vld [vmem:[#allocation3 + $0x9e8] sm:$0xff]
    %v360 = vld [vmem:[#allocation3 + $0x9f0] sm:$0xff]
    %v361 = vld [vmem:[#allocation3 + $0x9f8] sm:$0xff]
    %v362 = vld [vmem:[#allocation3 + $0xa00] sm:$0xff]
    %v363 = vld [vmem:[#allocation3 + $0xa08] sm:$0xff]
    %v364 = vld [vmem:[#allocation3 + $0xa10] sm:$0xff]
    %v365 = vld [vmem:[#allocation3 + $0xa18] sm:$0xff]
    %v366 = vld [vmem:[#allocation3 + $0xa20] sm:$0xff]
    %v367 = vld [vmem:[#allocation3 + $0xa28] sm:$0xff]
    %v368 = vld [vmem:[#allocation3 + $0xa30] sm:$0xff]
    %v369 = vld [vmem:[#allocation3 + $0xa38] sm:$0xff]
    %v370 = vld [vmem:[#allocation3 + $0xa40] sm:$0xff]
    %v371 = vld [vmem:[#allocation3 + $0xa48] sm:$0xff]
    %v372 = vld [vmem:[#allocation3 + $0xa50] sm:$0xff]
    %v373 = vld [vmem:[#allocation3 + $0xa58] sm:$0xff]
    %v374 = vld [vmem:[#allocation3 + $0xa60] sm:$0xff]
    %v375 = vld [vmem:[#allocation3 + $0xa68] sm:$0xff]
    %v376 = vld [vmem:[#allocation3 + $0xa70] sm:$0xff]
    %v377 = vld [vmem:[#allocation3 + $0xa78] sm:$0xff]
    %v378 = vld [vmem:[#allocation3 + $0xa80] sm:$0xff]
    %v379 = vld [vmem:[#allocation3 + $0xa88] sm:$0xff]
    %v380 = vld [vmem:[#allocation3 + $0xa90] sm:$0xff]
    %v381 = vld [vmem:[#allocation3 + $0xa98] sm:$0xff]
    %v382 = vld [vmem:[#allocation3 + $0xaa0] sm:$0xff]
    %v383 = vld [vmem:[#allocation3 + $0xaa8] sm:$0xff]
    %v384 = vld [vmem:[#allocation3 + $0xab0] sm:$0xff]
    %v385 = vld [vmem:[#allocation3 + $0xab8] sm:$0xff]
    %v386 = vld [vmem:[#allocation3 + $0xac0] sm:$0xff]
    %v387 = vld [vmem:[#allocation3 + $0xac8] sm:$0xff]
    %v388 = vld [vmem:[#allocation3 + $0xad0] sm:$0xff]
    %v389 = vld [vmem:[#allocation3 + $0xad8] sm:$0xff]
    %v390 = vld [vmem:[#allocation3 + $0xae0] sm:$0xff]
    %v391 = vld [vmem:[#allocation3 + $0xae8] sm:$0xff]
    %v392 = vld [vmem:[#allocation3 + $0xaf0] sm:$0xff]
    %v393 = vld [vmem:[#allocation3 + $0xaf8] sm:$0xff]
    %v394 = vld [vmem:[#allocation3 + $0xb00] sm:$0xff]
    %v395 = vld [vmem:[#allocation3 + $0xb08] sm:$0xff]
    %v396 = vld [vmem:[#allocation3 + $0xb10] sm:$0xff]
    %v397 = vld [vmem:[#allocation3 + $0xb18] sm:$0xff]
    %v398 = vld [vmem:[#allocation3 + $0xb20] sm:$0xff]
    %v399 = vld [vmem:[#allocation3 + $0xb28] sm:$0xff]
    %v400 = vld [vmem:[#allocation3 + $0xb30] sm:$0xff]
    %v401 = vld [vmem:[#allocation3 + $0xb38] sm:$0xff]
    %v402 = vld [vmem:[#allocation3 + $0xb40] sm:$0xff]
    %v403 = vld [vmem:[#allocation3 + $0xb48] sm:$0xff]
    %v404 = vld [vmem:[#allocation3 + $0xb50] sm:$0xff]
    %v405 = vld [vmem:[#allocation3 + $0xb58] sm:$0xff]
    %v406 = vld [vmem:[#allocation3 + $0xb60] sm:$0xff]
    %v407 = vld [vmem:[#allocation3 + $0xb68] sm:$0xff]
    %v408 = vld [vmem:[#allocation3 + $0xb70] sm:$0xff]
    %v409 = vld [vmem:[#allocation3 + $0xb78] sm:$0xff]
    %v410 = vld [vmem:[#allocation3 + $0xb80] sm:$0xff]
    %v411 = vld [vmem:[#allocation3 + $0xb88] sm:$0xff]
    %v412 = vld [vmem:[#allocation3 + $0xb90] sm:$0xff]
    %v413 = vld [vmem:[#allocation3 + $0xb98] sm:$0xff]
    %v414 = vld [vmem:[#allocation3 + $0xba0] sm:$0xff]
    %v415 = vld [vmem:[#allocation3 + $0xba8] sm:$0xff]
    %v416 = vld [vmem:[#allocation3 + $0xbb0] sm:$0xff]
    %v417 = vld [vmem:[#allocation3 + $0xbb8] sm:$0xff]
    %v418 = vld [vmem:[#allocation3 + $0xbc0] sm:$0xff]
    %v419 = vld [vmem:[#allocation3 + $0xbc8] sm:$0xff]
    %v420 = vld [vmem:[#allocation3 + $0xbd0] sm:$0xff]
    %v421 = vld [vmem:[#allocation3 + $0xbd8] sm:$0xff]
    %v422 = vld [vmem:[#allocation3 + $0xbe0] sm:$0xff]
    %v423 = vld [vmem:[#allocation3 + $0xbe8] sm:$0xff]
    %v424 = vld [vmem:[#allocation3 + $0xbf0] sm:$0xff]
    %v425 = vld [vmem:[#allocation3 + $0xbf8] sm:$0xff]
    %v426 = vld [vmem:[#allocation3 + $0xc00] sm:$0xff]
    %v427 = vld [vmem:[#allocation3 + $0xc08] sm:$0xff]
    %v428 = vld [vmem:[#allocation3 + $0xc10] sm:$0xff]
    %v429 = vld [vmem:[#allocation3 + $0xc18] sm:$0xff]
    %v430 = vld [vmem:[#allocation3 + $0xc20] sm:$0xff]
    %v431 = vld [vmem:[#allocation3 + $0xc28] sm:$0xff]
    %v432 = vld [vmem:[#allocation3 + $0xc30] sm:$0xff]
    %v433 = vld [vmem:[#allocation3 + $0xc38] sm:$0xff]
    %v434 = vld [vmem:[#allocation3 + $0xc40] sm:$0xff]
    %v435 = vld [vmem:[#allocation3 + $0xc48] sm:$0xff]
    %v436 = vld [vmem:[#allocation3 + $0xc50] sm:$0xff]
    %v437 = vld [vmem:[#allocation3 + $0xc58] sm:$0xff]
    %v438 = vld [vmem:[#allocation3 + $0xc60] sm:$0xff]
    %v439 = vld [vmem:[#allocation3 + $0xc68] sm:$0xff]
    %v440 = vld [vmem:[#allocation3 + $0xc70] sm:$0xff]
    %v441 = vld [vmem:[#allocation3 + $0xc78] sm:$0xff]
    %v442 = vld [vmem:[#allocation3 + $0xc80] sm:$0xff]
    %v443 = vld [vmem:[#allocation3 + $0xc88] sm:$0xff]
    %v444 = vld [vmem:[#allocation3 + $0xc90] sm:$0xff]
    %v445 = vld [vmem:[#allocation3 + $0xc98] sm:$0xff]
    %v446 = vld [vmem:[#allocation3 + $0xca0] sm:$0xff]
    %v447 = vld [vmem:[#allocation3 + $0xca8] sm:$0xff]
    %v448 = vld [vmem:[#allocation3 + $0xcb0] sm:$0xff]
    %v449 = vld [vmem:[#allocation3 + $0xcb8] sm:$0xff]
    %v450 = vld [vmem:[#allocation3 + $0xcc0] sm:$0xff]
    %v451 = vld [vmem:[#allocation3 + $0xcc8] sm:$0xff]
    %v452 = vld [vmem:[#allocation3 + $0xcd0] sm:$0xff]
    %v453 = vld [vmem:[#allocation3 + $0xcd8] sm:$0xff]
    %v454 = vld [vmem:[#allocation3 + $0xce0] sm:$0xff]
    %v455 = vld [vmem:[#allocation3 + $0xce8] sm:$0xff]
    %v456 = vld [vmem:[#allocation3 + $0xcf0] sm:$0xff]
    %v457 = vld [vmem:[#allocation3 + $0xcf8] sm:$0xff]
    %v458 = vld [vmem:[#allocation3 + $0xd00] sm:$0xff]
    %v459 = vld [vmem:[#allocation3 + $0xd08] sm:$0xff]
    %v460 = vld [vmem:[#allocation3 + $0xd10] sm:$0xff]
    %v461 = vld [vmem:[#allocation3 + $0xd18] sm:$0xff]
    %v462 = vld [vmem:[#allocation3 + $0xd20] sm:$0xff]
    %v463 = vld [vmem:[#allocation3 + $0xd28] sm:$0xff]
    %v464 = vld [vmem:[#allocation3 + $0xd30] sm:$0xff]
    %v465 = vld [vmem:[#allocation3 + $0xd38] sm:$0xff]
    %v466 = vld [vmem:[#allocation3 + $0xd40] sm:$0xff]
    %v467 = vld [vmem:[#allocation3 + $0xd48] sm:$0xff]
    %v468 = vld [vmem:[#allocation3 + $0xd50] sm:$0xff]
    %v469 = vld [vmem:[#allocation3 + $0xd58] sm:$0xff]
    %v470 = vld [vmem:[#allocation3 + $0xd60] sm:$0xff]
    %v471 = vld [vmem:[#allocation3 + $0xd68] sm:$0xff]
    %v472 = vld [vmem:[#allocation3 + $0xd70] sm:$0xff]
    %v473 = vld [vmem:[#allocation3 + $0xd78] sm:$0xff]
    %474 = vmatprep.subr.mxu0 %v43
    %475 = vmatpush1.msra.mxu0 %v42
    %476 = vmatprep.subr.mxu0 %v70
    %477 = vmatpush1.msra.mxu0 %v69
    %478 = vmatprep.subr.mxu0 %v97
    %479 = vmatpush1.msra.mxu0 %v96
    %480 = vmatprep.subr.mxu0 %v124
    %481 = vmatpush1.msra.mxu0 %v123
    %482 = vmatprep.subr.mxu0 %v151
    %483 = vmatpush1.msra.mxu0 %v150
    %484 = vmatprep.subr.mxu0 %v178
    %485 = vmatpush1.msra.mxu0 %v177
    %486 = vmatprep.subr.mxu0 %v205
    %487 = vmatpush1.msra.mxu0 %v204
    %488 = vmatprep.subr.mxu0 %v232
    %489 = vmatpush1.msra.mxu0 %v231
    %490 = vmatprep.subr.mxu0 %v259
    %491 = vmatpush1.msra.mxu0 %v258
    %492 = vmatprep.subr.mxu0 %v286
    %493 = vmatpush1.msra.mxu0 %v285
    %494 = vmatprep.subr.mxu0 %v313
    %495 = vmatpush1.msra.mxu0 %v312
    %496 = vmatprep.subr.mxu0 %v340
    %497 = vmatpush1.msra.mxu0 %v339
    %498 = vmatprep.subr.mxu0 %v367
    %499 = vmatpush1.msra.mxu0 %v366
    %500 = vmatprep.subr.mxu0 %v394
    %501 = vmatpush1.msra.mxu0 %v393
    %502 = vmatprep.subr.mxu0 %v421
    %503 = vmatpush1.msra.mxu0 %v420
    %504 = vmatprep.subr.mxu0 %v448
    %505 = vmatpush1.msra.mxu0 %v447
    %506 = vmatprep.subr.mxu0 0.0
    %507 = vmatpush1.msra.mxu0 0.0
    %508 = vmatprep.subr.mxu0 0.0
    %509 = vmatpush1.msra.mxu0 0.0
    %510 = vmatprep.subr.mxu0 0.0
    %511 = vmatpush1.msra.mxu0 0.0
    %512 = vmatprep.subr.mxu0 0.0
    %513 = vmatpush1.msra.mxu0 0.0
    %514 = vmatprep.subr.mxu0 0.0
    %515 = vmatpush1.msra.mxu0 0.0
    %516 = vmatprep.subr.mxu0 0.0
    %517 = vmatpush1.msra.mxu0 0.0
    %518 = vmatprep.subr.mxu0 0.0
    %519 = vmatpush1.msra.mxu0 0.0
    %520 = vmatprep.subr.mxu0 0.0
    %521 = vmatpush1.msra.mxu0 0.0
    %522 = vmatprep.subr.mxu0 0.0
    %523 = vmatpush1.msra.mxu0 0.0
    %524 = vmatprep.subr.mxu0 0.0
    %525 = vmatpush1.msra.mxu0 0.0
    %526 = vmatprep.subr.mxu0 0.0
    %527 = vmatpush1.msra.mxu0 0.0
    %528 = vmatprep.subr.mxu0 0.0
    %529 = vmatpush1.msra.mxu0 0.0
    %530 = vmatprep.subr.mxu0 0.0
    %531 = vmatpush1.msra.mxu0 0.0
    %532 = vmatprep.subr.mxu0 0.0
    %533 = vmatpush1.msra.mxu0 0.0
    %534 = vmatprep.subr.mxu0 0.0
    %535 = vmatpush1.msra.mxu0 0.0
    %536 = vmatprep.subr.mxu0 0.0
    %537 = vmatpush1.msra.mxu0 0.0
    %538 = vmatprep.mubr.f32.mxu0 0.0
    %539 = vmatmul.mubr.f32.gmra.mrb[0].mxu0 %v40
    %v540 = vpop.f32.mrb[0].mxu0
    %v541 = vadd.f32 0.0, %v540
    %v542 = vpop.f32.mrb[0].mxu0
    %v543 = vadd.f32 0.0, %v542
    %544 = vmatprep.mubr.f32.mxu0 0.0
    %545 = vmatmul.mubr.f32.gmra.mrb[0].mxu0 %v41
    %v546 = vpop.f32.mrb[0].mxu0
    %v547 = vadd.f32 0.0, %v546
    %v548 = vpop.f32.mrb[0].mxu0
    %v549 = vadd.f32 0.0, %v548
    %550 = vdwg.mxu0
    %551 = vmatprep.subr.mxu0 %v45
    %552 = vmatpush1.msra.mxu0 %v44
    %553 = vmatprep.subr.mxu0 %v72
    %554 = vmatpush1.msra.mxu0 %v71
    %555 = vmatprep.subr.mxu0 %v99
    %556 = vmatpush1.msra.mxu0 %v98
    %557 = vmatprep.subr.mxu0 %v126
    %558 = vmatpush1.msra.mxu0 %v125
    %559 = vmatprep.subr.mxu0 %v153
    %560 = vmatpush1.msra.mxu0 %v152
    %561 = vmatprep.subr.mxu0 %v180
    %562 = vmatpush1.msra.mxu0 %v179
    %563 = vmatprep.subr.mxu0 %v207
    %564 = vmatpush1.msra.mxu0 %v206
    %565 = vmatprep.subr.mxu0 %v234
    %566 = vmatpush1.msra.mxu0 %v233
    %567 = vmatprep.subr.mxu0 %v261
    %568 = vmatpush1.msra.mxu0 %v260
    %569 = vmatprep.subr.mxu0 %v288
    %570 = vmatpush1.msra.mxu0 %v287
    %571 = vmatprep.subr.mxu0 %v315
    %572 = vmatpush1.msra.mxu0 %v314
    %573 = vmatprep.subr.mxu0 %v342
    %574 = vmatpush1.msra.mxu0 %v341
    %575 = vmatprep.subr.mxu0 %v369
    %576 = vmatpush1.msra.mxu0 %v368
    %577 = vmatprep.subr.mxu0 %v396
    %578 = vmatpush1.msra.mxu0 %v395
    %579 = vmatprep.subr.mxu0 %v423
    %580 = vmatpush1.msra.mxu0 %v422
    %581 = vmatprep.subr.mxu0 %v450
    %582 = vmatpush1.msra.mxu0 %v449
    %583 = vmatprep.subr.mxu0 0.0
    %584 = vmatpush1.msra.mxu0 0.0
    %585 = vmatprep.subr.mxu0 0.0
    %586 = vmatpush1.msra.mxu0 0.0
    %587 = vmatprep.subr.mxu0 0.0
    %588 = vmatpush1.msra.mxu0 0.0
    %589 = vmatprep.subr.mxu0 0.0
    %590 = vmatpush1.msra.mxu0 0.0
    %591 = vmatprep.subr.mxu0 0.0
    %592 = vmatpush1.msra.mxu0 0.0
    %593 = vmatprep.subr.mxu0 0.0
    %594 = vmatpush1.msra.mxu0 0.0
    %595 = vmatprep.subr.mxu0 0.0
    %596 = vmatpush1.msra.mxu0 0.0
    %597 = vmatprep.subr.mxu0 0.0
    %598 = vmatpush1.msra.mxu0 0.0
    %599 = vmatprep.subr.mxu0 0.0
    %600 = vmatpush1.msra.mxu0 0.0
    %601 = vmatprep.subr.mxu0 0.0
    %602 = vmatpush1.msra.mxu0 0.0
    %603 = vmatprep.subr.mxu0 0.0
    %604 = vmatpush1.msra.mxu0 0.0
    %605 = vmatprep.subr.mxu0 0.0
    %606 = vmatpush1.msra.mxu0 0.0
    %607 = vmatprep.subr.mxu0 0.0
    %608 = vmatpush1.msra.mxu0 0.0
    %609 = vmatprep.subr.mxu0 0.0
    %610 = vmatpush1.msra.mxu0 0.0
    %611 = vmatprep.subr.mxu0 0.0
    %612 = vmatpush1.msra.mxu0 0.0
    %613 = vmatprep.subr.mxu0 0.0
    %614 = vmatpush1.msra.mxu0 0.0
    %615 = vmatprep.mubr.f32.mxu0 0.0
    %616 = vmatmul.mubr.f32.gmra.mrb[0].mxu0 %v40
    %v617 = vpop.f32.mrb[0].mxu0
    %v618 = vadd.f32 0.0, %v617
    %v619 = vpop.f32.mrb[0].mxu0
    %v620 = vadd.f32 0.0, %v619
    %621 = vmatprep.mubr.f32.mxu0 0.0
    %622 = vmatmul.mubr.f32.gmra.mrb[0].mxu0 %v41
    %v623 = vpop.f32.mrb[0].mxu0
    %v624 = vadd.f32 0.0, %v623
    %v625 = vpop.f32.mrb[0].mxu0
    %v626 = vadd.f32 0.0, %v625
    %627 = vdwg.mxu0
    %628 = vmatprep.subr.mxu0 %v47
    %629 = vmatpush1.msra.mxu0 %v46
    %630 = vmatprep.subr.mxu0 %v74
    %631 = vmatpush1.msra.mxu0 %v73
    %632 = vmatprep.subr.mxu0 %v101
    %633 = vmatpush1.msra.mxu0 %v100
    %634 = vmatprep.subr.mxu0 %v128
    %635 = vmatpush1.msra.mxu0 %v127
    %636 = vmatprep.subr.mxu0 %v155
    %637 = vmatpush1.msra.mxu0 %v154
    %638 = vmatprep.subr.mxu0 %v182
    %639 = vmatpush1.msra.mxu0 %v181
    %640 = vmatprep.subr.mxu0 %v209
    %641 = vmatpush1.msra.mxu0 %v208
    %642 = vmatprep.subr.mxu0 %v236
    %643 = vmatpush1.msra.mxu0 %v235
    %644 = vmatprep.subr.mxu0 %v263
    %645 = vmatpush1.msra.mxu0 %v262
    %646 = vmatprep.subr.mxu0 %v290
    %647 = vmatpush1.msra.mxu0 %v289
    %648 = vmatprep.subr.mxu0 %v317
    %649 = vmatpush1.msra.mxu0 %v316
    %650 = vmatprep.subr.mxu0 %v344
    %651 = vmatpush1.msra.mxu0 %v343
    %652 = vmatprep.subr.mxu0 %v371
    %653 = vmatpush1.msra.mxu0 %v370
    %654 = vmatprep.subr.mxu0 %v398
    %655 = vmatpush1.msra.mxu0 %v397
    %656 = vmatprep.subr.mxu0 %v425
    %657 = vmatpush1.msra.mxu0 %v424
    %658 = vmatprep.subr.mxu0 %v452
    %659 = vmatpush1.msra.mxu0 %v451
    %660 = vmatprep.subr.mxu0 0.0
    %661 = vmatpush1.msra.mxu0 0.0
    %662 = vmatprep.subr.mxu0 0.0
    %663 = vmatpush1.msra.mxu0 0.0
    %664 = vmatprep.subr.mxu0 0.0
    %665 = vmatpush1.msra.mxu0 0.0
    %666 = vmatprep.subr.mxu0 0.0
    %667 = vmatpush1.msra.mxu0 0.0
    %668 = vmatprep.subr.mxu0 0.0
    %669 = vmatpush1.msra.mxu0 0.0
    %670 = vmatprep.subr.mxu0 0.0
    %671 = vmatpush1.msra.mxu0 0.0
    %672 = vmatprep.subr.mxu0 0.0
    %673 = vmatpush1.msra.mxu0 0.0
    %674 = vmatprep.subr.mxu0 0.0
    %675 = vmatpush1.msra.mxu0 0.0
    %676 = vmatprep.subr.mxu0 0.0
    %677 = vmatpush1.msra.mxu0 0.0
    %678 = vmatprep.subr.mxu0 0.0
    %679 = vmatpush1.msra.mxu0 0.0
    %680 = vmatprep.subr.mxu0 0.0
    %681 = vmatpush1.msra.mxu0 0.0
    %682 = vmatprep.subr.mxu0 0.0
    %683 = vmatpush1.msra.mxu0 0.0
    %684 = vmatprep.subr.mxu0 0.0
    %685 = vmatpush1.msra.mxu0 0.0
    %686 = vmatprep.subr.mxu0 0.0
    %687 = vmatpush1.msra.mxu0 0.0
    %688 = vmatprep.subr.mxu0 0.0
    %689 = vmatpush1.msra.mxu0 0.0
    %690 = vmatprep.subr.mxu0 0.0
    %691 = vmatpush1.msra.mxu0 0.0
    %692 = vmatprep.mubr.f32.mxu0 0.0
    %693 = vmatmul.mubr.f32.gmra.mrb[0].mxu0 %v40
    %v694 = vpop.f32.mrb[0].mxu0
    %v695 = vadd.f32 0.0, %v694
    %v696 = vpop.f32.mrb[0].mxu0
    %v697 = vadd.f32 0.0, %v696
    %698 = vmatprep.mubr.f32.mxu0 0.0
    %699 = vmatmul.mubr.f32.gmra.mrb[0].mxu0 %v41
    %v700 = vpop.f32.mrb[0].mxu0
    %v701 = vadd.f32 0.0, %v700
    %v702 = vpop.f32.mrb[0].mxu0
    %v703 = vadd.f32 0.0, %v702
    %704 = vdwg.mxu0
    %705 = vmatprep.subr.mxu0 %v49
    %706 = vmatpush1.msra.mxu0 %v48
    %707 = vmatprep.subr.mxu0 %v76
    %708 = vmatpush1.msra.mxu0 %v75
    %709 = vmatprep.subr.mxu0 %v103
    %710 = vmatpush1.msra.mxu0 %v102
    %711 = vmatprep.subr.mxu0 %v130
    %712 = vmatpush1.msra.mxu0 %v129
    %713 = vmatprep.subr.mxu0 %v157
    %714 = vmatpush1.msra.mxu0 %v156
    %715 = vmatprep.subr.mxu0 %v184
    %716 = vmatpush1.msra.mxu0 %v183
    %717 = vmatprep.subr.mxu0 %v211
    %718 = vmatpush1.msra.mxu0 %v210
    %719 = vmatprep.subr.mxu0 %v238
    %720 = vmatpush1.msra.mxu0 %v237
    %721 = vmatprep.subr.mxu0 %v265
    %722 = vmatpush1.msra.mxu0 %v264
    %723 = vmatprep.subr.mxu0 %v292
    %724 = vmatpush1.msra.mxu0 %v291
    %725 = vmatprep.subr.mxu0 %v319
    %726 = vmatpush1.msra.mxu0 %v318
    %727 = vmatprep.subr.mxu0 %v346
    %728 = vmatpush1.msra.mxu0 %v345
    %729 = vmatprep.subr.mxu0 %v373
    %730 = vmatpush1.msra.mxu0 %v372
    %731 = vmatprep.subr.mxu0 %v400
    %732 = vmatpush1.msra.mxu0 %v399
    %733 = vmatprep.subr.mxu0 %v427
    %734 = vmatpush1.msra.mxu0 %v426
    %735 = vmatprep.subr.mxu0 %v454
    %736 = vmatpush1.msra.mxu0 %v453
    %737 = vmatprep.subr.mxu0 0.0
    %738 = vmatpush1.msra.mxu0 0.0
    %739 = vmatprep.subr.mxu0 0.0
    %740 = vmatpush1.msra.mxu0 0.0
    %741 = vmatprep.subr.mxu0 0.0
    %742 = vmatpush1.msra.mxu0 0.0
    %743 = vmatprep.subr.mxu0 0.0
    %744 = vmatpush1.msra.mxu0 0.0
    %745 = vmatprep.subr.mxu0 0.0
    %746 = vmatpush1.msra.mxu0 0.0
    %747 = vmatprep.subr.mxu0 0.0
    %748 = vmatpush1.msra.mxu0 0.0
    %749 = vmatprep.subr.mxu0 0.0
    %750 = vmatpush1.msra.mxu0 0.0
    %751 = vmatprep.subr.mxu0 0.0
    %752 = vmatpush1.msra.mxu0 0.0
    %753 = vmatprep.subr.mxu0 0.0
    %754 = vmatpush1.msra.mxu0 0.0
    %755 = vmatprep.subr.mxu0 0.0
    %756 = vmatpush1.msra.mxu0 0.0
    %757 = vmatprep.subr.mxu0 0.0
    %758 = vmatpush1.msra.mxu0 0.0
    %759 = vmatprep.subr.mxu0 0.0
    %760 = vmatpush1.msra.mxu0 0.0
    %761 = vmatprep.subr.mxu0 0.0
    %762 = vmatpush1.msra.mxu0 0.0
    %763 = vmatprep.subr.mxu0 0.0
    %764 = vmatpush1.msra.mxu0 0.0
    %765 = vmatprep.subr.mxu0 0.0
    %766 = vmatpush1.msra.mxu0 0.0
    %767 = vmatprep.subr.mxu0 0.0
    %768 = vmatpush1.msra.mxu0 0.0
    %769 = vmatprep.mubr.f32.mxu0 0.0
    %770 = vmatmul.mubr.f32.gmra.mrb[0].mxu0 %v40
    %v771 = vpop.f32.mrb[0].mxu0
    %v772 = vadd.f32 0.0, %v771
    %v773 = vpop.f32.mrb[0].mxu0
    %v774 = vadd.f32 0.0, %v773
    %775 = vmatprep.mubr.f32.mxu0 0.0
    %776 = vmatmul.mubr.f32.gmra.mrb[0].mxu0 %v41
    %v777 = vpop.f32.mrb[0].mxu0
    %v778 = vadd.f32 0.0, %v777
    %v779 = vpop.f32.mrb[0].mxu0
    %v780 = vadd.f32 0.0, %v779
    %781 = vdwg.mxu0
    %782 = vmatprep.subr.mxu0 %v51
    %783 = vmatpush1.msra.mxu0 %v50
    %784 = vmatprep.subr.mxu0 %v78
    %785 = vmatpush1.msra.mxu0 %v77
    %786 = vmatprep.subr.mxu0 %v105
    %787 = vmatpush1.msra.mxu0 %v104
    %788 = vmatprep.subr.mxu0 %v132
    %789 = vmatpush1.msra.mxu0 %v131
    %790 = vmatprep.subr.mxu0 %v159
    %791 = vmatpush1.msra.mxu0 %v158
    %792 = vmatprep.subr.mxu0 %v186
    %793 = vmatpush1.msra.mxu0 %v185
    %794 = vmatprep.subr.mxu0 %v213
    %795 = vmatpush1.msra.mxu0 %v212
    %796 = vmatprep.subr.mxu0 %v240
    %797 = vmatpush1.msra.mxu0 %v239
    %798 = vmatprep.subr.mxu0 %v267
    %799 = vmatpush1.msra.mxu0 %v266
    %800 = vmatprep.subr.mxu0 %v294
    %801 = vmatpush1.msra.mxu0 %v293
    %802 = vmatprep.subr.mxu0 %v321
    %803 = vmatpush1.msra.mxu0 %v320
    %804 = vmatprep.subr.mxu0 %v348
    %805 = vmatpush1.msra.mxu0 %v347
    %806 = vmatprep.subr.mxu0 %v375
    %807 = vmatpush1.msra.mxu0 %v374
    %808 = vmatprep.subr.mxu0 %v402
    %809 = vmatpush1.msra.mxu0 %v401
    %810 = vmatprep.subr.mxu0 %v429
    %811 = vmatpush1.msra.mxu0 %v428
    %812 = vmatprep.subr.mxu0 %v456
    %813 = vmatpush1.msra.mxu0 %v455
    %814 = vmatprep.subr.mxu0 0.0
    %815 = vmatpush1.msra.mxu0 0.0
    %816 = vmatprep.subr.mxu0 0.0
    %817 = vmatpush1.msra.mxu0 0.0
    %818 = vmatprep.subr.mxu0 0.0
    %819 = vmatpush1.msra.mxu0 0.0
    %820 = vmatprep.subr.mxu0 0.0
    %821 = vmatpush1.msra.mxu0 0.0
    %822 = vmatprep.subr.mxu0 0.0
    %823 = vmatpush1.msra.mxu0 0.0
    %824 = vmatprep.subr.mxu0 0.0
    %825 = vmatpush1.msra.mxu0 0.0
    %826 = vmatprep.subr.mxu0 0.0
    %827 = vmatpush1.msra.mxu0 0.0
    %828 = vmatprep.subr.mxu0 0.0
    %829 = vmatpush1.msra.mxu0 0.0
    %830 = vmatprep.subr.mxu0 0.0
    %831 = vmatpush1.msra.mxu0 0.0
    %832 = vmatprep.subr.mxu0 0.0
    %833 = vmatpush1.msra.mxu0 0.0
    %834 = vmatprep.subr.mxu0 0.0
    %835 = vmatpush1.msra.mxu0 0.0
    %836 = vmatprep.subr.mxu0 0.0
    %837 = vmatpush1.msra.mxu0 0.0
    %838 = vmatprep.subr.mxu0 0.0
    %839 = vmatpush1.msra.mxu0 0.0
    %840 = vmatprep.subr.mxu0 0.0
    %841 = vmatpush1.msra.mxu0 0.0
    %842 = vmatprep.subr.mxu0 0.0
    %843 = vmatpush1.msra.mxu0 0.0
    %844 = vmatprep.subr.mxu0 0.0
    %845 = vmatpush1.msra.mxu0 0.0
    %846 = vmatprep.mubr.f32.mxu0 0.0
    %847 = vmatmul.mubr.f32.gmra.mrb[0].mxu0 %v40
    %v848 = vpop.f32.mrb[0].mxu0
    %v849 = vadd.f32 0.0, %v848
    %v850 = vpop.f32.mrb[0].mxu0
    %v851 = vadd.f32 0.0, %v850
    %852 = vmatprep.mubr.f32.mxu0 0.0
    %853 = vmatmul.mubr.f32.gmra.mrb[0].mxu0 %v41
    %v854 = vpop.f32.mrb[0].mxu0
    %v855 = vadd.f32 0.0, %v854
    %v856 = vpop.f32.mrb[0].mxu0
    %v857 = vadd.f32 0.0, %v856
    %858 = vdwg.mxu0
    %859 = vmatprep.subr.mxu0 %v53
    %860 = vmatpush1.msra.mxu0 %v52
    %861 = vmatprep.subr.mxu0 %v80
    %862 = vmatpush1.msra.mxu0 %v79
    %863 = vmatprep.subr.mxu0 %v107
    %864 = vmatpush1.msra.mxu0 %v106
    %865 = vmatprep.subr.mxu0 %v134
    %866 = vmatpush1.msra.mxu0 %v133
    %867 = vmatprep.subr.mxu0 %v161
    %868 = vmatpush1.msra.mxu0 %v160
    %869 = vmatprep.subr.mxu0 %v188
    %870 = vmatpush1.msra.mxu0 %v187
    %871 = vmatprep.subr.mxu0 %v215
    %872 = vmatpush1.msra.mxu0 %v214
    %873 = vmatprep.subr.mxu0 %v242
    %874 = vmatpush1.msra.mxu0 %v241
    %875 = vmatprep.subr.mxu0 %v269
    %876 = vmatpush1.msra.mxu0 %v268
    %877 = vmatprep.subr.mxu0 %v296
    %878 = vmatpush1.msra.mxu0 %v295
    %879 = vmatprep.subr.mxu0 %v323
    %880 = vmatpush1.msra.mxu0 %v322
    %881 = vmatprep.subr.mxu0 %v350
    %882 = vmatpush1.msra.mxu0 %v349
    %883 = vmatprep.subr.mxu0 %v377
    %884 = vmatpush1.msra.mxu0 %v376
    %885 = vmatprep.subr.mxu0 %v404
    %886 = vmatpush1.msra.mxu0 %v403
    %887 = vmatprep.subr.mxu0 %v431
    %888 = vmatpush1.msra.mxu0 %v430
    %889 = vmatprep.subr.mxu0 %v458
    %890 = vmatpush1.msra.mxu0 %v457
    %891 = vmatprep.subr.mxu0 0.0
    %892 = vmatpush1.msra.mxu0 0.0
    %893 = vmatprep.subr.mxu0 0.0
    %894 = vmatpush1.msra.mxu0 0.0
    %895 = vmatprep.subr.mxu0 0.0
    %896 = vmatpush1.msra.mxu0 0.0
    %897 = vmatprep.subr.mxu0 0.0
    %898 = vmatpush1.msra.mxu0 0.0
    %899 = vmatprep.subr.mxu0 0.0
    %900 = vmatpush1.msra.mxu0 0.0
    %901 = vmatprep.subr.mxu0 0.0
    %902 = vmatpush1.msra.mxu0 0.0
    %903 = vmatprep.subr.mxu0 0.0
    %904 = vmatpush1.msra.mxu0 0.0
    %905 = vmatprep.subr.mxu0 0.0
    %906 = vmatpush1.msra.mxu0 0.0
    %907 = vmatprep.subr.mxu0 0.0
    %908 = vmatpush1.msra.mxu0 0.0
    %909 = vmatprep.subr.mxu0 0.0
    %910 = vmatpush1.msra.mxu0 0.0
    %911 = vmatprep.subr.mxu0 0.0
    %912 = vmatpush1.msra.mxu0 0.0
    %913 = vmatprep.subr.mxu0 0.0
    %914 = vmatpush1.msra.mxu0 0.0
    %915 = vmatprep.subr.mxu0 0.0
    %916 = vmatpush1.msra.mxu0 0.0
    %917 = vmatprep.subr.mxu0 0.0
    %918 = vmatpush1.msra.mxu0 0.0
    %919 = vmatprep.subr.mxu0 0.0
    %920 = vmatpush1.msra.mxu0 0.0
    %921 = vmatprep.subr.mxu0 0.0
    %922 = vmatpush1.msra.mxu0 0.0
    %923 = vmatprep.mubr.f32.mxu0 0.0
    %924 = vmatmul.mubr.f32.gmra.mrb[0].mxu0 %v40
    %v925 = vpop.f32.mrb[0].mxu0
    %v926 = vadd.f32 0.0, %v925
    %v927 = vpop.f32.mrb[0].mxu0
    %v928 = vadd.f32 0.0, %v927
    %929 = vmatprep.mubr.f32.mxu0 0.0
    %930 = vmatmul.mubr.f32.gmra.mrb[0].mxu0 %v41
    %v931 = vpop.f32.mrb[0].mxu0
    %v932 = vadd.f32 0.0, %v931
    %v933 = vpop.f32.mrb[0].mxu0
    %v934 = vadd.f32 0.0, %v933
    %935 = vdwg.mxu0
    %936 = vmatprep.subr.mxu0 %v55
    %937 = vmatpush1.msra.mxu0 %v54
    %938 = vmatprep.subr.mxu0 %v82
    %939 = vmatpush1.msra.mxu0 %v81
    %940 = vmatprep.subr.mxu0 %v109
    %941 = vmatpush1.msra.mxu0 %v108
    %942 = vmatprep.subr.mxu0 %v136
    %943 = vmatpush1.msra.mxu0 %v135
    %944 = vmatprep.subr.mxu0 %v163
    %945 = vmatpush1.msra.mxu0 %v162
    %946 = vmatprep.subr.mxu0 %v190
    %947 = vmatpush1.msra.mxu0 %v189
    %948 = vmatprep.subr.mxu0 %v217
    %949 = vmatpush1.msra.mxu0 %v216
    %950 = vmatprep.subr.mxu0 %v244
    %951 = vmatpush1.msra.mxu0 %v243
    %952 = vmatprep.subr.mxu0 %v271
    %953 = vmatpush1.msra.mxu0 %v270
    %954 = vmatprep.subr.mxu0 %v298
    %955 = vmatpush1.msra.mxu0 %v297
    %956 = vmatprep.subr.mxu0 %v325
    %957 = vmatpush1.msra.mxu0 %v324
    %958 = vmatprep.subr.mxu0 %v352
    %959 = vmatpush1.msra.mxu0 %v351
    %960 = vmatprep.subr.mxu0 %v379
    %961 = vmatpush1.msra.mxu0 %v378
    %962 = vmatprep.subr.mxu0 %v406
    %963 = vmatpush1.msra.mxu0 %v405
    %964 = vmatprep.subr.mxu0 %v433
    %965 = vmatpush1.msra.mxu0 %v432
    %966 = vmatprep.subr.mxu0 %v460
    %967 = vmatpush1.msra.mxu0 %v459
    %968 = vmatprep.subr.mxu0 0.0
    %969 = vmatpush1.msra.mxu0 0.0
    %970 = vmatprep.subr.mxu0 0.0
    %971 = vmatpush1.msra.mxu0 0.0
    %972 = vmatprep.subr.mxu0 0.0
    %973 = vmatpush1.msra.mxu0 0.0
    %974 = vmatprep.subr.mxu0 0.0
    %975 = vmatpush1.msra.mxu0 0.0
    %976 = vmatprep.subr.mxu0 0.0
    %977 = vmatpush1.msra.mxu0 0.0
    %978 = vmatprep.subr.mxu0 0.0
    %979 = vmatpush1.msra.mxu0 0.0
    %980 = vmatprep.subr.mxu0 0.0
    %981 = vmatpush1.msra.mxu0 0.0
    %982 = vmatprep.subr.mxu0 0.0
    %983 = vmatpush1.msra.mxu0 0.0
    %984 = vmatprep.subr.mxu0 0.0
    %985 = vmatpush1.msra.mxu0 0.0
    %986 = vmatprep.subr.mxu0 0.0
    %987 = vmatpush1.msra.mxu0 0.0
    %988 = vmatprep.subr.mxu0 0.0
    %989 = vmatpush1.msra.mxu0 0.0
    %990 = vmatprep.subr.mxu0 0.0
    %991 = vmatpush1.msra.mxu0 0.0
    %992 = vmatprep.subr.mxu0 0.0
    %993 = vmatpush1.msra.mxu0 0.0
    %994 = vmatprep.subr.mxu0 0.0
    %995 = vmatpush1.msra.mxu0 0.0
    %996 = vmatprep.subr.mxu0 0.0
    %997 = vmatpush1.msra.mxu0 0.0
    %998 = vmatprep.subr.mxu0 0.0
    %999 = vmatpush1.msra.mxu0 0.0
    %1000 = vmatprep.mubr.f32.mxu0 0.0
    %1001 = vmatmul.mubr.f32.gmra.mrb[0].mxu0 %v40
    %v1002 = vpop.f32.mrb[0].mxu0
    %v1003 = vadd.f32 0.0, %v1002
    %v1004 = vpop.f32.mrb[0].mxu0
    %v1005 = vadd.f32 0.0, %v1004
    %1006 = vmatprep.mubr.f32.mxu0 0.0
    %1007 = vmatmul.mubr.f32.gmra.mrb[0].mxu0 %v41
    %v1008 = vpop.f32.mrb[0].mxu0
    %v1009 = vadd.f32 0.0, %v1008
    %v1010 = vpop.f32.mrb[0].mxu0
    %v1011 = vadd.f32 0.0, %v1010
    %1012 = vdwg.mxu0
    %1013 = vmatprep.subr.mxu0 %v57
    %1014 = vmatpush1.msra.mxu0 %v56
    %1015 = vmatprep.subr.mxu0 %v84
    %1016 = vmatpush1.msra.mxu0 %v83
    %1017 = vmatprep.subr.mxu0 %v111
    %1018 = vmatpush1.msra.mxu0 %v110
    %1019 = vmatprep.subr.mxu0 %v138
    %1020 = vmatpush1.msra.mxu0 %v137
    %1021 = vmatprep.subr.mxu0 %v165
    %1022 = vmatpush1.msra.mxu0 %v164
    %1023 = vmatprep.subr.mxu0 %v192
    %1024 = vmatpush1.msra.mxu0 %v191
    %1025 = vmatprep.subr.mxu0 %v219
    %1026 = vmatpush1.msra.mxu0 %v218
    %1027 = vmatprep.subr.mxu0 %v246
    %1028 = vmatpush1.msra.mxu0 %v245
    %1029 = vmatprep.subr.mxu0 %v273
    %1030 = vmatpush1.msra.mxu0 %v272
    %1031 = vmatprep.subr.mxu0 %v300
    %1032 = vmatpush1.msra.mxu0 %v299
    %1033 = vmatprep.subr.mxu0 %v327
    %1034 = vmatpush1.msra.mxu0 %v326
    %1035 = vmatprep.subr.mxu0 %v354
    %1036 = vmatpush1.msra.mxu0 %v353
    %1037 = vmatprep.subr.mxu0 %v381
    %1038 = vmatpush1.msra.mxu0 %v380
    %1039 = vmatprep.subr.mxu0 %v408
    %1040 = vmatpush1.msra.mxu0 %v407
    %1041 = vmatprep.subr.mxu0 %v435
    %1042 = vmatpush1.msra.mxu0 %v434
    %1043 = vmatprep.subr.mxu0 %v462
    %1044 = vmatpush1.msra.mxu0 %v461
    %1045 = vmatprep.subr.mxu0 0.0
    %1046 = vmatpush1.msra.mxu0 0.0
    %1047 = vmatprep.subr.mxu0 0.0
    %1048 = vmatpush1.msra.mxu0 0.0
    %1049 = vmatprep.subr.mxu0 0.0
    %1050 = vmatpush1.msra.mxu0 0.0
    %1051 = vmatprep.subr.mxu0 0.0
    %1052 = vmatpush1.msra.mxu0 0.0
    %1053 = vmatprep.subr.mxu0 0.0
    %1054 = vmatpush1.msra.mxu0 0.0
    %1055 = vmatprep.subr.mxu0 0.0
    %1056 = vmatpush1.msra.mxu0 0.0
    %1057 = vmatprep.subr.mxu0 0.0
    %1058 = vmatpush1.msra.mxu0 0.0
    %1059 = vmatprep.subr.mxu0 0.0
    %1060 = vmatpush1.msra.mxu0 0.0
    %1061 = vmatprep.subr.mxu0 0.0
    %1062 = vmatpush1.msra.mxu0 0.0
    %1063 = vmatprep.subr.mxu0 0.0
    %1064 = vmatpush1.msra.mxu0 0.0
    %1065 = vmatprep.subr.mxu0 0.0
    %1066 = vmatpush1.msra.mxu0 0.0
    %1067 = vmatprep.subr.mxu0 0.0
    %1068 = vmatpush1.msra.mxu0 0.0
    %1069 = vmatprep.subr.mxu0 0.0
    %1070 = vmatpush1.msra.mxu0 0.0
    %1071 = vmatprep.subr.mxu0 0.0
    %1072 = vmatpush1.msra.mxu0 0.0
    %1073 = vmatprep.subr.mxu0 0.0
    %1074 = vmatpush1.msra.mxu0 0.0
    %1075 = vmatprep.subr.mxu0 0.0
    %1076 = vmatpush1.msra.mxu0 0.0
    %1077 = vmatprep.mubr.f32.mxu0 0.0
    %1078 = vmatmul.mubr.f32.gmra.mrb[0].mxu0 %v40
    %v1079 = vpop.f32.mrb[0].mxu0
    %v1080 = vadd.f32 0.0, %v1079
    %v1081 = vpop.f32.mrb[0].mxu0
    %v1082 = vadd.f32 0.0, %v1081
    %1083 = vmatprep.mubr.f32.mxu0 0.0
    %1084 = vmatmul.mubr.f32.gmra.mrb[0].mxu0 %v41
    %v1085 = vpop.f32.mrb[0].mxu0
    %v1086 = vadd.f32 0.0, %v1085
    %v1087 = vpop.f32.mrb[0].mxu0
    %v1088 = vadd.f32 0.0, %v1087
    %1089 = vdwg.mxu0
    %1090 = vmatprep.subr.mxu0 %v59
    %1091 = vmatpush1.msra.mxu0 %v58
    %1092 = vmatprep.subr.mxu0 %v86
    %1093 = vmatpush1.msra.mxu0 %v85
    %1094 = vmatprep.subr.mxu0 %v113
    %1095 = vmatpush1.msra.mxu0 %v112
    %1096 = vmatprep.subr.mxu0 %v140
    %1097 = vmatpush1.msra.mxu0 %v139
    %1098 = vmatprep.subr.mxu0 %v167
    %1099 = vmatpush1.msra.mxu0 %v166
    %1100 = vmatprep.subr.mxu0 %v194
    %1101 = vmatpush1.msra.mxu0 %v193
    %1102 = vmatprep.subr.mxu0 %v221
    %1103 = vmatpush1.msra.mxu0 %v220
    %1104 = vmatprep.subr.mxu0 %v248
    %1105 = vmatpush1.msra.mxu0 %v247
    %1106 = vmatprep.subr.mxu0 %v275
    %1107 = vmatpush1.msra.mxu0 %v274
    %1108 = vmatprep.subr.mxu0 %v302
    %1109 = vmatpush1.msra.mxu0 %v301
    %1110 = vmatprep.subr.mxu0 %v329
    %1111 = vmatpush1.msra.mxu0 %v328
    %1112 = vmatprep.subr.mxu0 %v356
    %1113 = vmatpush1.msra.mxu0 %v355
    %1114 = vmatprep.subr.mxu0 %v383
    %1115 = vmatpush1.msra.mxu0 %v382
    %1116 = vmatprep.subr.mxu0 %v410
    %1117 = vmatpush1.msra.mxu0 %v409
    %1118 = vmatprep.subr.mxu0 %v437
    %1119 = vmatpush1.msra.mxu0 %v436
    %1120 = vmatprep.subr.mxu0 %v464
    %1121 = vmatpush1.msra.mxu0 %v463
    %1122 = vmatprep.subr.mxu0 0.0
    %1123 = vmatpush1.msra.mxu0 0.0
    %1124 = vmatprep.subr.mxu0 0.0
    %1125 = vmatpush1.msra.mxu0 0.0
    %1126 = vmatprep.subr.mxu0 0.0
    %1127 = vmatpush1.msra.mxu0 0.0
    %1128 = vmatprep.subr.mxu0 0.0
    %1129 = vmatpush1.msra.mxu0 0.0
    %1130 = vmatprep.subr.mxu0 0.0
    %1131 = vmatpush1.msra.mxu0 0.0
    %1132 = vmatprep.subr.mxu0 0.0
    %1133 = vmatpush1.msra.mxu0 0.0
    %1134 = vmatprep.subr.mxu0 0.0
    %1135 = vmatpush1.msra.mxu0 0.0
    %1136 = vmatprep.subr.mxu0 0.0
    %1137 = vmatpush1.msra.mxu0 0.0
    %1138 = vmatprep.subr.mxu0 0.0
    %1139 = vmatpush1.msra.mxu0 0.0
    %1140 = vmatprep.subr.mxu0 0.0
    %1141 = vmatpush1.msra.mxu0 0.0
    %1142 = vmatprep.subr.mxu0 0.0
    %1143 = vmatpush1.msra.mxu0 0.0
    %1144 = vmatprep.subr.mxu0 0.0
    %1145 = vmatpush1.msra.mxu0 0.0
    %1146 = vmatprep.subr.mxu0 0.0
    %1147 = vmatpush1.msra.mxu0 0.0
    %1148 = vmatprep.subr.mxu0 0.0
    %1149 = vmatpush1.msra.mxu0 0.0
    %1150 = vmatprep.subr.mxu0 0.0
    %1151 = vmatpush1.msra.mxu0 0.0
    %1152 = vmatprep.subr.mxu0 0.0
    %1153 = vmatpush1.msra.mxu0 0.0
    %1154 = vmatprep.mubr.f32.mxu0 0.0
    %1155 = vmatmul.mubr.f32.gmra.mrb[0].mxu0 %v40
    %v1156 = vpop.f32.mrb[0].mxu0
    %v1157 = vadd.f32 0.0, %v1156
    %v1158 = vpop.f32.mrb[0].mxu0
    %v1159 = vadd.f32 0.0, %v1158
    %1160 = vmatprep.mubr.f32.mxu0 0.0
    %1161 = vmatmul.mubr.f32.gmra.mrb[0].mxu0 %v41
    %v1162 = vpop.f32.mrb[0].mxu0
    %v1163 = vadd.f32 0.0, %v1162
    %v1164 = vpop.f32.mrb[0].mxu0
    %v1165 = vadd.f32 0.0, %v1164
    %1166 = vdwg.mxu0
    %1167 = vmatprep.subr.mxu0 %v61
    %1168 = vmatpush1.msra.mxu0 %v60
    %1169 = vmatprep.subr.mxu0 %v88
    %1170 = vmatpush1.msra.mxu0 %v87
    %1171 = vmatprep.subr.mxu0 %v115
    %1172 = vmatpush1.msra.mxu0 %v114
    %1173 = vmatprep.subr.mxu0 %v142
    %1174 = vmatpush1.msra.mxu0 %v141
    %1175 = vmatprep.subr.mxu0 %v169
    %1176 = vmatpush1.msra.mxu0 %v168
    %1177 = vmatprep.subr.mxu0 %v196
    %1178 = vmatpush1.msra.mxu0 %v195
    %1179 = vmatprep.subr.mxu0 %v223
    %1180 = vmatpush1.msra.mxu0 %v222
    %1181 = vmatprep.subr.mxu0 %v250
    %1182 = vmatpush1.msra.mxu0 %v249
    %1183 = vmatprep.subr.mxu0 %v277
    %1184 = vmatpush1.msra.mxu0 %v276
    %1185 = vmatprep.subr.mxu0 %v304
    %1186 = vmatpush1.msra.mxu0 %v303
    %1187 = vmatprep.subr.mxu0 %v331
    %1188 = vmatpush1.msra.mxu0 %v330
    %1189 = vmatprep.subr.mxu0 %v358
    %1190 = vmatpush1.msra.mxu0 %v357
    %1191 = vmatprep.subr.mxu0 %v385
    %1192 = vmatpush1.msra.mxu0 %v384
    %1193 = vmatprep.subr.mxu0 %v412
    %1194 = vmatpush1.msra.mxu0 %v411
    %1195 = vmatprep.subr.mxu0 %v439
    %1196 = vmatpush1.msra.mxu0 %v438
    %1197 = vmatprep.subr.mxu0 %v466
    %1198 = vmatpush1.msra.mxu0 %v465
    %1199 = vmatprep.subr.mxu0 0.0
    %1200 = vmatpush1.msra.mxu0 0.0
    %1201 = vmatprep.subr.mxu0 0.0
    %1202 = vmatpush1.msra.mxu0 0.0
    %1203 = vmatprep.subr.mxu0 0.0
    %1204 = vmatpush1.msra.mxu0 0.0
    %1205 = vmatprep.subr.mxu0 0.0
    %1206 = vmatpush1.msra.mxu0 0.0
    %1207 = vmatprep.subr.mxu0 0.0
    %1208 = vmatpush1.msra.mxu0 0.0
    %1209 = vmatprep.subr.mxu0 0.0
    %1210 = vmatpush1.msra.mxu0 0.0
    %1211 = vmatprep.subr.mxu0 0.0
    %1212 = vmatpush1.msra.mxu0 0.0
    %1213 = vmatprep.subr.mxu0 0.0
    %1214 = vmatpush1.msra.mxu0 0.0
    %1215 = vmatprep.subr.mxu0 0.0
    %1216 = vmatpush1.msra.mxu0 0.0
    %1217 = vmatprep.subr.mxu0 0.0
    %1218 = vmatpush1.msra.mxu0 0.0
    %1219 = vmatprep.subr.mxu0 0.0
    %1220 = vmatpush1.msra.mxu0 0.0
    %1221 = vmatprep.subr.mxu0 0.0
    %1222 = vmatpush1.msra.mxu0 0.0
    %1223 = vmatprep.subr.mxu0 0.0
    %1224 = vmatpush1.msra.mxu0 0.0
    %1225 = vmatprep.subr.mxu0 0.0
    %1226 = vmatpush1.msra.mxu0 0.0
    %1227 = vmatprep.subr.mxu0 0.0
    %1228 = vmatpush1.msra.mxu0 0.0
    %1229 = vmatprep.subr.mxu0 0.0
    %1230 = vmatpush1.msra.mxu0 0.0
    %1231 = vmatprep.mubr.f32.mxu0 0.0
    %1232 = vmatmul.mubr.f32.gmra.mrb[0].mxu0 %v40
    %v1233 = vpop.f32.mrb[0].mxu0
    %v1234 = vadd.f32 0.0, %v1233
    %v1235 = vpop.f32.mrb[0].mxu0
    %v1236 = vadd.f32 0.0, %v1235
    %1237 = vmatprep.mubr.f32.mxu0 0.0
    %1238 = vmatmul.mubr.f32.gmra.mrb[0].mxu0 %v41
    %v1239 = vpop.f32.mrb[0].mxu0
    %v1240 = vadd.f32 0.0, %v1239
    %v1241 = vpop.f32.mrb[0].mxu0
    %v1242 = vadd.f32 0.0, %v1241
    %1243 = vdwg.mxu0
    %1244 = vmatprep.subr.mxu0 %v63
    %1245 = vmatpush1.msra.mxu0 %v62
    %1246 = vmatprep.subr.mxu0 %v90
    %1247 = vmatpush1.msra.mxu0 %v89
    %1248 = vmatprep.subr.mxu0 %v117
    %1249 = vmatpush1.msra.mxu0 %v116
    %1250 = vmatprep.subr.mxu0 %v144
    %1251 = vmatpush1.msra.mxu0 %v143
    %1252 = vmatprep.subr.mxu0 %v171
    %1253 = vmatpush1.msra.mxu0 %v170
    %1254 = vmatprep.subr.mxu0 %v198
    %1255 = vmatpush1.msra.mxu0 %v197
    %1256 = vmatprep.subr.mxu0 %v225
    %1257 = vmatpush1.msra.mxu0 %v224
    %1258 = vmatprep.subr.mxu0 %v252
    %1259 = vmatpush1.msra.mxu0 %v251
    %1260 = vmatprep.subr.mxu0 %v279
    %1261 = vmatpush1.msra.mxu0 %v278
    %1262 = vmatprep.subr.mxu0 %v306
    %1263 = vmatpush1.msra.mxu0 %v305
    %1264 = vmatprep.subr.mxu0 %v333
    %1265 = vmatpush1.msra.mxu0 %v332
    %1266 = vmatprep.subr.mxu0 %v360
    %1267 = vmatpush1.msra.mxu0 %v359
    %1268 = vmatprep.subr.mxu0 %v387
    %1269 = vmatpush1.msra.mxu0 %v386
    %1270 = vmatprep.subr.mxu0 %v414
    %1271 = vmatpush1.msra.mxu0 %v413
    %1272 = vmatprep.subr.mxu0 %v441
    %1273 = vmatpush1.msra.mxu0 %v440
    %1274 = vmatprep.subr.mxu0 %v468
    %1275 = vmatpush1.msra.mxu0 %v467
    %1276 = vmatprep.subr.mxu0 0.0
    %1277 = vmatpush1.msra.mxu0 0.0
    %1278 = vmatprep.subr.mxu0 0.0
    %1279 = vmatpush1.msra.mxu0 0.0
    %1280 = vmatprep.subr.mxu0 0.0
    %1281 = vmatpush1.msra.mxu0 0.0
    %1282 = vmatprep.subr.mxu0 0.0
    %1283 = vmatpush1.msra.mxu0 0.0
    %1284 = vmatprep.subr.mxu0 0.0
    %1285 = vmatpush1.msra.mxu0 0.0
    %1286 = vmatprep.subr.mxu0 0.0
    %1287 = vmatpush1.msra.mxu0 0.0
    %1288 = vmatprep.subr.mxu0 0.0
    %1289 = vmatpush1.msra.mxu0 0.0
    %1290 = vmatprep.subr.mxu0 0.0
    %1291 = vmatpush1.msra.mxu0 0.0
    %1292 = vmatprep.subr.mxu0 0.0
    %1293 = vmatpush1.msra.mxu0 0.0
    %1294 = vmatprep.subr.mxu0 0.0
    %1295 = vmatpush1.msra.mxu0 0.0
    %1296 = vmatprep.subr.mxu0 0.0
    %1297 = vmatpush1.msra.mxu0 0.0
    %1298 = vmatprep.subr.mxu0 0.0
    %1299 = vmatpush1.msra.mxu0 0.0
    %1300 = vmatprep.subr.mxu0 0.0
    %1301 = vmatpush1.msra.mxu0 0.0
    %1302 = vmatprep.subr.mxu0 0.0
    %1303 = vmatpush1.msra.mxu0 0.0
    %1304 = vmatprep.subr.mxu0 0.0
    %1305 = vmatpush1.msra.mxu0 0.0
    %1306 = vmatprep.subr.mxu0 0.0
    %1307 = vmatpush1.msra.mxu0 0.0
    %1308 = vmatprep.mubr.f32.mxu0 0.0
    %1309 = vmatmul.mubr.f32.gmra.mrb[0].mxu0 %v40
    %v1310 = vpop.f32.mrb[0].mxu0
    %v1311 = vadd.f32 0.0, %v1310
    %v1312 = vpop.f32.mrb[0].mxu0
    %v1313 = vadd.f32 0.0, %v1312
    %1314 = vmatprep.mubr.f32.mxu0 0.0
    %1315 = vmatmul.mubr.f32.gmra.mrb[0].mxu0 %v41
    %v1316 = vpop.f32.mrb[0].mxu0
    %v1317 = vadd.f32 0.0, %v1316
    %v1318 = vpop.f32.mrb[0].mxu0
    %v1319 = vadd.f32 0.0, %v1318
    %1320 = vdwg.mxu0
    %1321 = vmatprep.subr.mxu0 %v65
    %1322 = vmatpush1.msra.mxu0 %v64
    %1323 = vmatprep.subr.mxu0 %v92
    %1324 = vmatpush1.msra.mxu0 %v91
    %1325 = vmatprep.subr.mxu0 %v119
    %1326 = vmatpush1.msra.mxu0 %v118
    %1327 = vmatprep.subr.mxu0 %v146
    %1328 = vmatpush1.msra.mxu0 %v145
    %1329 = vmatprep.subr.mxu0 %v173
    %1330 = vmatpush1.msra.mxu0 %v172
    %1331 = vmatprep.subr.mxu0 %v200
    %1332 = vmatpush1.msra.mxu0 %v199
    %1333 = vmatprep.subr.mxu0 %v227
    %1334 = vmatpush1.msra.mxu0 %v226
    %1335 = vmatprep.subr.mxu0 %v254
    %1336 = vmatpush1.msra.mxu0 %v253
    %1337 = vmatprep.subr.mxu0 %v281
    %1338 = vmatpush1.msra.mxu0 %v280
    %1339 = vmatprep.subr.mxu0 %v308
    %1340 = vmatpush1.msra.mxu0 %v307
    %1341 = vmatprep.subr.mxu0 %v335
    %1342 = vmatpush1.msra.mxu0 %v334
    %1343 = vmatprep.subr.mxu0 %v362
    %1344 = vmatpush1.msra.mxu0 %v361
    %1345 = vmatprep.subr.mxu0 %v389
    %1346 = vmatpush1.msra.mxu0 %v388
    %1347 = vmatprep.subr.mxu0 %v416
    %1348 = vmatpush1.msra.mxu0 %v415
    %1349 = vmatprep.subr.mxu0 %v443
    %1350 = vmatpush1.msra.mxu0 %v442
    %1351 = vmatprep.subr.mxu0 %v470
    %1352 = vmatpush1.msra.mxu0 %v469
    %1353 = vmatprep.subr.mxu0 0.0
    %1354 = vmatpush1.msra.mxu0 0.0
    %1355 = vmatprep.subr.mxu0 0.0
    %1356 = vmatpush1.msra.mxu0 0.0
    %1357 = vmatprep.subr.mxu0 0.0
    %1358 = vmatpush1.msra.mxu0 0.0
    %1359 = vmatprep.subr.mxu0 0.0
    %1360 = vmatpush1.msra.mxu0 0.0
    %1361 = vmatprep.subr.mxu0 0.0
    %1362 = vmatpush1.msra.mxu0 0.0
    %1363 = vmatprep.subr.mxu0 0.0
    %1364 = vmatpush1.msra.mxu0 0.0
    %1365 = vmatprep.subr.mxu0 0.0
    %1366 = vmatpush1.msra.mxu0 0.0
    %1367 = vmatprep.subr.mxu0 0.0
    %1368 = vmatpush1.msra.mxu0 0.0
    %1369 = vmatprep.subr.mxu0 0.0
    %1370 = vmatpush1.msra.mxu0 0.0
    %1371 = vmatprep.subr.mxu0 0.0
    %1372 = vmatpush1.msra.mxu0 0.0
    %1373 = vmatprep.subr.mxu0 0.0
    %1374 = vmatpush1.msra.mxu0 0.0
    %1375 = vmatprep.subr.mxu0 0.0
    %1376 = vmatpush1.msra.mxu0 0.0
    %1377 = vmatprep.subr.mxu0 0.0
    %1378 = vmatpush1.msra.mxu0 0.0
    %1379 = vmatprep.subr.mxu0 0.0
    %1380 = vmatpush1.msra.mxu0 0.0
    %1381 = vmatprep.subr.mxu0 0.0
    %1382 = vmatpush1.msra.mxu0 0.0
    %1383 = vmatprep.subr.mxu0 0.0
    %1384 = vmatpush1.msra.mxu0 0.0
    %1385 = vmatprep.mubr.f32.mxu0 0.0
    %1386 = vmatmul.mubr.f32.gmra.mrb[0].mxu0 %v40
    %v1387 = vpop.f32.mrb[0].mxu0
    %v1388 = vadd.f32 0.0, %v1387
    %v1389 = vpop.f32.mrb[0].mxu0
    %v1390 = vadd.f32 0.0, %v1389
    %1391 = vmatprep.mubr.f32.mxu0 0.0
    %1392 = vmatmul.mubr.f32.gmra.mrb[0].mxu0 %v41
    %v1393 = vpop.f32.mrb[0].mxu0
    %v1394 = vadd.f32 0.0, %v1393
    %v1395 = vpop.f32.mrb[0].mxu0
    %v1396 = vadd.f32 0.0, %v1395
    %1397 = vdwg.mxu0
    %1398 = vmatprep.subr.mxu0 %v67
    %1399 = vmatpush1.msra.mxu0 %v66
    %1400 = vmatprep.subr.mxu0 %v94
    %1401 = vmatpush1.msra.mxu0 %v93
    %1402 = vmatprep.subr.mxu0 %v121
    %1403 = vmatpush1.msra.mxu0 %v120
    %1404 = vmatprep.subr.mxu0 %v148
    %1405 = vmatpush1.msra.mxu0 %v147
    %1406 = vmatprep.subr.mxu0 %v175
    %1407 = vmatpush1.msra.mxu0 %v174
    %1408 = vmatprep.subr.mxu0 %v202
    %1409 = vmatpush1.msra.mxu0 %v201
    %1410 = vmatprep.subr.mxu0 %v229
    %1411 = vmatpush1.msra.mxu0 %v228
    %1412 = vmatprep.subr.mxu0 %v256
    %1413 = vmatpush1.msra.mxu0 %v255
    %1414 = vmatprep.subr.mxu0 %v283
    %1415 = vmatpush1.msra.mxu0 %v282
    %1416 = vmatprep.subr.mxu0 %v310
    %1417 = vmatpush1.msra.mxu0 %v309
    %1418 = vmatprep.subr.mxu0 %v337
    %1419 = vmatpush1.msra.mxu0 %v336
    %1420 = vmatprep.subr.mxu0 %v364
    %1421 = vmatpush1.msra.mxu0 %v363
    %1422 = vmatprep.subr.mxu0 %v391
    %1423 = vmatpush1.msra.mxu0 %v390
    %1424 = vmatprep.subr.mxu0 %v418
    %1425 = vmatpush1.msra.mxu0 %v417
    %1426 = vmatprep.subr.mxu0 %v445
    %1427 = vmatpush1.msra.mxu0 %v444
    %1428 = vmatprep.subr.mxu0 %v472
    %1429 = vmatpush1.msra.mxu0 %v471
    %1430 = vmatprep.subr.mxu0 0.0
    %1431 = vmatpush1.msra.mxu0 0.0
    %1432 = vmatprep.subr.mxu0 0.0
    %1433 = vmatpush1.msra.mxu0 0.0
    %1434 = vmatprep.subr.mxu0 0.0
    %1435 = vmatpush1.msra.mxu0 0.0
    %1436 = vmatprep.subr.mxu0 0.0
    %1437 = vmatpush1.msra.mxu0 0.0
    %1438 = vmatprep.subr.mxu0 0.0
    %1439 = vmatpush1.msra.mxu0 0.0
    %1440 = vmatprep.subr.mxu0 0.0
    %1441 = vmatpush1.msra.mxu0 0.0
    %1442 = vmatprep.subr.mxu0 0.0
    %1443 = vmatpush1.msra.mxu0 0.0
    %1444 = vmatprep.subr.mxu0 0.0
    %1445 = vmatpush1.msra.mxu0 0.0
    %1446 = vmatprep.subr.mxu0 0.0
    %1447 = vmatpush1.msra.mxu0 0.0
    %1448 = vmatprep.subr.mxu0 0.0
    %1449 = vmatpush1.msra.mxu0 0.0
    %1450 = vmatprep.subr.mxu0 0.0
    %1451 = vmatpush1.msra.mxu0 0.0
    %1452 = vmatprep.subr.mxu0 0.0
    %1453 = vmatpush1.msra.mxu0 0.0
    %1454 = vmatprep.subr.mxu0 0.0
    %1455 = vmatpush1.msra.mxu0 0.0
    %1456 = vmatprep.subr.mxu0 0.0
    %1457 = vmatpush1.msra.mxu0 0.0
    %1458 = vmatprep.subr.mxu0 0.0
    %1459 = vmatpush1.msra.mxu0 0.0
    %1460 = vmatprep.subr.mxu0 0.0
    %1461 = vmatpush1.msra.mxu0 0.0
    %1462 = vmatprep.mubr.f32.mxu0 0.0
    %1463 = vmatmul.mubr.f32.gmra.mrb[0].mxu0 %v40
    %v1464 = vpop.f32.mrb[0].mxu0
    %v1465 = vadd.f32 0.0, %v1464
    %v1466 = vpop.f32.mrb[0].mxu0
    %v1467 = vadd.f32 0.0, %v1466
    %1468 = vmatprep.mubr.f32.mxu0 0.0
    %1469 = vmatmul.mubr.f32.gmra.mrb[0].mxu0 %v41
    %v1470 = vpop.f32.mrb[0].mxu0
    %v1471 = vadd.f32 0.0, %v1470
    %v1472 = vpop.f32.mrb[0].mxu0
    %v1473 = vadd.f32 0.0, %v1472
    %1474 = vdwg.mxu0
    %1475 = vmatprep.subr.mxu0 0.0
    %1476 = vmatpush1.msra.mxu0 %v68
    %1477 = vmatprep.subr.mxu0 0.0
    %1478 = vmatpush1.msra.mxu0 %v95
    %1479 = vmatprep.subr.mxu0 0.0
    %1480 = vmatpush1.msra.mxu0 %v122
    %1481 = vmatprep.subr.mxu0 0.0
    %1482 = vmatpush1.msra.mxu0 %v149
    %1483 = vmatprep.subr.mxu0 0.0
    %1484 = vmatpush1.msra.mxu0 %v176
    %1485 = vmatprep.subr.mxu0 0.0
    %1486 = vmatpush1.msra.mxu0 %v203
    %1487 = vmatprep.subr.mxu0 0.0
    %1488 = vmatpush1.msra.mxu0 %v230
    %1489 = vmatprep.subr.mxu0 0.0
    %1490 = vmatpush1.msra.mxu0 %v257
    %1491 = vmatprep.subr.mxu0 0.0
    %1492 = vmatpush1.msra.mxu0 %v284
    %1493 = vmatprep.subr.mxu0 0.0
    %1494 = vmatpush1.msra.mxu0 %v311
    %1495 = vmatprep.subr.mxu0 0.0
    %1496 = vmatpush1.msra.mxu0 %v338
    %1497 = vmatprep.subr.mxu0 0.0
    %1498 = vmatpush1.msra.mxu0 %v365
    %1499 = vmatprep.subr.mxu0 0.0
    %1500 = vmatpush1.msra.mxu0 %v392
    %1501 = vmatprep.subr.mxu0 0.0
    %1502 = vmatpush1.msra.mxu0 %v419
    %1503 = vmatprep.subr.mxu0 0.0
    %1504 = vmatpush1.msra.mxu0 %v446
    %1505 = vmatprep.subr.mxu0 0.0
    %1506 = vmatpush1.msra.mxu0 %v473
    %1507 = vmatprep.subr.mxu0 0.0
    %1508 = vmatpush1.msra.mxu0 0.0
    %1509 = vmatprep.subr.mxu0 0.0
    %1510 = vmatpush1.msra.mxu0 0.0
    %1511 = vmatprep.subr.mxu0 0.0
    %1512 = vmatpush1.msra.mxu0 0.0
    %1513 = vmatprep.subr.mxu0 0.0
    %1514 = vmatpush1.msra.mxu0 0.0
    %1515 = vmatprep.subr.mxu0 0.0
    %1516 = vmatpush1.msra.mxu0 0.0
    %1517 = vmatprep.subr.mxu0 0.0
    %1518 = vmatpush1.msra.mxu0 0.0
    %1519 = vmatprep.subr.mxu0 0.0
    %1520 = vmatpush1.msra.mxu0 0.0
    %1521 = vmatprep.subr.mxu0 0.0
    %1522 = vmatpush1.msra.mxu0 0.0
    %1523 = vmatprep.subr.mxu0 0.0
    %1524 = vmatpush1.msra.mxu0 0.0
    %1525 = vmatprep.subr.mxu0 0.0
    %1526 = vmatpush1.msra.mxu0 0.0
    %1527 = vmatprep.subr.mxu0 0.0
    %1528 = vmatpush1.msra.mxu0 0.0
    %1529 = vmatprep.subr.mxu0 0.0
    %1530 = vmatpush1.msra.mxu0 0.0
    %1531 = vmatprep.subr.mxu0 0.0
    %1532 = vmatpush1.msra.mxu0 0.0
    %1533 = vmatprep.subr.mxu0 0.0
    %1534 = vmatpush1.msra.mxu0 0.0
    %1535 = vmatprep.subr.mxu0 0.0
    %1536 = vmatpush1.msra.mxu0 0.0
    %1537 = vmatprep.subr.mxu0 0.0
    %1538 = vmatpush1.msra.mxu0 0.0
    %1539 = vmatprep.mubr.f32.mxu0 0.0
    %1540 = vmatmul.mubr.f32.gmra.mrb[0].mxu0 %v40
    %v1541 = vpop.f32.mrb[0].mxu0
    %v1542 = vadd.f32 0.0, %v1541
    %v1543 = vpop.f32.mrb[0].mxu0
    %1544 = vmatprep.mubr.f32.mxu0 0.0
    %1545 = vmatmul.mubr.f32.gmra.mrb[0].mxu0 %v41
    %v1546 = vpop.f32.mrb[0].mxu0
    %v1547 = vadd.f32 0.0, %v1546
    %v1548 = vpop.f32.mrb[0].mxu0
    %1549 = vdwg.mxu0
    %1550 = vst [vmem:[#allocation2] sm:$0xff] %v541
    %1551 = vst [vmem:[#allocation2 + $0x8] sm:$0xff] %v543
    %1552 = vst [vmem:[#allocation2 + $0x10] sm:$0xff] %v618
    %1553 = vst [vmem:[#allocation2 + $0x18] sm:$0xff] %v620
    %1554 = vst [vmem:[#allocation2 + $0x20] sm:$0xff] %v695
    %1555 = vst [vmem:[#allocation2 + $0x28] sm:$0xff] %v697
    %1556 = vst [vmem:[#allocation2 + $0x30] sm:$0xff] %v772
    %1557 = vst [vmem:[#allocation2 + $0x38] sm:$0xff] %v774
    %1558 = vst [vmem:[#allocation2 + $0x40] sm:$0xff] %v849
    %1559 = vst [vmem:[#allocation2 + $0x48] sm:$0xff] %v851
    %1560 = vst [vmem:[#allocation2 + $0x50] sm:$0xff] %v926
    %1561 = vst [vmem:[#allocation2 + $0x58] sm:$0xff] %v928
    %1562 = vst [vmem:[#allocation2 + $0x60] sm:$0xff] %v1003
    %1563 = vst [vmem:[#allocation2 + $0x68] sm:$0xff] %v1005
    %1564 = vst [vmem:[#allocation2 + $0x70] sm:$0xff] %v1080
    %1565 = vst [vmem:[#allocation2 + $0x78] sm:$0xff] %v1082
    %1566 = vst [vmem:[#allocation2 + $0x80] sm:$0xff] %v1157
    %1567 = vst [vmem:[#allocation2 + $0x88] sm:$0xff] %v1159
    %1568 = vst [vmem:[#allocation2 + $0x90] sm:$0xff] %v1234
    %1569 = vst [vmem:[#allocation2 + $0x98] sm:$0xff] %v1236
    %1570 = vst [vmem:[#allocation2 + $0xa0] sm:$0xff] %v1311
    %1571 = vst [vmem:[#allocation2 + $0xa8] sm:$0xff] %v1313
    %1572 = vst [vmem:[#allocation2 + $0xb0] sm:$0xff] %v1388
    %1573 = vst [vmem:[#allocation2 + $0xb8] sm:$0xff] %v1390
    %1574 = vst [vmem:[#allocation2 + $0xc0] sm:$0xff] %v1465
    %1575 = vst [vmem:[#allocation2 + $0xc8] sm:$0xff] %v1467
    %1576 = vst [vmem:[#allocation2 + $0xd0] sm:$0xff] %v1542
    %1577 = vst [vmem:[#allocation2 + $0xd8] sm:$0xff] %v547
    %1578 = vst [vmem:[#allocation2 + $0xe0] sm:$0xff] %v549
    %1579 = vst [vmem:[#allocation2 + $0xe8] sm:$0xff] %v624
    %1580 = vst [vmem:[#allocation2 + $0xf0] sm:$0xff] %v626
    %1581 = vst [vmem:[#allocation2 + $0xf8] sm:$0xff] %v701
    %1582 = vst [vmem:[#allocation2 + $0x100] sm:$0xff] %v703
    %1583 = vst [vmem:[#allocation2 + $0x108] sm:$0xff] %v778
    %1584 = vst [vmem:[#allocation2 + $0x110] sm:$0xff] %v780
    %1585 = vst [vmem:[#allocation2 + $0x118] sm:$0xff] %v855
    %1586 = vst [vmem:[#allocation2 + $0x120] sm:$0xff] %v857
    %1587 = vst [vmem:[#allocation2 + $0x128] sm:$0xff] %v932
    %1588 = vst [vmem:[#allocation2 + $0x130] sm:$0xff] %v934
    %1589 = vst [vmem:[#allocation2 + $0x138] sm:$0xff] %v1009
    %1590 = vst [vmem:[#allocation2 + $0x140] sm:$0xff] %v1011
    %1591 = vst [vmem:[#allocation2 + $0x148] sm:$0xff] %v1086
    %1592 = vst [vmem:[#allocation2 + $0x150] sm:$0xff] %v1088
    %1593 = vst [vmem:[#allocation2 + $0x158] sm:$0xff] %v1163
    %1594 = vst [vmem:[#allocation2 + $0x160] sm:$0xff] %v1165
    %1595 = vst [vmem:[#allocation2 + $0x168] sm:$0xff] %v1240
    %1596 = vst [vmem:[#allocation2 + $0x170] sm:$0xff] %v1242
    %1597 = vst [vmem:[#allocation2 + $0x178] sm:$0xff] %v1317
    %1598 = vst [vmem:[#allocation2 + $0x180] sm:$0xff] %v1319
    %1599 = vst [vmem:[#allocation2 + $0x188] sm:$0xff] %v1394
    %1600 = vst [vmem:[#allocation2 + $0x190] sm:$0xff] %v1396
    %1601 = vst [vmem:[#allocation2 + $0x198] sm:$0xff] %v1471
    %1602 = vst [vmem:[#allocation2 + $0x1a0] sm:$0xff] %v1473
    %1603 = vst [vmem:[#allocation2 + $0x1a8] sm:$0xff] %v1547
    %v1604 = vld [vmem:[#allocation5] sm:$0x1]
    %v1605 = vld [vmem:[#allocation2] sm:$0xff]
    %v1606 = vld [vmem:[#allocation2 + $0x48] sm:$0xff]
    %v1607 = vld [vmem:[#allocation2 + $0x90] sm:$0xff]
    %1608 = vmatprep.subr.mxu0 0.0
    %1609 = vmatpush1.xpose.msra.mxu0 %v1606
    %1610 = vmatprep.subr.mxu0 0.0
    %1611 = vmatpush1.xpose.msra.mxu0 0.0
    %1612 = vmatprep.subr.mxu0 0.0
    %1613 = vmatpush1.xpose.msra.mxu0 0.0
    %1614 = vmatprep.subr.mxu0 0.0
    %1615 = vmatpush1.xpose.msra.mxu0 0.0
    %1616 = vmatprep.subr.mxu0 0.0
    %1617 = vmatpush1.xpose.msra.mxu0 0.0
    %1618 = vmatprep.subr.mxu0 0.0
    %1619 = vmatpush1.xpose.msra.mxu0 0.0
    %1620 = vmatprep.subr.mxu0 0.0
    %1621 = vmatpush1.xpose.msra.mxu0 0.0
    %1622 = vmatprep.subr.mxu0 0.0
    %1623 = vmatpush1.xpose.msra.mxu0 0.0
    %1624 = vmatprep.subr.mxu0 0.0
    %1625 = vmatpush1.xpose.msra.mxu0 0.0
    %1626 = vmatprep.subr.mxu0 0.0
    %1627 = vmatpush1.xpose.msra.mxu0 0.0
    %1628 = vmatprep.subr.mxu0 0.0
    %1629 = vmatpush1.xpose.msra.mxu0 0.0
    %1630 = vmatprep.subr.mxu0 0.0
    %1631 = vmatpush1.xpose.msra.mxu0 0.0
    %1632 = vmatprep.subr.mxu0 0.0
    %1633 = vmatpush1.xpose.msra.mxu0 0.0
    %1634 = vmatprep.subr.mxu0 0.0
    %1635 = vmatpush1.xpose.msra.mxu0 0.0
    %1636 = vmatprep.subr.mxu0 0.0
    %1637 = vmatpush1.xpose.msra.mxu0 0.0
    %1638 = vmatprep.subr.mxu0 0.0
    %1639 = vmatpush1.xpose.msra.mxu0 0.0
    %1640 = vmatprep.subr.mxu0 0.0
    %1641 = vmatpush1.xpose.msra.mxu0 0.0
    %1642 = vmatprep.subr.mxu0 0.0
    %1643 = vmatpush1.xpose.msra.mxu0 0.0
    %1644 = vmatprep.subr.mxu0 0.0
    %1645 = vmatpush1.xpose.msra.mxu0 0.0
    %1646 = vmatprep.subr.mxu0 0.0
    %1647 = vmatpush1.xpose.msra.mxu0 0.0
    %1648 = vmatprep.subr.mxu0 0.0
    %1649 = vmatpush1.xpose.msra.mxu0 0.0
    %1650 = vmatprep.subr.mxu0 0.0
    %1651 = vmatpush1.xpose.msra.mxu0 0.0
    %1652 = vmatprep.subr.mxu0 0.0
    %1653 = vmatpush1.xpose.msra.mxu0 0.0
    %1654 = vmatprep.subr.mxu0 0.0
    %1655 = vmatpush1.xpose.msra.mxu0 0.0
    %1656 = vmatprep.subr.mxu0 0.0
    %1657 = vmatpush1.xpose.msra.mxu0 0.0
    %1658 = vmatprep.subr.mxu0 0.0
    %1659 = vmatpush1.xpose.msra.mxu0 0.0
    %1660 = vmatprep.subr.mxu0 0.0
    %1661 = vmatpush1.xpose.msra.mxu0 0.0
    %1662 = vmatprep.subr.mxu0 0.0
    %1663 = vmatpush1.xpose.msra.mxu0 0.0
    %1664 = vmatprep.subr.mxu0 0.0
    %1665 = vmatpush1.xpose.msra.mxu0 0.0
    %1666 = vmatprep.subr.mxu0 0.0
    %1667 = vmatpush1.xpose.msra.mxu0 0.0
    %1668 = vmatprep.subr.mxu0 0.0
    %1669 = vmatpush1.xpose.msra.mxu0 0.0
    %1670 = vmatprep.subr.mxu0 0.0
    %1671 = vmatpush1.xpose.msra.mxu0 0.0
    %1672 = vmatprep.mubr.f32.mxu0 0.0
    %1673 = vmatmul.mubr.f32.gmra.mrb[0].mxu0 %v1605
    %v1674 = vpop.f32.mrb[0].mxu0
    %v1675 = vadd.f32 0.0, %v1674
    %v1676 = vpop.f32.mrb[0].mxu0
    %1677 = vdwg.mxu0
    %vm1678 = vcmask 64512
    %v1679 = vsel %vm1678, %v1675, -inf
    %1680 = vmax.xlane.f32.xlu0 %v1679
    %v1681 = vpop.xlane.xlu0 %1680
    %v1682 = vsub.f32 %v1675, %v1681
    %v1683 = vmul.f32 %v1682, 1.442695
    %v1684 = vpow.pop %v1683
    %v1685 = vsel %vm1678, %v1684, 0.0
    %1686 = vadd.xlane.f32.xlu0 %v1685
    %v1687 = vpop.xlane.xlu0 %1686
    %v1688 = vrcp.pop %v1687
    %v1689 = vmul.f32 %v1684, %v1688
    %v1690 = vld [vmem:[#allocation2 + $0x8] sm:$0xff]
    %v1691 = vld [vmem:[#allocation2 + $0x50] sm:$0xff]
    %v1692 = vld [vmem:[#allocation2 + $0x98] sm:$0xff]
    %1693 = vmatprep.subr.mxu0 0.0
    %1694 = vmatpush1.xpose.msra.mxu0 %v1691
    %1695 = vmatprep.subr.mxu0 0.0
    %1696 = vmatpush1.xpose.msra.mxu0 0.0
    %1697 = vmatprep.subr.mxu0 0.0
    %1698 = vmatpush1.xpose.msra.mxu0 0.0
    %1699 = vmatprep.subr.mxu0 0.0
    %1700 = vmatpush1.xpose.msra.mxu0 0.0
    %1701 = vmatprep.subr.mxu0 0.0
    %1702 = vmatpush1.xpose.msra.mxu0 0.0
    %1703 = vmatprep.subr.mxu0 0.0
    %1704 = vmatpush1.xpose.msra.mxu0 0.0
    %1705 = vmatprep.subr.mxu0 0.0
    %1706 = vmatpush1.xpose.msra.mxu0 0.0
    %1707 = vmatprep.subr.mxu0 0.0
    %1708 = vmatpush1.xpose.msra.mxu0 0.0
    %1709 = vmatprep.subr.mxu0 0.0
    %1710 = vmatpush1.xpose.msra.mxu0 0.0
    %1711 = vmatprep.subr.mxu0 0.0
    %1712 = vmatpush1.xpose.msra.mxu0 0.0
    %1713 = vmatprep.subr.mxu0 0.0
    %1714 = vmatpush1.xpose.msra.mxu0 0.0
    %1715 = vmatprep.subr.mxu0 0.0
    %1716 = vmatpush1.xpose.msra.mxu0 0.0
    %1717 = vmatprep.subr.mxu0 0.0
    %1718 = vmatpush1.xpose.msra.mxu0 0.0
    %1719 = vmatprep.subr.mxu0 0.0
    %1720 = vmatpush1.xpose.msra.mxu0 0.0
    %1721 = vmatprep.subr.mxu0 0.0
    %1722 = vmatpush1.xpose.msra.mxu0 0.0
    %1723 = vmatprep.subr.mxu0 0.0
    %1724 = vmatpush1.xpose.msra.mxu0 0.0
    %1725 = vmatprep.subr.mxu0 0.0
    %1726 = vmatpush1.xpose.msra.mxu0 0.0
    %1727 = vmatprep.subr.mxu0 0.0
    %1728 = vmatpush1.xpose.msra.mxu0 0.0
    %1729 = vmatprep.subr.mxu0 0.0
    %1730 = vmatpush1.xpose.msra.mxu0 0.0
    %1731 = vmatprep.subr.mxu0 0.0
    %1732 = vmatpush1.xpose.msra.mxu0 0.0
    %1733 = vmatprep.subr.mxu0 0.0
    %1734 = vmatpush1.xpose.msra.mxu0 0.0
    %1735 = vmatprep.subr.mxu0 0.0
    %1736 = vmatpush1.xpose.msra.mxu0 0.0
    %1737 = vmatprep.subr.mxu0 0.0
    %1738 = vmatpush1.xpose.msra.mxu0 0.0
    %1739 = vmatprep.subr.mxu0 0.0
    %1740 = vmatpush1.xpose.msra.mxu0 0.0
    %1741 = vmatprep.subr.mxu0 0.0
    %1742 = vmatpush1.xpose.msra.mxu0 0.0
    %1743 = vmatprep.subr.mxu0 0.0
    %1744 = vmatpush1.xpose.msra.mxu0 0.0
    %1745 = vmatprep.subr.mxu0 0.0
    %1746 = vmatpush1.xpose.msra.mxu0 0.0
    %1747 = vmatprep.subr.mxu0 0.0
    %1748 = vmatpush1.xpose.msra.mxu0 0.0
    %1749 = vmatprep.subr.mxu0 0.0
    %1750 = vmatpush1.xpose.msra.mxu0 0.0
    %1751 = vmatprep.subr.mxu0 0.0
    %1752 = vmatpush1.xpose.msra.mxu0 0.0
    %1753 = vmatprep.subr.mxu0 0.0
    %1754 = vmatpush1.xpose.msra.mxu0 0.0
    %1755 = vmatprep.subr.mxu0 0.0
    %1756 = vmatpush1.xpose.msra.mxu0 0.0
    %1757 = vmatprep.mubr.f32.mxu0 0.0
    %1758 = vmatmul.mubr.f32.gmra.mrb[0].mxu0 %v1690
    %v1759 = vpop.f32.mrb[0].mxu0
    %v1760 = vadd.f32 0.0, %v1759
    %v1761 = vpop.f32.mrb[0].mxu0
    %1762 = vdwg.mxu0
    %v1763 = vsel %vm1678, %v1760, -inf
    %1764 = vmax.xlane.f32.xlu0 %v1763
    %v1765 = vpop.xlane.xlu0 %1764
    %v1766 = vsub.f32 %v1760, %v1765
    %v1767 = vmul.f32 %v1766, 1.442695
    %v1768 = vpow.pop %v1767
    %v1769 = vsel %vm1678, %v1768, 0.0
    %1770 = vadd.xlane.f32.xlu0 %v1769
    %v1771 = vpop.xlane.xlu0 %1770
    %v1772 = vrcp.pop %v1771
    %v1773 = vmul.f32 %v1768, %v1772
    %v1775 = vsel %vm1678, %v1773, 0
    %1777 = vmatprep.subr.mxu0 0.0
    %1778 = vmatpush1.msra.mxu0 %v1692
    %1779 = vmatprep.subr.mxu0 0.0
    %1780 = vmatpush1.msra.mxu0 0.0
    %1781 = vmatprep.subr.mxu0 0.0
    %1782 = vmatpush1.msra.mxu0 0.0
    %1783 = vmatprep.subr.mxu0 0.0
    %1784 = vmatpush1.msra.mxu0 0.0
    %1785 = vmatprep.subr.mxu0 0.0
    %1786 = vmatpush1.msra.mxu0 0.0
    %1787 = vmatprep.subr.mxu0 0.0
    %1788 = vmatpush1.msra.mxu0 0.0
    %1789 = vmatprep.subr.mxu0 0.0
    %1790 = vmatpush1.msra.mxu0 0.0
    %1791 = vmatprep.subr.mxu0 0.0
    %1792 = vmatpush1.msra.mxu0 0.0
    %1793 = vmatprep.subr.mxu0 0.0
    %1794 = vmatpush1.msra.mxu0 0.0
    %1795 = vmatprep.subr.mxu0 0.0
    %1796 = vmatpush1.msra.mxu0 0.0
    %1797 = vmatprep.subr.mxu0 0.0
    %1798 = vmatpush1.msra.mxu0 0.0
    %1799 = vmatprep.subr.mxu0 0.0
    %1800 = vmatpush1.msra.mxu0 0.0
    %1801 = vmatprep.subr.mxu0 0.0
    %1802 = vmatpush1.msra.mxu0 0.0
    %1803 = vmatprep.subr.mxu0 0.0
    %1804 = vmatpush1.msra.mxu0 0.0
    %1805 = vmatprep.subr.mxu0 0.0
    %1806 = vmatpush1.msra.mxu0 0.0
    %1807 = vmatprep.subr.mxu0 0.0
    %1808 = vmatpush1.msra.mxu0 0.0
    %1809 = vmatprep.subr.mxu0 0.0
    %1810 = vmatpush1.msra.mxu0 0.0
    %1811 = vmatprep.subr.mxu0 0.0
    %1812 = vmatpush1.msra.mxu0 0.0
    %1813 = vmatprep.subr.mxu0 0.0
    %1814 = vmatpush1.msra.mxu0 0.0
    %1815 = vmatprep.subr.mxu0 0.0
    %1816 = vmatpush1.msra.mxu0 0.0
    %1817 = vmatprep.subr.mxu0 0.0
    %1818 = vmatpush1.msra.mxu0 0.0
    %1819 = vmatprep.subr.mxu0 0.0
    %1820 = vmatpush1.msra.mxu0 0.0
    %1821 = vmatprep.subr.mxu0 0.0
    %1822 = vmatpush1.msra.mxu0 0.0
    %1823 = vmatprep.subr.mxu0 0.0
    %1824 = vmatpush1.msra.mxu0 0.0
    %1825 = vmatprep.subr.mxu0 0.0
    %1826 = vmatpush1.msra.mxu0 0.0
    %1827 = vmatprep.subr.mxu0 0.0
    %1828 = vmatpush1.msra.mxu0 0.0
    %1829 = vmatprep.subr.mxu0 0.0
    %1830 = vmatpush1.msra.mxu0 0.0
    %1831 = vmatprep.subr.mxu0 0.0
    %1832 = vmatpush1.msra.mxu0 0.0
    %1833 = vmatprep.subr.mxu0 0.0
    %1834 = vmatpush1.msra.mxu0 0.0
    %1835 = vmatprep.subr.mxu0 0.0
    %1836 = vmatpush1.msra.mxu0 0.0
    %1837 = vmatprep.subr.mxu0 0.0
    %1838 = vmatpush1.msra.mxu0 0.0
    %1839 = vmatprep.subr.mxu0 0.0
    %1840 = vmatpush1.msra.mxu0 0.0
    %1841 = vmatprep.mubr.f32.mxu0 0.0
    %1842 = vmatmul.mubr.f32.gmra.mrb[0].mxu0 %v1775
    %v1843 = vpop.f32.mrb[0].mxu0
    %v1844 = vadd.f32 0.0, %v1843
    %v1845 = vpop.f32.mrb[0].mxu0
    %1846 = vdwg.mxu0
    %v1848 = vsel %vm1678, %v1689, 0
    %1850 = vmatprep.subr.mxu0 0.0
    %1851 = vmatpush1.msra.mxu0 %v1607
    %1852 = vmatprep.subr.mxu0 0.0
    %1853 = vmatpush1.msra.mxu0 0.0
    %1854 = vmatprep.subr.mxu0 0.0
    %1855 = vmatpush1.msra.mxu0 0.0
    %1856 = vmatprep.subr.mxu0 0.0
    %1857 = vmatpush1.msra.mxu0 0.0
    %1858 = vmatprep.subr.mxu0 0.0
    %1859 = vmatpush1.msra.mxu0 0.0
    %1860 = vmatprep.subr.mxu0 0.0
    %1861 = vmatpush1.msra.mxu0 0.0
    %1862 = vmatprep.subr.mxu0 0.0
    %1863 = vmatpush1.msra.mxu0 0.0
    %1864 = vmatprep.subr.mxu0 0.0
    %1865 = vmatpush1.msra.mxu0 0.0
    %1866 = vmatprep.subr.mxu0 0.0
    %1867 = vmatpush1.msra.mxu0 0.0
    %1868 = vmatprep.subr.mxu0 0.0
    %1869 = vmatpush1.msra.mxu0 0.0
    %1870 = vmatprep.subr.mxu0 0.0
    %1871 = vmatpush1.msra.mxu0 0.0
    %1872 = vmatprep.subr.mxu0 0.0
    %1873 = vmatpush1.msra.mxu0 0.0
    %1874 = vmatprep.subr.mxu0 0.0
    %1875 = vmatpush1.msra.mxu0 0.0
    %1876 = vmatprep.subr.mxu0 0.0
    %1877 = vmatpush1.msra.mxu0 0.0
    %1878 = vmatprep.subr.mxu0 0.0
    %1879 = vmatpush1.msra.mxu0 0.0
    %1880 = vmatprep.subr.mxu0 0.0
    %1881 = vmatpush1.msra.mxu0 0.0
    %1882 = vmatprep.subr.mxu0 0.0
    %1883 = vmatpush1.msra.mxu0 0.0
    %1884 = vmatprep.subr.mxu0 0.0
    %1885 = vmatpush1.msra.mxu0 0.0
    %1886 = vmatprep.subr.mxu0 0.0
    %1887 = vmatpush1.msra.mxu0 0.0
    %1888 = vmatprep.subr.mxu0 0.0
    %1889 = vmatpush1.msra.mxu0 0.0
    %1890 = vmatprep.subr.mxu0 0.0
    %1891 = vmatpush1.msra.mxu0 0.0
    %1892 = vmatprep.subr.mxu0 0.0
    %1893 = vmatpush1.msra.mxu0 0.0
    %1894 = vmatprep.subr.mxu0 0.0
    %1895 = vmatpush1.msra.mxu0 0.0
    %1896 = vmatprep.subr.mxu0 0.0
    %1897 = vmatpush1.msra.mxu0 0.0
    %1898 = vmatprep.subr.mxu0 0.0
    %1899 = vmatpush1.msra.mxu0 0.0
    %1900 = vmatprep.subr.mxu0 0.0
    %1901 = vmatpush1.msra.mxu0 0.0
    %1902 = vmatprep.subr.mxu0 0.0
    %1903 = vmatpush1.msra.mxu0 0.0
    %1904 = vmatprep.subr.mxu0 0.0
    %1905 = vmatpush1.msra.mxu0 0.0
    %1906 = vmatprep.subr.mxu0 0.0
    %1907 = vmatpush1.msra.mxu0 0.0
    %1908 = vmatprep.subr.mxu0 0.0
    %1909 = vmatpush1.msra.mxu0 0.0
    %1910 = vmatprep.subr.mxu0 0.0
    %1911 = vmatpush1.msra.mxu0 0.0
    %1912 = vmatprep.subr.mxu0 0.0
    %1913 = vmatpush1.msra.mxu0 0.0
    %1914 = vmatprep.mubr.f32.mxu0 0.0
    %1915 = vmatmul.mubr.f32.gmra.mrb[0].mxu0 %v1848
    %v1916 = vpop.f32.mrb[0].mxu0
    %v1917 = vadd.f32 %v1844, %v1916
    %v1918 = vpop.f32.mrb[0].mxu0
    %1919 = vdwg.mxu0
    %v1920 = vld [vmem:[#allocation2 + $0x10] sm:$0xff]
    %v1921 = vld [vmem:[#allocation2 + $0x58] sm:$0xff]
    %v1922 = vld [vmem:[#allocation2 + $0xa0] sm:$0xff]
    %1923 = vmatprep.subr.mxu0 0.0
    %1924 = vmatpush1.xpose.msra.mxu0 %v1921
    %1925 = vmatprep.subr.mxu0 0.0
    %1926 = vmatpush1.xpose.msra.mxu0 0.0
    %1927 = vmatprep.subr.mxu0 0.0
    %1928 = vmatpush1.xpose.msra.mxu0 0.0
    %1929 = vmatprep.subr.mxu0 0.0
    %1930 = vmatpush1.xpose.msra.mxu0 0.0
    %1931 = vmatprep.subr.mxu0 0.0
    %1932 = vmatpush1.xpose.msra.mxu0 0.0
    %1933 = vmatprep.subr.mxu0 0.0
    %1934 = vmatpush1.xpose.msra.mxu0 0.0
    %1935 = vmatprep.subr.mxu0 0.0
    %1936 = vmatpush1.xpose.msra.mxu0 0.0
    %1937 = vmatprep.subr.mxu0 0.0
    %1938 = vmatpush1.xpose.msra.mxu0 0.0
    %1939 = vmatprep.subr.mxu0 0.0
    %1940 = vmatpush1.xpose.msra.mxu0 0.0
    %1941 = vmatprep.subr.mxu0 0.0
    %1942 = vmatpush1.xpose.msra.mxu0 0.0
    %1943 = vmatprep.subr.mxu0 0.0
    %1944 = vmatpush1.xpose.msra.mxu0 0.0
    %1945 = vmatprep.subr.mxu0 0.0
    %1946 = vmatpush1.xpose.msra.mxu0 0.0
    %1947 = vmatprep.subr.mxu0 0.0
    %1948 = vmatpush1.xpose.msra.mxu0 0.0
    %1949 = vmatprep.subr.mxu0 0.0
    %1950 = vmatpush1.xpose.msra.mxu0 0.0
    %1951 = vmatprep.subr.mxu0 0.0
    %1952 = vmatpush1.xpose.msra.mxu0 0.0
    %1953 = vmatprep.subr.mxu0 0.0
    %1954 = vmatpush1.xpose.msra.mxu0 0.0
    %1955 = vmatprep.subr.mxu0 0.0
    %1956 = vmatpush1.xpose.msra.mxu0 0.0
    %1957 = vmatprep.subr.mxu0 0.0
    %1958 = vmatpush1.xpose.msra.mxu0 0.0
    %1959 = vmatprep.subr.mxu0 0.0
    %1960 = vmatpush1.xpose.msra.mxu0 0.0
    %1961 = vmatprep.subr.mxu0 0.0
    %1962 = vmatpush1.xpose.msra.mxu0 0.0
    %1963 = vmatprep.subr.mxu0 0.0
    %1964 = vmatpush1.xpose.msra.mxu0 0.0
    %1965 = vmatprep.subr.mxu0 0.0
    %1966 = vmatpush1.xpose.msra.mxu0 0.0
    %1967 = vmatprep.subr.mxu0 0.0
    %1968 = vmatpush1.xpose.msra.mxu0 0.0
    %1969 = vmatprep.subr.mxu0 0.0
    %1970 = vmatpush1.xpose.msra.mxu0 0.0
    %1971 = vmatprep.subr.mxu0 0.0
    %1972 = vmatpush1.xpose.msra.mxu0 0.0
    %1973 = vmatprep.subr.mxu0 0.0
    %1974 = vmatpush1.xpose.msra.mxu0 0.0
    %1975 = vmatprep.subr.mxu0 0.0
    %1976 = vmatpush1.xpose.msra.mxu0 0.0
    %1977 = vmatprep.subr.mxu0 0.0
    %1978 = vmatpush1.xpose.msra.mxu0 0.0
    %1979 = vmatprep.subr.mxu0 0.0
    %1980 = vmatpush1.xpose.msra.mxu0 0.0
    %1981 = vmatprep.subr.mxu0 0.0
    %1982 = vmatpush1.xpose.msra.mxu0 0.0
    %1983 = vmatprep.subr.mxu0 0.0
    %1984 = vmatpush1.xpose.msra.mxu0 0.0
    %1985 = vmatprep.subr.mxu0 0.0
    %1986 = vmatpush1.xpose.msra.mxu0 0.0
    %1987 = vmatprep.mubr.f32.mxu0 0.0
    %1988 = vmatmul.mubr.f32.gmra.mrb[0].mxu0 %v1920
    %v1989 = vpop.f32.mrb[0].mxu0
    %v1990 = vadd.f32 0.0, %v1989
    %v1991 = vpop.f32.mrb[0].mxu0
    %1992 = vdwg.mxu0
    %v1993 = vsel %vm1678, %v1990, -inf
    %1994 = vmax.xlane.f32.xlu0 %v1993
    %v1995 = vpop.xlane.xlu0 %1994
    %v1996 = vsub.f32 %v1990, %v1995
    %v1997 = vmul.f32 %v1996, 1.442695
    %v1998 = vpow.pop %v1997
    %v1999 = vsel %vm1678, %v1998, 0.0
    %2000 = vadd.xlane.f32.xlu0 %v1999
    %v2001 = vpop.xlane.xlu0 %2000
    %v2002 = vrcp.pop %v2001
    %v2003 = vmul.f32 %v1998, %v2002
    %v2005 = vsel %vm1678, %v2003, 0
    %2007 = vmatprep.subr.mxu0 0.0
    %2008 = vmatpush1.msra.mxu0 %v1922
    %2009 = vmatprep.subr.mxu0 0.0
    %2010 = vmatpush1.msra.mxu0 0.0
    %2011 = vmatprep.subr.mxu0 0.0
    %2012 = vmatpush1.msra.mxu0 0.0
    %2013 = vmatprep.subr.mxu0 0.0
    %2014 = vmatpush1.msra.mxu0 0.0
    %2015 = vmatprep.subr.mxu0 0.0
    %2016 = vmatpush1.msra.mxu0 0.0
    %2017 = vmatprep.subr.mxu0 0.0
    %2018 = vmatpush1.msra.mxu0 0.0
    %2019 = vmatprep.subr.mxu0 0.0
    %2020 = vmatpush1.msra.mxu0 0.0
    %2021 = vmatprep.subr.mxu0 0.0
    %2022 = vmatpush1.msra.mxu0 0.0
    %2023 = vmatprep.subr.mxu0 0.0
    %2024 = vmatpush1.msra.mxu0 0.0
    %2025 = vmatprep.subr.mxu0 0.0
    %2026 = vmatpush1.msra.mxu0 0.0
    %2027 = vmatprep.subr.mxu0 0.0
    %2028 = vmatpush1.msra.mxu0 0.0
    %2029 = vmatprep.subr.mxu0 0.0
    %2030 = vmatpush1.msra.mxu0 0.0
    %2031 = vmatprep.subr.mxu0 0.0
    %2032 = vmatpush1.msra.mxu0 0.0
    %2033 = vmatprep.subr.mxu0 0.0
    %2034 = vmatpush1.msra.mxu0 0.0
    %2035 = vmatprep.subr.mxu0 0.0
    %2036 = vmatpush1.msra.mxu0 0.0
    %2037 = vmatprep.subr.mxu0 0.0
    %2038 = vmatpush1.msra.mxu0 0.0
    %2039 = vmatprep.subr.mxu0 0.0
    %2040 = vmatpush1.msra.mxu0 0.0
    %2041 = vmatprep.subr.mxu0 0.0
    %2042 = vmatpush1.msra.mxu0 0.0
    %2043 = vmatprep.subr.mxu0 0.0
    %2044 = vmatpush1.msra.mxu0 0.0
    %2045 = vmatprep.subr.mxu0 0.0
    %2046 = vmatpush1.msra.mxu0 0.0
    %2047 = vmatprep.subr.mxu0 0.0
    %2048 = vmatpush1.msra.mxu0 0.0
    %2049 = vmatprep.subr.mxu0 0.0
    %2050 = vmatpush1.msra.mxu0 0.0
    %2051 = vmatprep.subr.mxu0 0.0
    %2052 = vmatpush1.msra.mxu0 0.0
    %2053 = vmatprep.subr.mxu0 0.0
    %2054 = vmatpush1.msra.mxu0 0.0
    %2055 = vmatprep.subr.mxu0 0.0
    %2056 = vmatpush1.msra.mxu0 0.0
    %2057 = vmatprep.subr.mxu0 0.0
    %2058 = vmatpush1.msra.mxu0 0.0
    %2059 = vmatprep.subr.mxu0 0.0
    %2060 = vmatpush1.msra.mxu0 0.0
    %2061 = vmatprep.subr.mxu0 0.0
    %2062 = vmatpush1.msra.mxu0 0.0
    %2063 = vmatprep.subr.mxu0 0.0
    %2064 = vmatpush1.msra.mxu0 0.0
    %2065 = vmatprep.subr.mxu0 0.0
    %2066 = vmatpush1.msra.mxu0 0.0
    %2067 = vmatprep.subr.mxu0 0.0
    %2068 = vmatpush1.msra.mxu0 0.0
    %2069 = vmatprep.subr.mxu0 0.0
    %2070 = vmatpush1.msra.mxu0 0.0
    %2071 = vmatprep.mubr.f32.mxu0 0.0
    %2072 = vmatmul.mubr.f32.gmra.mrb[0].mxu0 %v2005
    %v2073 = vpop.f32.mrb[0].mxu0
    %v2074 = vadd.f32 0.0, %v2073
    %v2075 = vpop.f32.mrb[0].mxu0
    %2076 = vdwg.mxu0
    %v2077 = vadd.f32 %v1917, %v2074
    %v2078 = vld [vmem:[#allocation2 + $0x18] sm:$0xff]
    %v2079 = vld [vmem:[#allocation2 + $0x60] sm:$0xff]
    %v2080 = vld [vmem:[#allocation2 + $0xa8] sm:$0xff]
    %2081 = vmatprep.subr.mxu0 0.0
    %2082 = vmatpush1.xpose.msra.mxu0 %v2079
    %2083 = vmatprep.subr.mxu0 0.0
    %2084 = vmatpush1.xpose.msra.mxu0 0.0
    %2085 = vmatprep.subr.mxu0 0.0
    %2086 = vmatpush1.xpose.msra.mxu0 0.0
    %2087 = vmatprep.subr.mxu0 0.0
    %2088 = vmatpush1.xpose.msra.mxu0 0.0
    %2089 = vmatprep.subr.mxu0 0.0
    %2090 = vmatpush1.xpose.msra.mxu0 0.0
    %2091 = vmatprep.subr.mxu0 0.0
    %2092 = vmatpush1.xpose.msra.mxu0 0.0
    %2093 = vmatprep.subr.mxu0 0.0
    %2094 = vmatpush1.xpose.msra.mxu0 0.0
    %2095 = vmatprep.subr.mxu0 0.0
    %2096 = vmatpush1.xpose.msra.mxu0 0.0
    %2097 = vmatprep.subr.mxu0 0.0
    %2098 = vmatpush1.xpose.msra.mxu0 0.0
    %2099 = vmatprep.subr.mxu0 0.0
    %2100 = vmatpush1.xpose.msra.mxu0 0.0
    %2101 = vmatprep.subr.mxu0 0.0
    %2102 = vmatpush1.xpose.msra.mxu0 0.0
    %2103 = vmatprep.subr.mxu0 0.0
    %2104 = vmatpush1.xpose.msra.mxu0 0.0
    %2105 = vmatprep.subr.mxu0 0.0
    %2106 = vmatpush1.xpose.msra.mxu0 0.0
    %2107 = vmatprep.subr.mxu0 0.0
    %2108 = vmatpush1.xpose.msra.mxu0 0.0
    %2109 = vmatprep.subr.mxu0 0.0
    %2110 = vmatpush1.xpose.msra.mxu0 0.0
    %2111 = vmatprep.subr.mxu0 0.0
    %2112 = vmatpush1.xpose.msra.mxu0 0.0
    %2113 = vmatprep.subr.mxu0 0.0
    %2114 = vmatpush1.xpose.msra.mxu0 0.0
    %2115 = vmatprep.subr.mxu0 0.0
    %2116 = vmatpush1.xpose.msra.mxu0 0.0
    %2117 = vmatprep.subr.mxu0 0.0
    %2118 = vmatpush1.xpose.msra.mxu0 0.0
    %2119 = vmatprep.subr.mxu0 0.0
    %2120 = vmatpush1.xpose.msra.mxu0 0.0
    %2121 = vmatprep.subr.mxu0 0.0
    %2122 = vmatpush1.xpose.msra.mxu0 0.0
    %2123 = vmatprep.subr.mxu0 0.0
    %2124 = vmatpush1.xpose.msra.mxu0 0.0
    %2125 = vmatprep.subr.mxu0 0.0
    %2126 = vmatpush1.xpose.msra.mxu0 0.0
    %2127 = vmatprep.subr.mxu0 0.0
    %2128 = vmatpush1.xpose.msra.mxu0 0.0
    %2129 = vmatprep.subr.mxu0 0.0
    %2130 = vmatpush1.xpose.msra.mxu0 0.0
    %2131 = vmatprep.subr.mxu0 0.0
    %2132 = vmatpush1.xpose.msra.mxu0 0.0
    %2133 = vmatprep.subr.mxu0 0.0
    %2134 = vmatpush1.xpose.msra.mxu0 0.0
    %2135 = vmatprep.subr.mxu0 0.0
    %2136 = vmatpush1.xpose.msra.mxu0 0.0
    %2137 = vmatprep.subr.mxu0 0.0
    %2138 = vmatpush1.xpose.msra.mxu0 0.0
    %2139 = vmatprep.subr.mxu0 0.0
    %2140 = vmatpush1.xpose.msra.mxu0 0.0
    %2141 = vmatprep.subr.mxu0 0.0
    %2142 = vmatpush1.xpose.msra.mxu0 0.0
    %2143 = vmatprep.subr.mxu0 0.0
    %2144 = vmatpush1.xpose.msra.mxu0 0.0
    %2145 = vmatprep.mubr.f32.mxu0 0.0
    %2146 = vmatmul.mubr.f32.gmra.mrb[0].mxu0 %v2078
    %v2147 = vpop.f32.mrb[0].mxu0
    %v2148 = vadd.f32 0.0, %v2147
    %v2149 = vpop.f32.mrb[0].mxu0
    %2150 = vdwg.mxu0
    %v2151 = vsel %vm1678, %v2148, -inf
    %2152 = vmax.xlane.f32.xlu0 %v2151
    %v2153 = vpop.xlane.xlu0 %2152
    %v2154 = vsub.f32 %v2148, %v2153
    %v2155 = vmul.f32 %v2154, 1.442695
    %v2156 = vpow.pop %v2155
    %v2157 = vsel %vm1678, %v2156, 0.0
    %2158 = vadd.xlane.f32.xlu0 %v2157
    %v2159 = vpop.xlane.xlu0 %2158
    %v2160 = vrcp.pop %v2159
    %v2161 = vmul.f32 %v2156, %v2160
    %v2163 = vsel %vm1678, %v2161, 0
    %2165 = vmatprep.subr.mxu0 0.0
    %2166 = vmatpush1.msra.mxu0 %v2080
    %2167 = vmatprep.subr.mxu0 0.0
    %2168 = vmatpush1.msra.mxu0 0.0
    %2169 = vmatprep.subr.mxu0 0.0
    %2170 = vmatpush1.msra.mxu0 0.0
    %2171 = vmatprep.subr.mxu0 0.0
    %2172 = vmatpush1.msra.mxu0 0.0
    %2173 = vmatprep.subr.mxu0 0.0
    %2174 = vmatpush1.msra.mxu0 0.0
    %2175 = vmatprep.subr.mxu0 0.0
    %2176 = vmatpush1.msra.mxu0 0.0
    %2177 = vmatprep.subr.mxu0 0.0
    %2178 = vmatpush1.msra.mxu0 0.0
    %2179 = vmatprep.subr.mxu0 0.0
    %2180 = vmatpush1.msra.mxu0 0.0
    %2181 = vmatprep.subr.mxu0 0.0
    %2182 = vmatpush1.msra.mxu0 0.0
    %2183 = vmatprep.subr.mxu0 0.0
    %2184 = vmatpush1.msra.mxu0 0.0
    %2185 = vmatprep.subr.mxu0 0.0
    %2186 = vmatpush1.msra.mxu0 0.0
    %2187 = vmatprep.subr.mxu0 0.0
    %2188 = vmatpush1.msra.mxu0 0.0
    %2189 = vmatprep.subr.mxu0 0.0
    %2190 = vmatpush1.msra.mxu0 0.0
    %2191 = vmatprep.subr.mxu0 0.0
    %2192 = vmatpush1.msra.mxu0 0.0
    %2193 = vmatprep.subr.mxu0 0.0
    %2194 = vmatpush1.msra.mxu0 0.0
    %2195 = vmatprep.subr.mxu0 0.0
    %2196 = vmatpush1.msra.mxu0 0.0
    %2197 = vmatprep.subr.mxu0 0.0
    %2198 = vmatpush1.msra.mxu0 0.0
    %2199 = vmatprep.subr.mxu0 0.0
    %2200 = vmatpush1.msra.mxu0 0.0
    %2201 = vmatprep.subr.mxu0 0.0
    %2202 = vmatpush1.msra.mxu0 0.0
    %2203 = vmatprep.subr.mxu0 0.0
    %2204 = vmatpush1.msra.mxu0 0.0
    %2205 = vmatprep.subr.mxu0 0.0
    %2206 = vmatpush1.msra.mxu0 0.0
    %2207 = vmatprep.subr.mxu0 0.0
    %2208 = vmatpush1.msra.mxu0 0.0
    %2209 = vmatprep.subr.mxu0 0.0
    %2210 = vmatpush1.msra.mxu0 0.0
    %2211 = vmatprep.subr.mxu0 0.0
    %2212 = vmatpush1.msra.mxu0 0.0
    %2213 = vmatprep.subr.mxu0 0.0
    %2214 = vmatpush1.msra.mxu0 0.0
    %2215 = vmatprep.subr.mxu0 0.0
    %2216 = vmatpush1.msra.mxu0 0.0
    %2217 = vmatprep.subr.mxu0 0.0
    %2218 = vmatpush1.msra.mxu0 0.0
    %2219 = vmatprep.subr.mxu0 0.0
    %2220 = vmatpush1.msra.mxu0 0.0
    %2221 = vmatprep.subr.mxu0 0.0
    %2222 = vmatpush1.msra.mxu0 0.0
    %2223 = vmatprep.subr.mxu0 0.0
    %2224 = vmatpush1.msra.mxu0 0.0
    %2225 = vmatprep.subr.mxu0 0.0
    %2226 = vmatpush1.msra.mxu0 0.0
    %2227 = vmatprep.subr.mxu0 0.0
    %2228 = vmatpush1.msra.mxu0 0.0
    %2229 = vmatprep.mubr.f32.mxu0 0.0
    %2230 = vmatmul.mubr.f32.gmra.mrb[0].mxu0 %v2163
    %v2231 = vpop.f32.mrb[0].mxu0
    %v2232 = vadd.f32 0.0, %v2231
    %v2233 = vpop.f32.mrb[0].mxu0
    %2234 = vdwg.mxu0
    %v2235 = vadd.f32 %v2077, %v2232
    %v2236 = vld [vmem:[#allocation2 + $0x20] sm:$0xff]
    %v2237 = vld [vmem:[#allocation2 + $0x68] sm:$0xff]
    %v2238 = vld [vmem:[#allocation2 + $0xb0] sm:$0xff]
    %2239 = vmatprep.subr.mxu0 0.0
    %2240 = vmatpush1.xpose.msra.mxu0 %v2237
    %2241 = vmatprep.subr.mxu0 0.0
    %2242 = vmatpush1.xpose.msra.mxu0 0.0
    %2243 = vmatprep.subr.mxu0 0.0
    %2244 = vmatpush1.xpose.msra.mxu0 0.0
    %2245 = vmatprep.subr.mxu0 0.0
    %2246 = vmatpush1.xpose.msra.mxu0 0.0
    %2247 = vmatprep.subr.mxu0 0.0
    %2248 = vmatpush1.xpose.msra.mxu0 0.0
    %2249 = vmatprep.subr.mxu0 0.0
    %2250 = vmatpush1.xpose.msra.mxu0 0.0
    %2251 = vmatprep.subr.mxu0 0.0
    %2252 = vmatpush1.xpose.msra.mxu0 0.0
    %2253 = vmatprep.subr.mxu0 0.0
    %2254 = vmatpush1.xpose.msra.mxu0 0.0
    %2255 = vmatprep.subr.mxu0 0.0
    %2256 = vmatpush1.xpose.msra.mxu0 0.0
    %2257 = vmatprep.subr.mxu0 0.0
    %2258 = vmatpush1.xpose.msra.mxu0 0.0
    %2259 = vmatprep.subr.mxu0 0.0
    %2260 = vmatpush1.xpose.msra.mxu0 0.0
    %2261 = vmatprep.subr.mxu0 0.0
    %2262 = vmatpush1.xpose.msra.mxu0 0.0
    %2263 = vmatprep.subr.mxu0 0.0
    %2264 = vmatpush1.xpose.msra.mxu0 0.0
    %2265 = vmatprep.subr.mxu0 0.0
    %2266 = vmatpush1.xpose.msra.mxu0 0.0
    %2267 = vmatprep.subr.mxu0 0.0
    %2268 = vmatpush1.xpose.msra.mxu0 0.0
    %2269 = vmatprep.subr.mxu0 0.0
    %2270 = vmatpush1.xpose.msra.mxu0 0.0
    %2271 = vmatprep.subr.mxu0 0.0
    %2272 = vmatpush1.xpose.msra.mxu0 0.0
    %2273 = vmatprep.subr.mxu0 0.0
    %2274 = vmatpush1.xpose.msra.mxu0 0.0
    %2275 = vmatprep.subr.mxu0 0.0
    %2276 = vmatpush1.xpose.msra.mxu0 0.0
    %2277 = vmatprep.subr.mxu0 0.0
    %2278 = vmatpush1.xpose.msra.mxu0 0.0
    %2279 = vmatprep.subr.mxu0 0.0
    %2280 = vmatpush1.xpose.msra.mxu0 0.0
    %2281 = vmatprep.subr.mxu0 0.0
    %2282 = vmatpush1.xpose.msra.mxu0 0.0
    %2283 = vmatprep.subr.mxu0 0.0
    %2284 = vmatpush1.xpose.msra.mxu0 0.0
    %2285 = vmatprep.subr.mxu0 0.0
    %2286 = vmatpush1.xpose.msra.mxu0 0.0
    %2287 = vmatprep.subr.mxu0 0.0
    %2288 = vmatpush1.xpose.msra.mxu0 0.0
    %2289 = vmatprep.subr.mxu0 0.0
    %2290 = vmatpush1.xpose.msra.mxu0 0.0
    %2291 = vmatprep.subr.mxu0 0.0
    %2292 = vmatpush1.xpose.msra.mxu0 0.0
    %2293 = vmatprep.subr.mxu0 0.0
    %2294 = vmatpush1.xpose.msra.mxu0 0.0
    %2295 = vmatprep.subr.mxu0 0.0
    %2296 = vmatpush1.xpose.msra.mxu0 0.0
    %2297 = vmatprep.subr.mxu0 0.0
    %2298 = vmatpush1.xpose.msra.mxu0 0.0
    %2299 = vmatprep.subr.mxu0 0.0
    %2300 = vmatpush1.xpose.msra.mxu0 0.0
    %2301 = vmatprep.subr.mxu0 0.0
    %2302 = vmatpush1.xpose.msra.mxu0 0.0
    %2303 = vmatprep.mubr.f32.mxu0 0.0
    %2304 = vmatmul.mubr.f32.gmra.mrb[0].mxu0 %v2236
    %v2305 = vpop.f32.mrb[0].mxu0
    %v2306 = vadd.f32 0.0, %v2305
    %v2307 = vpop.f32.mrb[0].mxu0
    %2308 = vdwg.mxu0
    %v2309 = vsel %vm1678, %v2306, -inf
    %2310 = vmax.xlane.f32.xlu0 %v2309
    %v2311 = vpop.xlane.xlu0 %2310
    %v2312 = vsub.f32 %v2306, %v2311
    %v2313 = vmul.f32 %v2312, 1.442695
    %v2314 = vpow.pop %v2313
    %v2315 = vsel %vm1678, %v2314, 0.0
    %2316 = vadd.xlane.f32.xlu0 %v2315
    %v2317 = vpop.xlane.xlu0 %2316
    %v2318 = vrcp.pop %v2317
    %v2319 = vmul.f32 %v2314, %v2318
    %v2321 = vsel %vm1678, %v2319, 0
    %2323 = vmatprep.subr.mxu0 0.0
    %2324 = vmatpush1.msra.mxu0 %v2238
    %2325 = vmatprep.subr.mxu0 0.0
    %2326 = vmatpush1.msra.mxu0 0.0
    %2327 = vmatprep.subr.mxu0 0.0
    %2328 = vmatpush1.msra.mxu0 0.0
    %2329 = vmatprep.subr.mxu0 0.0
    %2330 = vmatpush1.msra.mxu0 0.0
    %2331 = vmatprep.subr.mxu0 0.0
    %2332 = vmatpush1.msra.mxu0 0.0
    %2333 = vmatprep.subr.mxu0 0.0
    %2334 = vmatpush1.msra.mxu0 0.0
    %2335 = vmatprep.subr.mxu0 0.0
    %2336 = vmatpush1.msra.mxu0 0.0
    %2337 = vmatprep.subr.mxu0 0.0
    %2338 = vmatpush1.msra.mxu0 0.0
    %2339 = vmatprep.subr.mxu0 0.0
    %2340 = vmatpush1.msra.mxu0 0.0
    %2341 = vmatprep.subr.mxu0 0.0
    %2342 = vmatpush1.msra.mxu0 0.0
    %2343 = vmatprep.subr.mxu0 0.0
    %2344 = vmatpush1.msra.mxu0 0.0
    %2345 = vmatprep.subr.mxu0 0.0
    %2346 = vmatpush1.msra.mxu0 0.0
    %2347 = vmatprep.subr.mxu0 0.0
    %2348 = vmatpush1.msra.mxu0 0.0
    %2349 = vmatprep.subr.mxu0 0.0
    %2350 = vmatpush1.msra.mxu0 0.0
    %2351 = vmatprep.subr.mxu0 0.0
    %2352 = vmatpush1.msra.mxu0 0.0
    %2353 = vmatprep.subr.mxu0 0.0
    %2354 = vmatpush1.msra.mxu0 0.0
    %2355 = vmatprep.subr.mxu0 0.0
    %2356 = vmatpush1.msra.mxu0 0.0
    %2357 = vmatprep.subr.mxu0 0.0
    %2358 = vmatpush1.msra.mxu0 0.0
    %2359 = vmatprep.subr.mxu0 0.0
    %2360 = vmatpush1.msra.mxu0 0.0
    %2361 = vmatprep.subr.mxu0 0.0
    %2362 = vmatpush1.msra.mxu0 0.0
    %2363 = vmatprep.subr.mxu0 0.0
    %2364 = vmatpush1.msra.mxu0 0.0
    %2365 = vmatprep.subr.mxu0 0.0
    %2366 = vmatpush1.msra.mxu0 0.0
    %2367 = vmatprep.subr.mxu0 0.0
    %2368 = vmatpush1.msra.mxu0 0.0
    %2369 = vmatprep.subr.mxu0 0.0
    %2370 = vmatpush1.msra.mxu0 0.0
    %2371 = vmatprep.subr.mxu0 0.0
    %2372 = vmatpush1.msra.mxu0 0.0
    %2373 = vmatprep.subr.mxu0 0.0
    %2374 = vmatpush1.msra.mxu0 0.0
    %2375 = vmatprep.subr.mxu0 0.0
    %2376 = vmatpush1.msra.mxu0 0.0
    %2377 = vmatprep.subr.mxu0 0.0
    %2378 = vmatpush1.msra.mxu0 0.0
    %2379 = vmatprep.subr.mxu0 0.0
    %2380 = vmatpush1.msra.mxu0 0.0
    %2381 = vmatprep.subr.mxu0 0.0
    %2382 = vmatpush1.msra.mxu0 0.0
    %2383 = vmatprep.subr.mxu0 0.0
    %2384 = vmatpush1.msra.mxu0 0.0
    %2385 = vmatprep.subr.mxu0 0.0
    %2386 = vmatpush1.msra.mxu0 0.0
    %2387 = vmatprep.mubr.f32.mxu0 0.0
    %2388 = vmatmul.mubr.f32.gmra.mrb[0].mxu0 %v2321
    %v2389 = vpop.f32.mrb[0].mxu0
    %v2390 = vadd.f32 0.0, %v2389
    %v2391 = vpop.f32.mrb[0].mxu0
    %2392 = vdwg.mxu0
    %v2393 = vadd.f32 %v2235, %v2390
    %v2394 = vld [vmem:[#allocation2 + $0x28] sm:$0xff]
    %v2395 = vld [vmem:[#allocation2 + $0x70] sm:$0xff]
    %v2396 = vld [vmem:[#allocation2 + $0xb8] sm:$0xff]
    %2397 = vmatprep.subr.mxu0 0.0
    %2398 = vmatpush1.xpose.msra.mxu0 %v2395
    %2399 = vmatprep.subr.mxu0 0.0
    %2400 = vmatpush1.xpose.msra.mxu0 0.0
    %2401 = vmatprep.subr.mxu0 0.0
    %2402 = vmatpush1.xpose.msra.mxu0 0.0
    %2403 = vmatprep.subr.mxu0 0.0
    %2404 = vmatpush1.xpose.msra.mxu0 0.0
    %2405 = vmatprep.subr.mxu0 0.0
    %2406 = vmatpush1.xpose.msra.mxu0 0.0
    %2407 = vmatprep.subr.mxu0 0.0
    %2408 = vmatpush1.xpose.msra.mxu0 0.0
    %2409 = vmatprep.subr.mxu0 0.0
    %2410 = vmatpush1.xpose.msra.mxu0 0.0
    %2411 = vmatprep.subr.mxu0 0.0
    %2412 = vmatpush1.xpose.msra.mxu0 0.0
    %2413 = vmatprep.subr.mxu0 0.0
    %2414 = vmatpush1.xpose.msra.mxu0 0.0
    %2415 = vmatprep.subr.mxu0 0.0
    %2416 = vmatpush1.xpose.msra.mxu0 0.0
    %2417 = vmatprep.subr.mxu0 0.0
    %2418 = vmatpush1.xpose.msra.mxu0 0.0
    %2419 = vmatprep.subr.mxu0 0.0
    %2420 = vmatpush1.xpose.msra.mxu0 0.0
    %2421 = vmatprep.subr.mxu0 0.0
    %2422 = vmatpush1.xpose.msra.mxu0 0.0
    %2423 = vmatprep.subr.mxu0 0.0
    %2424 = vmatpush1.xpose.msra.mxu0 0.0
    %2425 = vmatprep.subr.mxu0 0.0
    %2426 = vmatpush1.xpose.msra.mxu0 0.0
    %2427 = vmatprep.subr.mxu0 0.0
    %2428 = vmatpush1.xpose.msra.mxu0 0.0
    %2429 = vmatprep.subr.mxu0 0.0
    %2430 = vmatpush1.xpose.msra.mxu0 0.0
    %2431 = vmatprep.subr.mxu0 0.0
    %2432 = vmatpush1.xpose.msra.mxu0 0.0
    %2433 = vmatprep.subr.mxu0 0.0
    %2434 = vmatpush1.xpose.msra.mxu0 0.0
    %2435 = vmatprep.subr.mxu0 0.0
    %2436 = vmatpush1.xpose.msra.mxu0 0.0
    %2437 = vmatprep.subr.mxu0 0.0
    %2438 = vmatpush1.xpose.msra.mxu0 0.0
    %2439 = vmatprep.subr.mxu0 0.0
    %2440 = vmatpush1.xpose.msra.mxu0 0.0
    %2441 = vmatprep.subr.mxu0 0.0
    %2442 = vmatpush1.xpose.msra.mxu0 0.0
    %2443 = vmatprep.subr.mxu0 0.0
    %2444 = vmatpush1.xpose.msra.mxu0 0.0
    %2445 = vmatprep.subr.mxu0 0.0
    %2446 = vmatpush1.xpose.msra.mxu0 0.0
    %2447 = vmatprep.subr.mxu0 0.0
    %2448 = vmatpush1.xpose.msra.mxu0 0.0
    %2449 = vmatprep.subr.mxu0 0.0
    %2450 = vmatpush1.xpose.msra.mxu0 0.0
    %2451 = vmatprep.subr.mxu0 0.0
    %2452 = vmatpush1.xpose.msra.mxu0 0.0
    %2453 = vmatprep.subr.mxu0 0.0
    %2454 = vmatpush1.xpose.msra.mxu0 0.0
    %2455 = vmatprep.subr.mxu0 0.0
    %2456 = vmatpush1.xpose.msra.mxu0 0.0
    %2457 = vmatprep.subr.mxu0 0.0
    %2458 = vmatpush1.xpose.msra.mxu0 0.0
    %2459 = vmatprep.subr.mxu0 0.0
    %2460 = vmatpush1.xpose.msra.mxu0 0.0
    %2461 = vmatprep.mubr.f32.mxu0 0.0
    %2462 = vmatmul.mubr.f32.gmra.mrb[0].mxu0 %v2394
    %v2463 = vpop.f32.mrb[0].mxu0
    %v2464 = vadd.f32 0.0, %v2463
    %v2465 = vpop.f32.mrb[0].mxu0
    %2466 = vdwg.mxu0
    %v2467 = vsel %vm1678, %v2464, -inf
    %2468 = vmax.xlane.f32.xlu0 %v2467
    %v2469 = vpop.xlane.xlu0 %2468
    %v2470 = vsub.f32 %v2464, %v2469
    %v2471 = vmul.f32 %v2470, 1.442695
    %v2472 = vpow.pop %v2471
    %v2473 = vsel %vm1678, %v2472, 0.0
    %2474 = vadd.xlane.f32.xlu0 %v2473
    %v2475 = vpop.xlane.xlu0 %2474
    %v2476 = vrcp.pop %v2475
    %v2477 = vmul.f32 %v2472, %v2476
    %v2479 = vsel %vm1678, %v2477, 0
    %2481 = vmatprep.subr.mxu0 0.0
    %2482 = vmatpush1.msra.mxu0 %v2396
    %2483 = vmatprep.subr.mxu0 0.0
    %2484 = vmatpush1.msra.mxu0 0.0
    %2485 = vmatprep.subr.mxu0 0.0
    %2486 = vmatpush1.msra.mxu0 0.0
    %2487 = vmatprep.subr.mxu0 0.0
    %2488 = vmatpush1.msra.mxu0 0.0
    %2489 = vmatprep.subr.mxu0 0.0
    %2490 = vmatpush1.msra.mxu0 0.0
    %2491 = vmatprep.subr.mxu0 0.0
    %2492 = vmatpush1.msra.mxu0 0.0
    %2493 = vmatprep.subr.mxu0 0.0
    %2494 = vmatpush1.msra.mxu0 0.0
    %2495 = vmatprep.subr.mxu0 0.0
    %2496 = vmatpush1.msra.mxu0 0.0
    %2497 = vmatprep.subr.mxu0 0.0
    %2498 = vmatpush1.msra.mxu0 0.0
    %2499 = vmatprep.subr.mxu0 0.0
    %2500 = vmatpush1.msra.mxu0 0.0
    %2501 = vmatprep.subr.mxu0 0.0
    %2502 = vmatpush1.msra.mxu0 0.0
    %2503 = vmatprep.subr.mxu0 0.0
    %2504 = vmatpush1.msra.mxu0 0.0
    %2505 = vmatprep.subr.mxu0 0.0
    %2506 = vmatpush1.msra.mxu0 0.0
    %2507 = vmatprep.subr.mxu0 0.0
    %2508 = vmatpush1.msra.mxu0 0.0
    %2509 = vmatprep.subr.mxu0 0.0
    %2510 = vmatpush1.msra.mxu0 0.0
    %2511 = vmatprep.subr.mxu0 0.0
    %2512 = vmatpush1.msra.mxu0 0.0
    %2513 = vmatprep.subr.mxu0 0.0
    %2514 = vmatpush1.msra.mxu0 0.0
    %2515 = vmatprep.subr.mxu0 0.0
    %2516 = vmatpush1.msra.mxu0 0.0
    %2517 = vmatprep.subr.mxu0 0.0
    %2518 = vmatpush1.msra.mxu0 0.0
    %2519 = vmatprep.subr.mxu0 0.0
    %2520 = vmatpush1.msra.mxu0 0.0
    %2521 = vmatprep.subr.mxu0 0.0
    %2522 = vmatpush1.msra.mxu0 0.0
    %2523 = vmatprep.subr.mxu0 0.0
    %2524 = vmatpush1.msra.mxu0 0.0
    %2525 = vmatprep.subr.mxu0 0.0
    %2526 = vmatpush1.msra.mxu0 0.0
    %2527 = vmatprep.subr.mxu0 0.0
    %2528 = vmatpush1.msra.mxu0 0.0
    %2529 = vmatprep.subr.mxu0 0.0
    %2530 = vmatpush1.msra.mxu0 0.0
    %2531 = vmatprep.subr.mxu0 0.0
    %2532 = vmatpush1.msra.mxu0 0.0
    %2533 = vmatprep.subr.mxu0 0.0
    %2534 = vmatpush1.msra.mxu0 0.0
    %2535 = vmatprep.subr.mxu0 0.0
    %2536 = vmatpush1.msra.mxu0 0.0
    %2537 = vmatprep.subr.mxu0 0.0
    %2538 = vmatpush1.msra.mxu0 0.0
    %2539 = vmatprep.subr.mxu0 0.0
    %2540 = vmatpush1.msra.mxu0 0.0
    %2541 = vmatprep.subr.mxu0 0.0
    %2542 = vmatpush1.msra.mxu0 0.0
    %2543 = vmatprep.subr.mxu0 0.0
    %2544 = vmatpush1.msra.mxu0 0.0
    %2545 = vmatprep.mubr.f32.mxu0 0.0
    %2546 = vmatmul.mubr.f32.gmra.mrb[0].mxu0 %v2479
    %v2547 = vpop.f32.mrb[0].mxu0
    %v2548 = vadd.f32 0.0, %v2547
    %v2549 = vpop.f32.mrb[0].mxu0
    %2550 = vdwg.mxu0
    %v2551 = vadd.f32 %v2393, %v2548
    %v2552 = vld [vmem:[#allocation2 + $0x30] sm:$0xff]
    %v2553 = vld [vmem:[#allocation2 + $0x78] sm:$0xff]
    %v2554 = vld [vmem:[#allocation2 + $0xc0] sm:$0xff]
    %2555 = vmatprep.subr.mxu0 0.0
    %2556 = vmatpush1.xpose.msra.mxu0 %v2553
    %2557 = vmatprep.subr.mxu0 0.0
    %2558 = vmatpush1.xpose.msra.mxu0 0.0
    %2559 = vmatprep.subr.mxu0 0.0
    %2560 = vmatpush1.xpose.msra.mxu0 0.0
    %2561 = vmatprep.subr.mxu0 0.0
    %2562 = vmatpush1.xpose.msra.mxu0 0.0
    %2563 = vmatprep.subr.mxu0 0.0
    %2564 = vmatpush1.xpose.msra.mxu0 0.0
    %2565 = vmatprep.subr.mxu0 0.0
    %2566 = vmatpush1.xpose.msra.mxu0 0.0
    %2567 = vmatprep.subr.mxu0 0.0
    %2568 = vmatpush1.xpose.msra.mxu0 0.0
    %2569 = vmatprep.subr.mxu0 0.0
    %2570 = vmatpush1.xpose.msra.mxu0 0.0
    %2571 = vmatprep.subr.mxu0 0.0
    %2572 = vmatpush1.xpose.msra.mxu0 0.0
    %2573 = vmatprep.subr.mxu0 0.0
    %2574 = vmatpush1.xpose.msra.mxu0 0.0
    %2575 = vmatprep.subr.mxu0 0.0
    %2576 = vmatpush1.xpose.msra.mxu0 0.0
    %2577 = vmatprep.subr.mxu0 0.0
    %2578 = vmatpush1.xpose.msra.mxu0 0.0
    %2579 = vmatprep.subr.mxu0 0.0
    %2580 = vmatpush1.xpose.msra.mxu0 0.0
    %2581 = vmatprep.subr.mxu0 0.0
    %2582 = vmatpush1.xpose.msra.mxu0 0.0
    %2583 = vmatprep.subr.mxu0 0.0
    %2584 = vmatpush1.xpose.msra.mxu0 0.0
    %2585 = vmatprep.subr.mxu0 0.0
    %2586 = vmatpush1.xpose.msra.mxu0 0.0
    %2587 = vmatprep.subr.mxu0 0.0
    %2588 = vmatpush1.xpose.msra.mxu0 0.0
    %2589 = vmatprep.subr.mxu0 0.0
    %2590 = vmatpush1.xpose.msra.mxu0 0.0
    %2591 = vmatprep.subr.mxu0 0.0
    %2592 = vmatpush1.xpose.msra.mxu0 0.0
    %2593 = vmatprep.subr.mxu0 0.0
    %2594 = vmatpush1.xpose.msra.mxu0 0.0
    %2595 = vmatprep.subr.mxu0 0.0
    %2596 = vmatpush1.xpose.msra.mxu0 0.0
    %2597 = vmatprep.subr.mxu0 0.0
    %2598 = vmatpush1.xpose.msra.mxu0 0.0
    %2599 = vmatprep.subr.mxu0 0.0
    %2600 = vmatpush1.xpose.msra.mxu0 0.0
    %2601 = vmatprep.subr.mxu0 0.0
    %2602 = vmatpush1.xpose.msra.mxu0 0.0
    %2603 = vmatprep.subr.mxu0 0.0
    %2604 = vmatpush1.xpose.msra.mxu0 0.0
    %2605 = vmatprep.subr.mxu0 0.0
    %2606 = vmatpush1.xpose.msra.mxu0 0.0
    %2607 = vmatprep.subr.mxu0 0.0
    %2608 = vmatpush1.xpose.msra.mxu0 0.0
    %2609 = vmatprep.subr.mxu0 0.0
    %2610 = vmatpush1.xpose.msra.mxu0 0.0
    %2611 = vmatprep.subr.mxu0 0.0
    %2612 = vmatpush1.xpose.msra.mxu0 0.0
    %2613 = vmatprep.subr.mxu0 0.0
    %2614 = vmatpush1.xpose.msra.mxu0 0.0
    %2615 = vmatprep.subr.mxu0 0.0
    %2616 = vmatpush1.xpose.msra.mxu0 0.0
    %2617 = vmatprep.subr.mxu0 0.0
    %2618 = vmatpush1.xpose.msra.mxu0 0.0
    %2619 = vmatprep.mubr.f32.mxu0 0.0
    %2620 = vmatmul.mubr.f32.gmra.mrb[0].mxu0 %v2552
    %v2621 = vpop.f32.mrb[0].mxu0
    %v2622 = vadd.f32 0.0, %v2621
    %v2623 = vpop.f32.mrb[0].mxu0
    %2624 = vdwg.mxu0
    %v2625 = vsel %vm1678, %v2622, -inf
    %2626 = vmax.xlane.f32.xlu0 %v2625
    %v2627 = vpop.xlane.xlu0 %2626
    %v2628 = vsub.f32 %v2622, %v2627
    %v2629 = vmul.f32 %v2628, 1.442695
    %v2630 = vpow.pop %v2629
    %v2631 = vsel %vm1678, %v2630, 0.0
    %2632 = vadd.xlane.f32.xlu0 %v2631
    %v2633 = vpop.xlane.xlu0 %2632
    %v2634 = vrcp.pop %v2633
    %v2635 = vmul.f32 %v2630, %v2634
    %v2637 = vsel %vm1678, %v2635, 0
    %2639 = vmatprep.subr.mxu0 0.0
    %2640 = vmatpush1.msra.mxu0 %v2554
    %2641 = vmatprep.subr.mxu0 0.0
    %2642 = vmatpush1.msra.mxu0 0.0
    %2643 = vmatprep.subr.mxu0 0.0
    %2644 = vmatpush1.msra.mxu0 0.0
    %2645 = vmatprep.subr.mxu0 0.0
    %2646 = vmatpush1.msra.mxu0 0.0
    %2647 = vmatprep.subr.mxu0 0.0
    %2648 = vmatpush1.msra.mxu0 0.0
    %2649 = vmatprep.subr.mxu0 0.0
    %2650 = vmatpush1.msra.mxu0 0.0
    %2651 = vmatprep.subr.mxu0 0.0
    %2652 = vmatpush1.msra.mxu0 0.0
    %2653 = vmatprep.subr.mxu0 0.0
    %2654 = vmatpush1.msra.mxu0 0.0
    %2655 = vmatprep.subr.mxu0 0.0
    %2656 = vmatpush1.msra.mxu0 0.0
    %2657 = vmatprep.subr.mxu0 0.0
    %2658 = vmatpush1.msra.mxu0 0.0
    %2659 = vmatprep.subr.mxu0 0.0
    %2660 = vmatpush1.msra.mxu0 0.0
    %2661 = vmatprep.subr.mxu0 0.0
    %2662 = vmatpush1.msra.mxu0 0.0
    %2663 = vmatprep.subr.mxu0 0.0
    %2664 = vmatpush1.msra.mxu0 0.0
    %2665 = vmatprep.subr.mxu0 0.0
    %2666 = vmatpush1.msra.mxu0 0.0
    %2667 = vmatprep.subr.mxu0 0.0
    %2668 = vmatpush1.msra.mxu0 0.0
    %2669 = vmatprep.subr.mxu0 0.0
    %2670 = vmatpush1.msra.mxu0 0.0
    %2671 = vmatprep.subr.mxu0 0.0
    %2672 = vmatpush1.msra.mxu0 0.0
    %2673 = vmatprep.subr.mxu0 0.0
    %2674 = vmatpush1.msra.mxu0 0.0
    %2675 = vmatprep.subr.mxu0 0.0
    %2676 = vmatpush1.msra.mxu0 0.0
    %2677 = vmatprep.subr.mxu0 0.0
    %2678 = vmatpush1.msra.mxu0 0.0
    %2679 = vmatprep.subr.mxu0 0.0
    %2680 = vmatpush1.msra.mxu0 0.0
    %2681 = vmatprep.subr.mxu0 0.0
    %2682 = vmatpush1.msra.mxu0 0.0
    %2683 = vmatprep.subr.mxu0 0.0
    %2684 = vmatpush1.msra.mxu0 0.0
    %2685 = vmatprep.subr.mxu0 0.0
    %2686 = vmatpush1.msra.mxu0 0.0
    %2687 = vmatprep.subr.mxu0 0.0
    %2688 = vmatpush1.msra.mxu0 0.0
    %2689 = vmatprep.subr.mxu0 0.0
    %2690 = vmatpush1.msra.mxu0 0.0
    %2691 = vmatprep.subr.mxu0 0.0
    %2692 = vmatpush1.msra.mxu0 0.0
    %2693 = vmatprep.subr.mxu0 0.0
    %2694 = vmatpush1.msra.mxu0 0.0
    %2695 = vmatprep.subr.mxu0 0.0
    %2696 = vmatpush1.msra.mxu0 0.0
    %2697 = vmatprep.subr.mxu0 0.0
    %2698 = vmatpush1.msra.mxu0 0.0
    %2699 = vmatprep.subr.mxu0 0.0
    %2700 = vmatpush1.msra.mxu0 0.0
    %2701 = vmatprep.subr.mxu0 0.0
    %2702 = vmatpush1.msra.mxu0 0.0
    %2703 = vmatprep.mubr.f32.mxu0 0.0
    %2704 = vmatmul.mubr.f32.gmra.mrb[0].mxu0 %v2637
    %v2705 = vpop.f32.mrb[0].mxu0
    %v2706 = vadd.f32 0.0, %v2705
    %v2707 = vpop.f32.mrb[0].mxu0
    %2708 = vdwg.mxu0
    %v2709 = vadd.f32 %v2551, %v2706
    %v2710 = vld [vmem:[#allocation2 + $0x38] sm:$0xff]
    %v2711 = vld [vmem:[#allocation2 + $0x80] sm:$0xff]
    %v2712 = vld [vmem:[#allocation2 + $0xc8] sm:$0xff]
    %2713 = vmatprep.subr.mxu0 0.0
    %2714 = vmatpush1.xpose.msra.mxu0 %v2711
    %2715 = vmatprep.subr.mxu0 0.0
    %2716 = vmatpush1.xpose.msra.mxu0 0.0
    %2717 = vmatprep.subr.mxu0 0.0
    %2718 = vmatpush1.xpose.msra.mxu0 0.0
    %2719 = vmatprep.subr.mxu0 0.0
    %2720 = vmatpush1.xpose.msra.mxu0 0.0
    %2721 = vmatprep.subr.mxu0 0.0
    %2722 = vmatpush1.xpose.msra.mxu0 0.0
    %2723 = vmatprep.subr.mxu0 0.0
    %2724 = vmatpush1.xpose.msra.mxu0 0.0
    %2725 = vmatprep.subr.mxu0 0.0
    %2726 = vmatpush1.xpose.msra.mxu0 0.0
    %2727 = vmatprep.subr.mxu0 0.0
    %2728 = vmatpush1.xpose.msra.mxu0 0.0
    %2729 = vmatprep.subr.mxu0 0.0
    %2730 = vmatpush1.xpose.msra.mxu0 0.0
    %2731 = vmatprep.subr.mxu0 0.0
    %2732 = vmatpush1.xpose.msra.mxu0 0.0
    %2733 = vmatprep.subr.mxu0 0.0
    %2734 = vmatpush1.xpose.msra.mxu0 0.0
    %2735 = vmatprep.subr.mxu0 0.0
    %2736 = vmatpush1.xpose.msra.mxu0 0.0
    %2737 = vmatprep.subr.mxu0 0.0
    %2738 = vmatpush1.xpose.msra.mxu0 0.0
    %2739 = vmatprep.subr.mxu0 0.0
    %2740 = vmatpush1.xpose.msra.mxu0 0.0
    %2741 = vmatprep.subr.mxu0 0.0
    %2742 = vmatpush1.xpose.msra.mxu0 0.0
    %2743 = vmatprep.subr.mxu0 0.0
    %2744 = vmatpush1.xpose.msra.mxu0 0.0
    %2745 = vmatprep.subr.mxu0 0.0
    %2746 = vmatpush1.xpose.msra.mxu0 0.0
    %2747 = vmatprep.subr.mxu0 0.0
    %2748 = vmatpush1.xpose.msra.mxu0 0.0
    %2749 = vmatprep.subr.mxu0 0.0
    %2750 = vmatpush1.xpose.msra.mxu0 0.0
    %2751 = vmatprep.subr.mxu0 0.0
    %2752 = vmatpush1.xpose.msra.mxu0 0.0
    %2753 = vmatprep.subr.mxu0 0.0
    %2754 = vmatpush1.xpose.msra.mxu0 0.0
    %2755 = vmatprep.subr.mxu0 0.0
    %2756 = vmatpush1.xpose.msra.mxu0 0.0
    %2757 = vmatprep.subr.mxu0 0.0
    %2758 = vmatpush1.xpose.msra.mxu0 0.0
    %2759 = vmatprep.subr.mxu0 0.0
    %2760 = vmatpush1.xpose.msra.mxu0 0.0
    %2761 = vmatprep.subr.mxu0 0.0
    %2762 = vmatpush1.xpose.msra.mxu0 0.0
    %2763 = vmatprep.subr.mxu0 0.0
    %2764 = vmatpush1.xpose.msra.mxu0 0.0
    %2765 = vmatprep.subr.mxu0 0.0
    %2766 = vmatpush1.xpose.msra.mxu0 0.0
    %2767 = vmatprep.subr.mxu0 0.0
    %2768 = vmatpush1.xpose.msra.mxu0 0.0
    %2769 = vmatprep.subr.mxu0 0.0
    %2770 = vmatpush1.xpose.msra.mxu0 0.0
    %2771 = vmatprep.subr.mxu0 0.0
    %2772 = vmatpush1.xpose.msra.mxu0 0.0
    %2773 = vmatprep.subr.mxu0 0.0
    %2774 = vmatpush1.xpose.msra.mxu0 0.0
    %2775 = vmatprep.subr.mxu0 0.0
    %2776 = vmatpush1.xpose.msra.mxu0 0.0
    %2777 = vmatprep.mubr.f32.mxu0 0.0
    %2778 = vmatmul.mubr.f32.gmra.mrb[0].mxu0 %v2710
    %v2779 = vpop.f32.mrb[0].mxu0
    %v2780 = vadd.f32 0.0, %v2779
    %v2781 = vpop.f32.mrb[0].mxu0
    %2782 = vdwg.mxu0
    %v2783 = vsel %vm1678, %v2780, -inf
    %2784 = vmax.xlane.f32.xlu0 %v2783
    %v2785 = vpop.xlane.xlu0 %2784
    %v2786 = vsub.f32 %v2780, %v2785
    %v2787 = vmul.f32 %v2786, 1.442695
    %v2788 = vpow.pop %v2787
    %v2789 = vsel %vm1678, %v2788, 0.0
    %2790 = vadd.xlane.f32.xlu0 %v2789
    %v2791 = vpop.xlane.xlu0 %2790
    %v2792 = vrcp.pop %v2791
    %v2793 = vmul.f32 %v2788, %v2792
    %v2795 = vsel %vm1678, %v2793, 0
    %2797 = vmatprep.subr.mxu0 0.0
    %2798 = vmatpush1.msra.mxu0 %v2712
    %2799 = vmatprep.subr.mxu0 0.0
    %2800 = vmatpush1.msra.mxu0 0.0
    %2801 = vmatprep.subr.mxu0 0.0
    %2802 = vmatpush1.msra.mxu0 0.0
    %2803 = vmatprep.subr.mxu0 0.0
    %2804 = vmatpush1.msra.mxu0 0.0
    %2805 = vmatprep.subr.mxu0 0.0
    %2806 = vmatpush1.msra.mxu0 0.0
    %2807 = vmatprep.subr.mxu0 0.0
    %2808 = vmatpush1.msra.mxu0 0.0
    %2809 = vmatprep.subr.mxu0 0.0
    %2810 = vmatpush1.msra.mxu0 0.0
    %2811 = vmatprep.subr.mxu0 0.0
    %2812 = vmatpush1.msra.mxu0 0.0
    %2813 = vmatprep.subr.mxu0 0.0
    %2814 = vmatpush1.msra.mxu0 0.0
    %2815 = vmatprep.subr.mxu0 0.0
    %2816 = vmatpush1.msra.mxu0 0.0
    %2817 = vmatprep.subr.mxu0 0.0
    %2818 = vmatpush1.msra.mxu0 0.0
    %2819 = vmatprep.subr.mxu0 0.0
    %2820 = vmatpush1.msra.mxu0 0.0
    %2821 = vmatprep.subr.mxu0 0.0
    %2822 = vmatpush1.msra.mxu0 0.0
    %2823 = vmatprep.subr.mxu0 0.0
    %2824 = vmatpush1.msra.mxu0 0.0
    %2825 = vmatprep.subr.mxu0 0.0
    %2826 = vmatpush1.msra.mxu0 0.0
    %2827 = vmatprep.subr.mxu0 0.0
    %2828 = vmatpush1.msra.mxu0 0.0
    %2829 = vmatprep.subr.mxu0 0.0
    %2830 = vmatpush1.msra.mxu0 0.0
    %2831 = vmatprep.subr.mxu0 0.0
    %2832 = vmatpush1.msra.mxu0 0.0
    %2833 = vmatprep.subr.mxu0 0.0
    %2834 = vmatpush1.msra.mxu0 0.0
    %2835 = vmatprep.subr.mxu0 0.0
    %2836 = vmatpush1.msra.mxu0 0.0
    %2837 = vmatprep.subr.mxu0 0.0
    %2838 = vmatpush1.msra.mxu0 0.0
    %2839 = vmatprep.subr.mxu0 0.0
    %2840 = vmatpush1.msra.mxu0 0.0
    %2841 = vmatprep.subr.mxu0 0.0
    %2842 = vmatpush1.msra.mxu0 0.0
    %2843 = vmatprep.subr.mxu0 0.0
    %2844 = vmatpush1.msra.mxu0 0.0
    %2845 = vmatprep.subr.mxu0 0.0
    %2846 = vmatpush1.msra.mxu0 0.0
    %2847 = vmatprep.subr.mxu0 0.0
    %2848 = vmatpush1.msra.mxu0 0.0
    %2849 = vmatprep.subr.mxu0 0.0
    %2850 = vmatpush1.msra.mxu0 0.0
    %2851 = vmatprep.subr.mxu0 0.0
    %2852 = vmatpush1.msra.mxu0 0.0
    %2853 = vmatprep.subr.mxu0 0.0
    %2854 = vmatpush1.msra.mxu0 0.0
    %2855 = vmatprep.subr.mxu0 0.0
    %2856 = vmatpush1.msra.mxu0 0.0
    %2857 = vmatprep.subr.mxu0 0.0
    %2858 = vmatpush1.msra.mxu0 0.0
    %2859 = vmatprep.subr.mxu0 0.0
    %2860 = vmatpush1.msra.mxu0 0.0
    %2861 = vmatprep.mubr.f32.mxu0 0.0
    %2862 = vmatmul.mubr.f32.gmra.mrb[0].mxu0 %v2795
    %v2863 = vpop.f32.mrb[0].mxu0
    %v2864 = vadd.f32 0.0, %v2863
    %v2865 = vpop.f32.mrb[0].mxu0
    %2866 = vdwg.mxu0
    %v2867 = vadd.f32 %v2709, %v2864
    %v2868 = vld [vmem:[#allocation2 + $0x40] sm:$0xff]
    %v2869 = vld [vmem:[#allocation2 + $0x88] sm:$0xff]
    %v2870 = vld [vmem:[#allocation2 + $0xd0] sm:$0xff]
    %2871 = vmatprep.subr.mxu0 0.0
    %2872 = vmatpush1.xpose.msra.mxu0 %v2869
    %2873 = vmatprep.subr.mxu0 0.0
    %2874 = vmatpush1.xpose.msra.mxu0 0.0
    %2875 = vmatprep.subr.mxu0 0.0
    %2876 = vmatpush1.xpose.msra.mxu0 0.0
    %2877 = vmatprep.subr.mxu0 0.0
    %2878 = vmatpush1.xpose.msra.mxu0 0.0
    %2879 = vmatprep.subr.mxu0 0.0
    %2880 = vmatpush1.xpose.msra.mxu0 0.0
    %2881 = vmatprep.subr.mxu0 0.0
    %2882 = vmatpush1.xpose.msra.mxu0 0.0
    %2883 = vmatprep.subr.mxu0 0.0
    %2884 = vmatpush1.xpose.msra.mxu0 0.0
    %2885 = vmatprep.subr.mxu0 0.0
    %2886 = vmatpush1.xpose.msra.mxu0 0.0
    %2887 = vmatprep.subr.mxu0 0.0
    %2888 = vmatpush1.xpose.msra.mxu0 0.0
    %2889 = vmatprep.subr.mxu0 0.0
    %2890 = vmatpush1.xpose.msra.mxu0 0.0
    %2891 = vmatprep.subr.mxu0 0.0
    %2892 = vmatpush1.xpose.msra.mxu0 0.0
    %2893 = vmatprep.subr.mxu0 0.0
    %2894 = vmatpush1.xpose.msra.mxu0 0.0
    %2895 = vmatprep.subr.mxu0 0.0
    %2896 = vmatpush1.xpose.msra.mxu0 0.0
    %2897 = vmatprep.subr.mxu0 0.0
    %2898 = vmatpush1.xpose.msra.mxu0 0.0
    %2899 = vmatprep.subr.mxu0 0.0
    %2900 = vmatpush1.xpose.msra.mxu0 0.0
    %2901 = vmatprep.subr.mxu0 0.0
    %2902 = vmatpush1.xpose.msra.mxu0 0.0
    %2903 = vmatprep.subr.mxu0 0.0
    %2904 = vmatpush1.xpose.msra.mxu0 0.0
    %2905 = vmatprep.subr.mxu0 0.0
    %2906 = vmatpush1.xpose.msra.mxu0 0.0
    %2907 = vmatprep.subr.mxu0 0.0
    %2908 = vmatpush1.xpose.msra.mxu0 0.0
    %2909 = vmatprep.subr.mxu0 0.0
    %2910 = vmatpush1.xpose.msra.mxu0 0.0
    %2911 = vmatprep.subr.mxu0 0.0
    %2912 = vmatpush1.xpose.msra.mxu0 0.0
    %2913 = vmatprep.subr.mxu0 0.0
    %2914 = vmatpush1.xpose.msra.mxu0 0.0
    %2915 = vmatprep.subr.mxu0 0.0
    %2916 = vmatpush1.xpose.msra.mxu0 0.0
    %2917 = vmatprep.subr.mxu0 0.0
    %2918 = vmatpush1.xpose.msra.mxu0 0.0
    %2919 = vmatprep.subr.mxu0 0.0
    %2920 = vmatpush1.xpose.msra.mxu0 0.0
    %2921 = vmatprep.subr.mxu0 0.0
    %2922 = vmatpush1.xpose.msra.mxu0 0.0
    %2923 = vmatprep.subr.mxu0 0.0
    %2924 = vmatpush1.xpose.msra.mxu0 0.0
    %2925 = vmatprep.subr.mxu0 0.0
    %2926 = vmatpush1.xpose.msra.mxu0 0.0
    %2927 = vmatprep.subr.mxu0 0.0
    %2928 = vmatpush1.xpose.msra.mxu0 0.0
    %2929 = vmatprep.subr.mxu0 0.0
    %2930 = vmatpush1.xpose.msra.mxu0 0.0
    %2931 = vmatprep.subr.mxu0 0.0
    %2932 = vmatpush1.xpose.msra.mxu0 0.0
    %2933 = vmatprep.subr.mxu0 0.0
    %2934 = vmatpush1.xpose.msra.mxu0 0.0
    %2935 = vmatprep.mubr.f32.mxu0 0.0
    %2936 = vmatmul.mubr.f32.gmra.mrb[0].mxu0 %v2868
    %v2937 = vpop.f32.mrb[0].mxu0
    %v2938 = vadd.f32 0.0, %v2937
    %v2939 = vpop.f32.mrb[0].mxu0
    %2940 = vdwg.mxu0
    %v2941 = vsel %vm1678, %v2938, -inf
    %2942 = vmax.xlane.f32.xlu0 %v2941
    %v2943 = vpop.xlane.xlu0 %2942
    %v2944 = vsub.f32 %v2938, %v2943
    %v2945 = vmul.f32 %v2944, 1.442695
    %v2946 = vpow.pop %v2945
    %v2947 = vsel %vm1678, %v2946, 0.0
    %2948 = vadd.xlane.f32.xlu0 %v2947
    %v2949 = vpop.xlane.xlu0 %2948
    %v2950 = vrcp.pop %v2949
    %v2951 = vmul.f32 %v2946, %v2950
    %v2953 = vsel %vm1678, %v2951, 0
    %2955 = vmatprep.subr.mxu0 0.0
    %2956 = vmatpush1.msra.mxu0 %v2870
    %2957 = vmatprep.subr.mxu0 0.0
    %2958 = vmatpush1.msra.mxu0 0.0
    %2959 = vmatprep.subr.mxu0 0.0
    %2960 = vmatpush1.msra.mxu0 0.0
    %2961 = vmatprep.subr.mxu0 0.0
    %2962 = vmatpush1.msra.mxu0 0.0
    %2963 = vmatprep.subr.mxu0 0.0
    %2964 = vmatpush1.msra.mxu0 0.0
    %2965 = vmatprep.subr.mxu0 0.0
    %2966 = vmatpush1.msra.mxu0 0.0
    %2967 = vmatprep.subr.mxu0 0.0
    %2968 = vmatpush1.msra.mxu0 0.0
    %2969 = vmatprep.subr.mxu0 0.0
    %2970 = vmatpush1.msra.mxu0 0.0
    %2971 = vmatprep.subr.mxu0 0.0
    %2972 = vmatpush1.msra.mxu0 0.0
    %2973 = vmatprep.subr.mxu0 0.0
    %2974 = vmatpush1.msra.mxu0 0.0
    %2975 = vmatprep.subr.mxu0 0.0
    %2976 = vmatpush1.msra.mxu0 0.0
    %2977 = vmatprep.subr.mxu0 0.0
    %2978 = vmatpush1.msra.mxu0 0.0
    %2979 = vmatprep.subr.mxu0 0.0
    %2980 = vmatpush1.msra.mxu0 0.0
    %2981 = vmatprep.subr.mxu0 0.0
    %2982 = vmatpush1.msra.mxu0 0.0
    %2983 = vmatprep.subr.mxu0 0.0
    %2984 = vmatpush1.msra.mxu0 0.0
    %2985 = vmatprep.subr.mxu0 0.0
    %2986 = vmatpush1.msra.mxu0 0.0
    %2987 = vmatprep.subr.mxu0 0.0
    %2988 = vmatpush1.msra.mxu0 0.0
    %2989 = vmatprep.subr.mxu0 0.0
    %2990 = vmatpush1.msra.mxu0 0.0
    %2991 = vmatprep.subr.mxu0 0.0
    %2992 = vmatpush1.msra.mxu0 0.0
    %2993 = vmatprep.subr.mxu0 0.0
    %2994 = vmatpush1.msra.mxu0 0.0
    %2995 = vmatprep.subr.mxu0 0.0
    %2996 = vmatpush1.msra.mxu0 0.0
    %2997 = vmatprep.subr.mxu0 0.0
    %2998 = vmatpush1.msra.mxu0 0.0
    %2999 = vmatprep.subr.mxu0 0.0
    %3000 = vmatpush1.msra.mxu0 0.0
    %3001 = vmatprep.subr.mxu0 0.0
    %3002 = vmatpush1.msra.mxu0 0.0
    %3003 = vmatprep.subr.mxu0 0.0
    %3004 = vmatpush1.msra.mxu0 0.0
    %3005 = vmatprep.subr.mxu0 0.0
    %3006 = vmatpush1.msra.mxu0 0.0
    %3007 = vmatprep.subr.mxu0 0.0
    %3008 = vmatpush1.msra.mxu0 0.0
    %3009 = vmatprep.subr.mxu0 0.0
    %3010 = vmatpush1.msra.mxu0 0.0
    %3011 = vmatprep.subr.mxu0 0.0
    %3012 = vmatpush1.msra.mxu0 0.0
    %3013 = vmatprep.subr.mxu0 0.0
    %3014 = vmatpush1.msra.mxu0 0.0
    %3015 = vmatprep.subr.mxu0 0.0
    %3016 = vmatpush1.msra.mxu0 0.0
    %3017 = vmatprep.subr.mxu0 0.0
    %3018 = vmatpush1.msra.mxu0 0.0
    %3019 = vmatprep.mubr.f32.mxu0 0.0
    %3020 = vmatmul.mubr.f32.gmra.mrb[0].mxu0 %v2953
    %v3021 = vpop.f32.mrb[0].mxu0
    %v3022 = vadd.f32 0.0, %v3021
    %v3023 = vpop.f32.mrb[0].mxu0
    %3024 = vdwg.mxu0
    %v3025 = vadd.f32 %v2867, %v3022
    %v3027 = vlaneseq
    %v3028 = vshrl.u32 %v3027, 7
    %v3029 = vsub.s32 0, %v3028
    %v3030 = vrot.slane %v1604, %v3029
    %v3032 = vadd.f32 %v3025, %v3030
    %3033 = vst [vmem:[%s3] sm:$0xff] %v3032
    %v3034 = vld [vmem:[#allocation2 + $0xd8] sm:$0xff]
    %v3035 = vld [vmem:[#allocation2 + $0x120] sm:$0xff]
    %v3036 = vld [vmem:[#allocation2 + $0x168] sm:$0xff]
    %3037 = vmatprep.subr.mxu0 0.0
    %3038 = vmatpush1.xpose.msra.mxu0 %v3035
    %3039 = vmatprep.subr.mxu0 0.0
    %3040 = vmatpush1.xpose.msra.mxu0 0.0
    %3041 = vmatprep.subr.mxu0 0.0
    %3042 = vmatpush1.xpose.msra.mxu0 0.0
    %3043 = vmatprep.subr.mxu0 0.0
    %3044 = vmatpush1.xpose.msra.mxu0 0.0
    %3045 = vmatprep.subr.mxu0 0.0
    %3046 = vmatpush1.xpose.msra.mxu0 0.0
    %3047 = vmatprep.subr.mxu0 0.0
    %3048 = vmatpush1.xpose.msra.mxu0 0.0
    %3049 = vmatprep.subr.mxu0 0.0
    %3050 = vmatpush1.xpose.msra.mxu0 0.0
    %3051 = vmatprep.subr.mxu0 0.0
    %3052 = vmatpush1.xpose.msra.mxu0 0.0
    %3053 = vmatprep.subr.mxu0 0.0
    %3054 = vmatpush1.xpose.msra.mxu0 0.0
    %3055 = vmatprep.subr.mxu0 0.0
    %3056 = vmatpush1.xpose.msra.mxu0 0.0
    %3057 = vmatprep.subr.mxu0 0.0
    %3058 = vmatpush1.xpose.msra.mxu0 0.0
    %3059 = vmatprep.subr.mxu0 0.0
    %3060 = vmatpush1.xpose.msra.mxu0 0.0
    %3061 = vmatprep.subr.mxu0 0.0
    %3062 = vmatpush1.xpose.msra.mxu0 0.0
    %3063 = vmatprep.subr.mxu0 0.0
    %3064 = vmatpush1.xpose.msra.mxu0 0.0
    %3065 = vmatprep.subr.mxu0 0.0
    %3066 = vmatpush1.xpose.msra.mxu0 0.0
    %3067 = vmatprep.subr.mxu0 0.0
    %3068 = vmatpush1.xpose.msra.mxu0 0.0
    %3069 = vmatprep.subr.mxu0 0.0
    %3070 = vmatpush1.xpose.msra.mxu0 0.0
    %3071 = vmatprep.subr.mxu0 0.0
    %3072 = vmatpush1.xpose.msra.mxu0 0.0
    %3073 = vmatprep.subr.mxu0 0.0
    %3074 = vmatpush1.xpose.msra.mxu0 0.0
    %3075 = vmatprep.subr.mxu0 0.0
    %3076 = vmatpush1.xpose.msra.mxu0 0.0
    %3077 = vmatprep.subr.mxu0 0.0
    %3078 = vmatpush1.xpose.msra.mxu0 0.0
    %3079 = vmatprep.subr.mxu0 0.0
    %3080 = vmatpush1.xpose.msra.mxu0 0.0
    %3081 = vmatprep.subr.mxu0 0.0
    %3082 = vmatpush1.xpose.msra.mxu0 0.0
    %3083 = vmatprep.subr.mxu0 0.0
    %3084 = vmatpush1.xpose.msra.mxu0 0.0
    %3085 = vmatprep.subr.mxu0 0.0
    %3086 = vmatpush1.xpose.msra.mxu0 0.0
    %3087 = vmatprep.subr.mxu0 0.0
    %3088 = vmatpush1.xpose.msra.mxu0 0.0
    %3089 = vmatprep.subr.mxu0 0.0
    %3090 = vmatpush1.xpose.msra.mxu0 0.0
    %3091 = vmatprep.subr.mxu0 0.0
    %3092 = vmatpush1.xpose.msra.mxu0 0.0
    %3093 = vmatprep.subr.mxu0 0.0
    %3094 = vmatpush1.xpose.msra.mxu0 0.0
    %3095 = vmatprep.subr.mxu0 0.0
    %3096 = vmatpush1.xpose.msra.mxu0 0.0
    %3097 = vmatprep.subr.mxu0 0.0
    %3098 = vmatpush1.xpose.msra.mxu0 0.0
    %3099 = vmatprep.subr.mxu0 0.0
    %3100 = vmatpush1.xpose.msra.mxu0 0.0
    %3101 = vmatprep.mubr.f32.mxu0 0.0
    %3102 = vmatmul.mubr.f32.gmra.mrb[0].mxu0 %v3034
    %v3103 = vpop.f32.mrb[0].mxu0
    %v3104 = vadd.f32 0.0, %v3103
    %v3105 = vpop.f32.mrb[0].mxu0
    %3106 = vdwg.mxu0
    %v3107 = vsel %vm1678, %v3104, -inf
    %3108 = vmax.xlane.f32.xlu0 %v3107
    %v3109 = vpop.xlane.xlu0 %3108
    %v3110 = vsub.f32 %v3104, %v3109
    %v3111 = vmul.f32 %v3110, 1.442695
    %v3112 = vpow.pop %v3111
    %v3113 = vsel %vm1678, %v3112, 0.0
    %3114 = vadd.xlane.f32.xlu0 %v3113
    %v3115 = vpop.xlane.xlu0 %3114
    %v3116 = vrcp.pop %v3115
    %v3117 = vmul.f32 %v3112, %v3116
    %v3118 = vld [vmem:[#allocation2 + $0xe0] sm:$0xff]
    %v3119 = vld [vmem:[#allocation2 + $0x128] sm:$0xff]
    %v3120 = vld [vmem:[#allocation2 + $0x170] sm:$0xff]
    %3121 = vmatprep.subr.mxu0 0.0
    %3122 = vmatpush1.xpose.msra.mxu0 %v3119
    %3123 = vmatprep.subr.mxu0 0.0
    %3124 = vmatpush1.xpose.msra.mxu0 0.0
    %3125 = vmatprep.subr.mxu0 0.0
    %3126 = vmatpush1.xpose.msra.mxu0 0.0
    %3127 = vmatprep.subr.mxu0 0.0
    %3128 = vmatpush1.xpose.msra.mxu0 0.0
    %3129 = vmatprep.subr.mxu0 0.0
    %3130 = vmatpush1.xpose.msra.mxu0 0.0
    %3131 = vmatprep.subr.mxu0 0.0
    %3132 = vmatpush1.xpose.msra.mxu0 0.0
    %3133 = vmatprep.subr.mxu0 0.0
    %3134 = vmatpush1.xpose.msra.mxu0 0.0
    %3135 = vmatprep.subr.mxu0 0.0
    %3136 = vmatpush1.xpose.msra.mxu0 0.0
    %3137 = vmatprep.subr.mxu0 0.0
    %3138 = vmatpush1.xpose.msra.mxu0 0.0
    %3139 = vmatprep.subr.mxu0 0.0
    %3140 = vmatpush1.xpose.msra.mxu0 0.0
    %3141 = vmatprep.subr.mxu0 0.0
    %3142 = vmatpush1.xpose.msra.mxu0 0.0
    %3143 = vmatprep.subr.mxu0 0.0
    %3144 = vmatpush1.xpose.msra.mxu0 0.0
    %3145 = vmatprep.subr.mxu0 0.0
    %3146 = vmatpush1.xpose.msra.mxu0 0.0
    %3147 = vmatprep.subr.mxu0 0.0
    %3148 = vmatpush1.xpose.msra.mxu0 0.0
    %3149 = vmatprep.subr.mxu0 0.0
    %3150 = vmatpush1.xpose.msra.mxu0 0.0
    %3151 = vmatprep.subr.mxu0 0.0
    %3152 = vmatpush1.xpose.msra.mxu0 0.0
    %3153 = vmatprep.subr.mxu0 0.0
    %3154 = vmatpush1.xpose.msra.mxu0 0.0
    %3155 = vmatprep.subr.mxu0 0.0
    %3156 = vmatpush1.xpose.msra.mxu0 0.0
    %3157 = vmatprep.subr.mxu0 0.0
    %3158 = vmatpush1.xpose.msra.mxu0 0.0
    %3159 = vmatprep.subr.mxu0 0.0
    %3160 = vmatpush1.xpose.msra.mxu0 0.0
    %3161 = vmatprep.subr.mxu0 0.0
    %3162 = vmatpush1.xpose.msra.mxu0 0.0
    %3163 = vmatprep.subr.mxu0 0.0
    %3164 = vmatpush1.xpose.msra.mxu0 0.0
    %3165 = vmatprep.subr.mxu0 0.0
    %3166 = vmatpush1.xpose.msra.mxu0 0.0
    %3167 = vmatprep.subr.mxu0 0.0
    %3168 = vmatpush1.xpose.msra.mxu0 0.0
    %3169 = vmatprep.subr.mxu0 0.0
    %3170 = vmatpush1.xpose.msra.mxu0 0.0
    %3171 = vmatprep.subr.mxu0 0.0
    %3172 = vmatpush1.xpose.msra.mxu0 0.0
    %3173 = vmatprep.subr.mxu0 0.0
    %3174 = vmatpush1.xpose.msra.mxu0 0.0
    %3175 = vmatprep.subr.mxu0 0.0
    %3176 = vmatpush1.xpose.msra.mxu0 0.0
    %3177 = vmatprep.subr.mxu0 0.0
    %3178 = vmatpush1.xpose.msra.mxu0 0.0
    %3179 = vmatprep.subr.mxu0 0.0
    %3180 = vmatpush1.xpose.msra.mxu0 0.0
    %3181 = vmatprep.subr.mxu0 0.0
    %3182 = vmatpush1.xpose.msra.mxu0 0.0
    %3183 = vmatprep.subr.mxu0 0.0
    %3184 = vmatpush1.xpose.msra.mxu0 0.0
    %3185 = vmatprep.mubr.f32.mxu0 0.0
    %3186 = vmatmul.mubr.f32.gmra.mrb[0].mxu0 %v3118
    %v3187 = vpop.f32.mrb[0].mxu0
    %v3188 = vadd.f32 0.0, %v3187
    %v3189 = vpop.f32.mrb[0].mxu0
    %3190 = vdwg.mxu0
    %v3191 = vsel %vm1678, %v3188, -inf
    %3192 = vmax.xlane.f32.xlu0 %v3191
    %v3193 = vpop.xlane.xlu0 %3192
    %v3194 = vsub.f32 %v3188, %v3193
    %v3195 = vmul.f32 %v3194, 1.442695
    %v3196 = vpow.pop %v3195
    %v3197 = vsel %vm1678, %v3196, 0.0
    %3198 = vadd.xlane.f32.xlu0 %v3197
    %v3199 = vpop.xlane.xlu0 %3198
    %v3200 = vrcp.pop %v3199
    %v3201 = vmul.f32 %v3196, %v3200
    %v3203 = vsel %vm1678, %v3201, 0
    %3205 = vmatprep.subr.mxu0 0.0
    %3206 = vmatpush1.msra.mxu0 %v3120
    %3207 = vmatprep.subr.mxu0 0.0
    %3208 = vmatpush1.msra.mxu0 0.0
    %3209 = vmatprep.subr.mxu0 0.0
    %3210 = vmatpush1.msra.mxu0 0.0
    %3211 = vmatprep.subr.mxu0 0.0
    %3212 = vmatpush1.msra.mxu0 0.0
    %3213 = vmatprep.subr.mxu0 0.0
    %3214 = vmatpush1.msra.mxu0 0.0
    %3215 = vmatprep.subr.mxu0 0.0
    %3216 = vmatpush1.msra.mxu0 0.0
    %3217 = vmatprep.subr.mxu0 0.0
    %3218 = vmatpush1.msra.mxu0 0.0
    %3219 = vmatprep.subr.mxu0 0.0
    %3220 = vmatpush1.msra.mxu0 0.0
    %3221 = vmatprep.subr.mxu0 0.0
    %3222 = vmatpush1.msra.mxu0 0.0
    %3223 = vmatprep.subr.mxu0 0.0
    %3224 = vmatpush1.msra.mxu0 0.0
    %3225 = vmatprep.subr.mxu0 0.0
    %3226 = vmatpush1.msra.mxu0 0.0
    %3227 = vmatprep.subr.mxu0 0.0
    %3228 = vmatpush1.msra.mxu0 0.0
    %3229 = vmatprep.subr.mxu0 0.0
    %3230 = vmatpush1.msra.mxu0 0.0
    %3231 = vmatprep.subr.mxu0 0.0
    %3232 = vmatpush1.msra.mxu0 0.0
    %3233 = vmatprep.subr.mxu0 0.0
    %3234 = vmatpush1.msra.mxu0 0.0
    %3235 = vmatprep.subr.mxu0 0.0
    %3236 = vmatpush1.msra.mxu0 0.0
    %3237 = vmatprep.subr.mxu0 0.0
    %3238 = vmatpush1.msra.mxu0 0.0
    %3239 = vmatprep.subr.mxu0 0.0
    %3240 = vmatpush1.msra.mxu0 0.0
    %3241 = vmatprep.subr.mxu0 0.0
    %3242 = vmatpush1.msra.mxu0 0.0
    %3243 = vmatprep.subr.mxu0 0.0
    %3244 = vmatpush1.msra.mxu0 0.0
    %3245 = vmatprep.subr.mxu0 0.0
    %3246 = vmatpush1.msra.mxu0 0.0
    %3247 = vmatprep.subr.mxu0 0.0
    %3248 = vmatpush1.msra.mxu0 0.0
    %3249 = vmatprep.subr.mxu0 0.0
    %3250 = vmatpush1.msra.mxu0 0.0
    %3251 = vmatprep.subr.mxu0 0.0
    %3252 = vmatpush1.msra.mxu0 0.0
    %3253 = vmatprep.subr.mxu0 0.0
    %3254 = vmatpush1.msra.mxu0 0.0
    %3255 = vmatprep.subr.mxu0 0.0
    %3256 = vmatpush1.msra.mxu0 0.0
    %3257 = vmatprep.subr.mxu0 0.0
    %3258 = vmatpush1.msra.mxu0 0.0
    %3259 = vmatprep.subr.mxu0 0.0
    %3260 = vmatpush1.msra.mxu0 0.0
    %3261 = vmatprep.subr.mxu0 0.0
    %3262 = vmatpush1.msra.mxu0 0.0
    %3263 = vmatprep.subr.mxu0 0.0
    %3264 = vmatpush1.msra.mxu0 0.0
    %3265 = vmatprep.subr.mxu0 0.0
    %3266 = vmatpush1.msra.mxu0 0.0
    %3267 = vmatprep.subr.mxu0 0.0
    %3268 = vmatpush1.msra.mxu0 0.0
    %3269 = vmatprep.mubr.f32.mxu0 0.0
    %3270 = vmatmul.mubr.f32.gmra.mrb[0].mxu0 %v3203
    %v3271 = vpop.f32.mrb[0].mxu0
    %v3272 = vadd.f32 0.0, %v3271
    %v3273 = vpop.f32.mrb[0].mxu0
    %3274 = vdwg.mxu0
    %v3276 = vsel %vm1678, %v3117, 0
    %3278 = vmatprep.subr.mxu0 0.0
    %3279 = vmatpush1.msra.mxu0 %v3036
    %3280 = vmatprep.subr.mxu0 0.0
    %3281 = vmatpush1.msra.mxu0 0.0
    %3282 = vmatprep.subr.mxu0 0.0
    %3283 = vmatpush1.msra.mxu0 0.0
    %3284 = vmatprep.subr.mxu0 0.0
    %3285 = vmatpush1.msra.mxu0 0.0
    %3286 = vmatprep.subr.mxu0 0.0
    %3287 = vmatpush1.msra.mxu0 0.0
    %3288 = vmatprep.subr.mxu0 0.0
    %3289 = vmatpush1.msra.mxu0 0.0
    %3290 = vmatprep.subr.mxu0 0.0
    %3291 = vmatpush1.msra.mxu0 0.0
    %3292 = vmatprep.subr.mxu0 0.0
    %3293 = vmatpush1.msra.mxu0 0.0
    %3294 = vmatprep.subr.mxu0 0.0
    %3295 = vmatpush1.msra.mxu0 0.0
    %3296 = vmatprep.subr.mxu0 0.0
    %3297 = vmatpush1.msra.mxu0 0.0
    %3298 = vmatprep.subr.mxu0 0.0
    %3299 = vmatpush1.msra.mxu0 0.0
    %3300 = vmatprep.subr.mxu0 0.0
    %3301 = vmatpush1.msra.mxu0 0.0
    %3302 = vmatprep.subr.mxu0 0.0
    %3303 = vmatpush1.msra.mxu0 0.0
    %3304 = vmatprep.subr.mxu0 0.0
    %3305 = vmatpush1.msra.mxu0 0.0
    %3306 = vmatprep.subr.mxu0 0.0
    %3307 = vmatpush1.msra.mxu0 0.0
    %3308 = vmatprep.subr.mxu0 0.0
    %3309 = vmatpush1.msra.mxu0 0.0
    %3310 = vmatprep.subr.mxu0 0.0
    %3311 = vmatpush1.msra.mxu0 0.0
    %3312 = vmatprep.subr.mxu0 0.0
    %3313 = vmatpush1.msra.mxu0 0.0
    %3314 = vmatprep.subr.mxu0 0.0
    %3315 = vmatpush1.msra.mxu0 0.0
    %3316 = vmatprep.subr.mxu0 0.0
    %3317 = vmatpush1.msra.mxu0 0.0
    %3318 = vmatprep.subr.mxu0 0.0
    %3319 = vmatpush1.msra.mxu0 0.0
    %3320 = vmatprep.subr.mxu0 0.0
    %3321 = vmatpush1.msra.mxu0 0.0
    %3322 = vmatprep.subr.mxu0 0.0
    %3323 = vmatpush1.msra.mxu0 0.0
    %3324 = vmatprep.subr.mxu0 0.0
    %3325 = vmatpush1.msra.mxu0 0.0
    %3326 = vmatprep.subr.mxu0 0.0
    %3327 = vmatpush1.msra.mxu0 0.0
    %3328 = vmatprep.subr.mxu0 0.0
    %3329 = vmatpush1.msra.mxu0 0.0
    %3330 = vmatprep.subr.mxu0 0.0
    %3331 = vmatpush1.msra.mxu0 0.0
    %3332 = vmatprep.subr.mxu0 0.0
    %3333 = vmatpush1.msra.mxu0 0.0
    %3334 = vmatprep.subr.mxu0 0.0
    %3335 = vmatpush1.msra.mxu0 0.0
    %3336 = vmatprep.subr.mxu0 0.0
    %3337 = vmatpush1.msra.mxu0 0.0
    %3338 = vmatprep.subr.mxu0 0.0
    %3339 = vmatpush1.msra.mxu0 0.0
    %3340 = vmatprep.subr.mxu0 0.0
    %3341 = vmatpush1.msra.mxu0 0.0
    %3342 = vmatprep.mubr.f32.mxu0 0.0
    %3343 = vmatmul.mubr.f32.gmra.mrb[0].mxu0 %v3276
    %v3344 = vpop.f32.mrb[0].mxu0
    %v3345 = vadd.f32 %v3272, %v3344
    %v3346 = vpop.f32.mrb[0].mxu0
    %3347 = vdwg.mxu0
    %v3348 = vld [vmem:[#allocation2 + $0xe8] sm:$0xff]
    %v3349 = vld [vmem:[#allocation2 + $0x130] sm:$0xff]
    %v3350 = vld [vmem:[#allocation2 + $0x178] sm:$0xff]
    %3351 = vmatprep.subr.mxu0 0.0
    %3352 = vmatpush1.xpose.msra.mxu0 %v3349
    %3353 = vmatprep.subr.mxu0 0.0
    %3354 = vmatpush1.xpose.msra.mxu0 0.0
    %3355 = vmatprep.subr.mxu0 0.0
    %3356 = vmatpush1.xpose.msra.mxu0 0.0
    %3357 = vmatprep.subr.mxu0 0.0
    %3358 = vmatpush1.xpose.msra.mxu0 0.0
    %3359 = vmatprep.subr.mxu0 0.0
    %3360 = vmatpush1.xpose.msra.mxu0 0.0
    %3361 = vmatprep.subr.mxu0 0.0
    %3362 = vmatpush1.xpose.msra.mxu0 0.0
    %3363 = vmatprep.subr.mxu0 0.0
    %3364 = vmatpush1.xpose.msra.mxu0 0.0
    %3365 = vmatprep.subr.mxu0 0.0
    %3366 = vmatpush1.xpose.msra.mxu0 0.0
    %3367 = vmatprep.subr.mxu0 0.0
    %3368 = vmatpush1.xpose.msra.mxu0 0.0
    %3369 = vmatprep.subr.mxu0 0.0
    %3370 = vmatpush1.xpose.msra.mxu0 0.0
    %3371 = vmatprep.subr.mxu0 0.0
    %3372 = vmatpush1.xpose.msra.mxu0 0.0
    %3373 = vmatprep.subr.mxu0 0.0
    %3374 = vmatpush1.xpose.msra.mxu0 0.0
    %3375 = vmatprep.subr.mxu0 0.0
    %3376 = vmatpush1.xpose.msra.mxu0 0.0
    %3377 = vmatprep.subr.mxu0 0.0
    %3378 = vmatpush1.xpose.msra.mxu0 0.0
    %3379 = vmatprep.subr.mxu0 0.0
    %3380 = vmatpush1.xpose.msra.mxu0 0.0
    %3381 = vmatprep.subr.mxu0 0.0
    %3382 = vmatpush1.xpose.msra.mxu0 0.0
    %3383 = vmatprep.subr.mxu0 0.0
    %3384 = vmatpush1.xpose.msra.mxu0 0.0
    %3385 = vmatprep.subr.mxu0 0.0
    %3386 = vmatpush1.xpose.msra.mxu0 0.0
    %3387 = vmatprep.subr.mxu0 0.0
    %3388 = vmatpush1.xpose.msra.mxu0 0.0
    %3389 = vmatprep.subr.mxu0 0.0
    %3390 = vmatpush1.xpose.msra.mxu0 0.0
    %3391 = vmatprep.subr.mxu0 0.0
    %3392 = vmatpush1.xpose.msra.mxu0 0.0
    %3393 = vmatprep.subr.mxu0 0.0
    %3394 = vmatpush1.xpose.msra.mxu0 0.0
    %3395 = vmatprep.subr.mxu0 0.0
    %3396 = vmatpush1.xpose.msra.mxu0 0.0
    %3397 = vmatprep.subr.mxu0 0.0
    %3398 = vmatpush1.xpose.msra.mxu0 0.0
    %3399 = vmatprep.subr.mxu0 0.0
    %3400 = vmatpush1.xpose.msra.mxu0 0.0
    %3401 = vmatprep.subr.mxu0 0.0
    %3402 = vmatpush1.xpose.msra.mxu0 0.0
    %3403 = vmatprep.subr.mxu0 0.0
    %3404 = vmatpush1.xpose.msra.mxu0 0.0
    %3405 = vmatprep.subr.mxu0 0.0
    %3406 = vmatpush1.xpose.msra.mxu0 0.0
    %3407 = vmatprep.subr.mxu0 0.0
    %3408 = vmatpush1.xpose.msra.mxu0 0.0
    %3409 = vmatprep.subr.mxu0 0.0
    %3410 = vmatpush1.xpose.msra.mxu0 0.0
    %3411 = vmatprep.subr.mxu0 0.0
    %3412 = vmatpush1.xpose.msra.mxu0 0.0
    %3413 = vmatprep.subr.mxu0 0.0
    %3414 = vmatpush1.xpose.msra.mxu0 0.0
    %3415 = vmatprep.mubr.f32.mxu0 0.0
    %3416 = vmatmul.mubr.f32.gmra.mrb[0].mxu0 %v3348
    %v3417 = vpop.f32.mrb[0].mxu0
    %v3418 = vadd.f32 0.0, %v3417
    %v3419 = vpop.f32.mrb[0].mxu0
    %3420 = vdwg.mxu0
    %v3421 = vsel %vm1678, %v3418, -inf
    %3422 = vmax.xlane.f32.xlu0 %v3421
    %v3423 = vpop.xlane.xlu0 %3422
    %v3424 = vsub.f32 %v3418, %v3423
    %v3425 = vmul.f32 %v3424, 1.442695
    %v3426 = vpow.pop %v3425
    %v3427 = vsel %vm1678, %v3426, 0.0
    %3428 = vadd.xlane.f32.xlu0 %v3427
    %v3429 = vpop.xlane.xlu0 %3428
    %v3430 = vrcp.pop %v3429
    %v3431 = vmul.f32 %v3426, %v3430
    %v3433 = vsel %vm1678, %v3431, 0
    %3435 = vmatprep.subr.mxu0 0.0
    %3436 = vmatpush1.msra.mxu0 %v3350
    %3437 = vmatprep.subr.mxu0 0.0
    %3438 = vmatpush1.msra.mxu0 0.0
    %3439 = vmatprep.subr.mxu0 0.0
    %3440 = vmatpush1.msra.mxu0 0.0
    %3441 = vmatprep.subr.mxu0 0.0
    %3442 = vmatpush1.msra.mxu0 0.0
    %3443 = vmatprep.subr.mxu0 0.0
    %3444 = vmatpush1.msra.mxu0 0.0
    %3445 = vmatprep.subr.mxu0 0.0
    %3446 = vmatpush1.msra.mxu0 0.0
    %3447 = vmatprep.subr.mxu0 0.0
    %3448 = vmatpush1.msra.mxu0 0.0
    %3449 = vmatprep.subr.mxu0 0.0
    %3450 = vmatpush1.msra.mxu0 0.0
    %3451 = vmatprep.subr.mxu0 0.0
    %3452 = vmatpush1.msra.mxu0 0.0
    %3453 = vmatprep.subr.mxu0 0.0
    %3454 = vmatpush1.msra.mxu0 0.0
    %3455 = vmatprep.subr.mxu0 0.0
    %3456 = vmatpush1.msra.mxu0 0.0
    %3457 = vmatprep.subr.mxu0 0.0
    %3458 = vmatpush1.msra.mxu0 0.0
    %3459 = vmatprep.subr.mxu0 0.0
    %3460 = vmatpush1.msra.mxu0 0.0
    %3461 = vmatprep.subr.mxu0 0.0
    %3462 = vmatpush1.msra.mxu0 0.0
    %3463 = vmatprep.subr.mxu0 0.0
    %3464 = vmatpush1.msra.mxu0 0.0
    %3465 = vmatprep.subr.mxu0 0.0
    %3466 = vmatpush1.msra.mxu0 0.0
    %3467 = vmatprep.subr.mxu0 0.0
    %3468 = vmatpush1.msra.mxu0 0.0
    %3469 = vmatprep.subr.mxu0 0.0
    %3470 = vmatpush1.msra.mxu0 0.0
    %3471 = vmatprep.subr.mxu0 0.0
    %3472 = vmatpush1.msra.mxu0 0.0
    %3473 = vmatprep.subr.mxu0 0.0
    %3474 = vmatpush1.msra.mxu0 0.0
    %3475 = vmatprep.subr.mxu0 0.0
    %3476 = vmatpush1.msra.mxu0 0.0
    %3477 = vmatprep.subr.mxu0 0.0
    %3478 = vmatpush1.msra.mxu0 0.0
    %3479 = vmatprep.subr.mxu0 0.0
    %3480 = vmatpush1.msra.mxu0 0.0
    %3481 = vmatprep.subr.mxu0 0.0
    %3482 = vmatpush1.msra.mxu0 0.0
    %3483 = vmatprep.subr.mxu0 0.0
    %3484 = vmatpush1.msra.mxu0 0.0
    %3485 = vmatprep.subr.mxu0 0.0
    %3486 = vmatpush1.msra.mxu0 0.0
    %3487 = vmatprep.subr.mxu0 0.0
    %3488 = vmatpush1.msra.mxu0 0.0
    %3489 = vmatprep.subr.mxu0 0.0
    %3490 = vmatpush1.msra.mxu0 0.0
    %3491 = vmatprep.subr.mxu0 0.0
    %3492 = vmatpush1.msra.mxu0 0.0
    %3493 = vmatprep.subr.mxu0 0.0
    %3494 = vmatpush1.msra.mxu0 0.0
    %3495 = vmatprep.subr.mxu0 0.0
    %3496 = vmatpush1.msra.mxu0 0.0
    %3497 = vmatprep.subr.mxu0 0.0
    %3498 = vmatpush1.msra.mxu0 0.0
    %3499 = vmatprep.mubr.f32.mxu0 0.0
    %3500 = vmatmul.mubr.f32.gmra.mrb[0].mxu0 %v3433
    %v3501 = vpop.f32.mrb[0].mxu0
    %v3502 = vadd.f32 0.0, %v3501
    %v3503 = vpop.f32.mrb[0].mxu0
    %3504 = vdwg.mxu0
    %v3505 = vadd.f32 %v3345, %v3502
    %v3506 = vld [vmem:[#allocation2 + $0xf0] sm:$0xff]
    %v3507 = vld [vmem:[#allocation2 + $0x138] sm:$0xff]
    %v3508 = vld [vmem:[#allocation2 + $0x180] sm:$0xff]
    %3509 = vmatprep.subr.mxu0 0.0
    %3510 = vmatpush1.xpose.msra.mxu0 %v3507
    %3511 = vmatprep.subr.mxu0 0.0
    %3512 = vmatpush1.xpose.msra.mxu0 0.0
    %3513 = vmatprep.subr.mxu0 0.0
    %3514 = vmatpush1.xpose.msra.mxu0 0.0
    %3515 = vmatprep.subr.mxu0 0.0
    %3516 = vmatpush1.xpose.msra.mxu0 0.0
    %3517 = vmatprep.subr.mxu0 0.0
    %3518 = vmatpush1.xpose.msra.mxu0 0.0
    %3519 = vmatprep.subr.mxu0 0.0
    %3520 = vmatpush1.xpose.msra.mxu0 0.0
    %3521 = vmatprep.subr.mxu0 0.0
    %3522 = vmatpush1.xpose.msra.mxu0 0.0
    %3523 = vmatprep.subr.mxu0 0.0
    %3524 = vmatpush1.xpose.msra.mxu0 0.0
    %3525 = vmatprep.subr.mxu0 0.0
    %3526 = vmatpush1.xpose.msra.mxu0 0.0
    %3527 = vmatprep.subr.mxu0 0.0
    %3528 = vmatpush1.xpose.msra.mxu0 0.0
    %3529 = vmatprep.subr.mxu0 0.0
    %3530 = vmatpush1.xpose.msra.mxu0 0.0
    %3531 = vmatprep.subr.mxu0 0.0
    %3532 = vmatpush1.xpose.msra.mxu0 0.0
    %3533 = vmatprep.subr.mxu0 0.0
    %3534 = vmatpush1.xpose.msra.mxu0 0.0
    %3535 = vmatprep.subr.mxu0 0.0
    %3536 = vmatpush1.xpose.msra.mxu0 0.0
    %3537 = vmatprep.subr.mxu0 0.0
    %3538 = vmatpush1.xpose.msra.mxu0 0.0
    %3539 = vmatprep.subr.mxu0 0.0
    %3540 = vmatpush1.xpose.msra.mxu0 0.0
    %3541 = vmatprep.subr.mxu0 0.0
    %3542 = vmatpush1.xpose.msra.mxu0 0.0
    %3543 = vmatprep.subr.mxu0 0.0
    %3544 = vmatpush1.xpose.msra.mxu0 0.0
    %3545 = vmatprep.subr.mxu0 0.0
    %3546 = vmatpush1.xpose.msra.mxu0 0.0
    %3547 = vmatprep.subr.mxu0 0.0
    %3548 = vmatpush1.xpose.msra.mxu0 0.0
    %3549 = vmatprep.subr.mxu0 0.0
    %3550 = vmatpush1.xpose.msra.mxu0 0.0
    %3551 = vmatprep.subr.mxu0 0.0
    %3552 = vmatpush1.xpose.msra.mxu0 0.0
    %3553 = vmatprep.subr.mxu0 0.0
    %3554 = vmatpush1.xpose.msra.mxu0 0.0
    %3555 = vmatprep.subr.mxu0 0.0
    %3556 = vmatpush1.xpose.msra.mxu0 0.0
    %3557 = vmatprep.subr.mxu0 0.0
    %3558 = vmatpush1.xpose.msra.mxu0 0.0
    %3559 = vmatprep.subr.mxu0 0.0
    %3560 = vmatpush1.xpose.msra.mxu0 0.0
    %3561 = vmatprep.subr.mxu0 0.0
    %3562 = vmatpush1.xpose.msra.mxu0 0.0
    %3563 = vmatprep.subr.mxu0 0.0
    %3564 = vmatpush1.xpose.msra.mxu0 0.0
    %3565 = vmatprep.subr.mxu0 0.0
    %3566 = vmatpush1.xpose.msra.mxu0 0.0
    %3567 = vmatprep.subr.mxu0 0.0
    %3568 = vmatpush1.xpose.msra.mxu0 0.0
    %3569 = vmatprep.subr.mxu0 0.0
    %3570 = vmatpush1.xpose.msra.mxu0 0.0
    %3571 = vmatprep.subr.mxu0 0.0
    %3572 = vmatpush1.xpose.msra.mxu0 0.0
    %3573 = vmatprep.mubr.f32.mxu0 0.0
    %3574 = vmatmul.mubr.f32.gmra.mrb[0].mxu0 %v3506
    %v3575 = vpop.f32.mrb[0].mxu0
    %v3576 = vadd.f32 0.0, %v3575
    %v3577 = vpop.f32.mrb[0].mxu0
    %3578 = vdwg.mxu0
    %v3579 = vsel %vm1678, %v3576, -inf
    %3580 = vmax.xlane.f32.xlu0 %v3579
    %v3581 = vpop.xlane.xlu0 %3580
    %v3582 = vsub.f32 %v3576, %v3581
    %v3583 = vmul.f32 %v3582, 1.442695
    %v3584 = vpow.pop %v3583
    %v3585 = vsel %vm1678, %v3584, 0.0
    %3586 = vadd.xlane.f32.xlu0 %v3585
    %v3587 = vpop.xlane.xlu0 %3586
    %v3588 = vrcp.pop %v3587
    %v3589 = vmul.f32 %v3584, %v3588
    %v3591 = vsel %vm1678, %v3589, 0
    %3593 = vmatprep.subr.mxu0 0.0
    %3594 = vmatpush1.msra.mxu0 %v3508
    %3595 = vmatprep.subr.mxu0 0.0
    %3596 = vmatpush1.msra.mxu0 0.0
    %3597 = vmatprep.subr.mxu0 0.0
    %3598 = vmatpush1.msra.mxu0 0.0
    %3599 = vmatprep.subr.mxu0 0.0
    %3600 = vmatpush1.msra.mxu0 0.0
    %3601 = vmatprep.subr.mxu0 0.0
    %3602 = vmatpush1.msra.mxu0 0.0
    %3603 = vmatprep.subr.mxu0 0.0
    %3604 = vmatpush1.msra.mxu0 0.0
    %3605 = vmatprep.subr.mxu0 0.0
    %3606 = vmatpush1.msra.mxu0 0.0
    %3607 = vmatprep.subr.mxu0 0.0
    %3608 = vmatpush1.msra.mxu0 0.0
    %3609 = vmatprep.subr.mxu0 0.0
    %3610 = vmatpush1.msra.mxu0 0.0
    %3611 = vmatprep.subr.mxu0 0.0
    %3612 = vmatpush1.msra.mxu0 0.0
    %3613 = vmatprep.subr.mxu0 0.0
    %3614 = vmatpush1.msra.mxu0 0.0
    %3615 = vmatprep.subr.mxu0 0.0
    %3616 = vmatpush1.msra.mxu0 0.0
    %3617 = vmatprep.subr.mxu0 0.0
    %3618 = vmatpush1.msra.mxu0 0.0
    %3619 = vmatprep.subr.mxu0 0.0
    %3620 = vmatpush1.msra.mxu0 0.0
    %3621 = vmatprep.subr.mxu0 0.0
    %3622 = vmatpush1.msra.mxu0 0.0
    %3623 = vmatprep.subr.mxu0 0.0
    %3624 = vmatpush1.msra.mxu0 0.0
    %3625 = vmatprep.subr.mxu0 0.0
    %3626 = vmatpush1.msra.mxu0 0.0
    %3627 = vmatprep.subr.mxu0 0.0
    %3628 = vmatpush1.msra.mxu0 0.0
    %3629 = vmatprep.subr.mxu0 0.0
    %3630 = vmatpush1.msra.mxu0 0.0
    %3631 = vmatprep.subr.mxu0 0.0
    %3632 = vmatpush1.msra.mxu0 0.0
    %3633 = vmatprep.subr.mxu0 0.0
    %3634 = vmatpush1.msra.mxu0 0.0
    %3635 = vmatprep.subr.mxu0 0.0
    %3636 = vmatpush1.msra.mxu0 0.0
    %3637 = vmatprep.subr.mxu0 0.0
    %3638 = vmatpush1.msra.mxu0 0.0
    %3639 = vmatprep.subr.mxu0 0.0
    %3640 = vmatpush1.msra.mxu0 0.0
    %3641 = vmatprep.subr.mxu0 0.0
    %3642 = vmatpush1.msra.mxu0 0.0
    %3643 = vmatprep.subr.mxu0 0.0
    %3644 = vmatpush1.msra.mxu0 0.0
    %3645 = vmatprep.subr.mxu0 0.0
    %3646 = vmatpush1.msra.mxu0 0.0
    %3647 = vmatprep.subr.mxu0 0.0
    %3648 = vmatpush1.msra.mxu0 0.0
    %3649 = vmatprep.subr.mxu0 0.0
    %3650 = vmatpush1.msra.mxu0 0.0
    %3651 = vmatprep.subr.mxu0 0.0
    %3652 = vmatpush1.msra.mxu0 0.0
    %3653 = vmatprep.subr.mxu0 0.0
    %3654 = vmatpush1.msra.mxu0 0.0
    %3655 = vmatprep.subr.mxu0 0.0
    %3656 = vmatpush1.msra.mxu0 0.0
    %3657 = vmatprep.mubr.f32.mxu0 0.0
    %3658 = vmatmul.mubr.f32.gmra.mrb[0].mxu0 %v3591
    %v3659 = vpop.f32.mrb[0].mxu0
    %v3660 = vadd.f32 0.0, %v3659
    %v3661 = vpop.f32.mrb[0].mxu0
    %3662 = vdwg.mxu0
    %v3663 = vadd.f32 %v3505, %v3660
    %v3664 = vld [vmem:[#allocation2 + $0xf8] sm:$0xff]
    %v3665 = vld [vmem:[#allocation2 + $0x140] sm:$0xff]
    %v3666 = vld [vmem:[#allocation2 + $0x188] sm:$0xff]
    %3667 = vmatprep.subr.mxu0 0.0
    %3668 = vmatpush1.xpose.msra.mxu0 %v3665
    %3669 = vmatprep.subr.mxu0 0.0
    %3670 = vmatpush1.xpose.msra.mxu0 0.0
    %3671 = vmatprep.subr.mxu0 0.0
    %3672 = vmatpush1.xpose.msra.mxu0 0.0
    %3673 = vmatprep.subr.mxu0 0.0
    %3674 = vmatpush1.xpose.msra.mxu0 0.0
    %3675 = vmatprep.subr.mxu0 0.0
    %3676 = vmatpush1.xpose.msra.mxu0 0.0
    %3677 = vmatprep.subr.mxu0 0.0
    %3678 = vmatpush1.xpose.msra.mxu0 0.0
    %3679 = vmatprep.subr.mxu0 0.0
    %3680 = vmatpush1.xpose.msra.mxu0 0.0
    %3681 = vmatprep.subr.mxu0 0.0
    %3682 = vmatpush1.xpose.msra.mxu0 0.0
    %3683 = vmatprep.subr.mxu0 0.0
    %3684 = vmatpush1.xpose.msra.mxu0 0.0
    %3685 = vmatprep.subr.mxu0 0.0
    %3686 = vmatpush1.xpose.msra.mxu0 0.0
    %3687 = vmatprep.subr.mxu0 0.0
    %3688 = vmatpush1.xpose.msra.mxu0 0.0
    %3689 = vmatprep.subr.mxu0 0.0
    %3690 = vmatpush1.xpose.msra.mxu0 0.0
    %3691 = vmatprep.subr.mxu0 0.0
    %3692 = vmatpush1.xpose.msra.mxu0 0.0
    %3693 = vmatprep.subr.mxu0 0.0
    %3694 = vmatpush1.xpose.msra.mxu0 0.0
    %3695 = vmatprep.subr.mxu0 0.0
    %3696 = vmatpush1.xpose.msra.mxu0 0.0
    %3697 = vmatprep.subr.mxu0 0.0
    %3698 = vmatpush1.xpose.msra.mxu0 0.0
    %3699 = vmatprep.subr.mxu0 0.0
    %3700 = vmatpush1.xpose.msra.mxu0 0.0
    %3701 = vmatprep.subr.mxu0 0.0
    %3702 = vmatpush1.xpose.msra.mxu0 0.0
    %3703 = vmatprep.subr.mxu0 0.0
    %3704 = vmatpush1.xpose.msra.mxu0 0.0
    %3705 = vmatprep.subr.mxu0 0.0
    %3706 = vmatpush1.xpose.msra.mxu0 0.0
    %3707 = vmatprep.subr.mxu0 0.0
    %3708 = vmatpush1.xpose.msra.mxu0 0.0
    %3709 = vmatprep.subr.mxu0 0.0
    %3710 = vmatpush1.xpose.msra.mxu0 0.0
    %3711 = vmatprep.subr.mxu0 0.0
    %3712 = vmatpush1.xpose.msra.mxu0 0.0
    %3713 = vmatprep.subr.mxu0 0.0
    %3714 = vmatpush1.xpose.msra.mxu0 0.0
    %3715 = vmatprep.subr.mxu0 0.0
    %3716 = vmatpush1.xpose.msra.mxu0 0.0
    %3717 = vmatprep.subr.mxu0 0.0
    %3718 = vmatpush1.xpose.msra.mxu0 0.0
    %3719 = vmatprep.subr.mxu0 0.0
    %3720 = vmatpush1.xpose.msra.mxu0 0.0
    %3721 = vmatprep.subr.mxu0 0.0
    %3722 = vmatpush1.xpose.msra.mxu0 0.0
    %3723 = vmatprep.subr.mxu0 0.0
    %3724 = vmatpush1.xpose.msra.mxu0 0.0
    %3725 = vmatprep.subr.mxu0 0.0
    %3726 = vmatpush1.xpose.msra.mxu0 0.0
    %3727 = vmatprep.subr.mxu0 0.0
    %3728 = vmatpush1.xpose.msra.mxu0 0.0
    %3729 = vmatprep.subr.mxu0 0.0
    %3730 = vmatpush1.xpose.msra.mxu0 0.0
    %3731 = vmatprep.mubr.f32.mxu0 0.0
    %3732 = vmatmul.mubr.f32.gmra.mrb[0].mxu0 %v3664
    %v3733 = vpop.f32.mrb[0].mxu0
    %v3734 = vadd.f32 0.0, %v3733
    %v3735 = vpop.f32.mrb[0].mxu0
    %3736 = vdwg.mxu0
    %v3737 = vsel %vm1678, %v3734, -inf
    %3738 = vmax.xlane.f32.xlu0 %v3737
    %v3739 = vpop.xlane.xlu0 %3738
    %v3740 = vsub.f32 %v3734, %v3739
    %v3741 = vmul.f32 %v3740, 1.442695
    %v3742 = vpow.pop %v3741
    %v3743 = vsel %vm1678, %v3742, 0.0
    %3744 = vadd.xlane.f32.xlu0 %v3743
    %v3745 = vpop.xlane.xlu0 %3744
    %v3746 = vrcp.pop %v3745
    %v3747 = vmul.f32 %v3742, %v3746
    %v3749 = vsel %vm1678, %v3747, 0
    %3751 = vmatprep.subr.mxu0 0.0
    %3752 = vmatpush1.msra.mxu0 %v3666
    %3753 = vmatprep.subr.mxu0 0.0
    %3754 = vmatpush1.msra.mxu0 0.0
    %3755 = vmatprep.subr.mxu0 0.0
    %3756 = vmatpush1.msra.mxu0 0.0
    %3757 = vmatprep.subr.mxu0 0.0
    %3758 = vmatpush1.msra.mxu0 0.0
    %3759 = vmatprep.subr.mxu0 0.0
    %3760 = vmatpush1.msra.mxu0 0.0
    %3761 = vmatprep.subr.mxu0 0.0
    %3762 = vmatpush1.msra.mxu0 0.0
    %3763 = vmatprep.subr.mxu0 0.0
    %3764 = vmatpush1.msra.mxu0 0.0
    %3765 = vmatprep.subr.mxu0 0.0
    %3766 = vmatpush1.msra.mxu0 0.0
    %3767 = vmatprep.subr.mxu0 0.0
    %3768 = vmatpush1.msra.mxu0 0.0
    %3769 = vmatprep.subr.mxu0 0.0
    %3770 = vmatpush1.msra.mxu0 0.0
    %3771 = vmatprep.subr.mxu0 0.0
    %3772 = vmatpush1.msra.mxu0 0.0
    %3773 = vmatprep.subr.mxu0 0.0
    %3774 = vmatpush1.msra.mxu0 0.0
    %3775 = vmatprep.subr.mxu0 0.0
    %3776 = vmatpush1.msra.mxu0 0.0
    %3777 = vmatprep.subr.mxu0 0.0
    %3778 = vmatpush1.msra.mxu0 0.0
    %3779 = vmatprep.subr.mxu0 0.0
    %3780 = vmatpush1.msra.mxu0 0.0
    %3781 = vmatprep.subr.mxu0 0.0
    %3782 = vmatpush1.msra.mxu0 0.0
    %3783 = vmatprep.subr.mxu0 0.0
    %3784 = vmatpush1.msra.mxu0 0.0
    %3785 = vmatprep.subr.mxu0 0.0
    %3786 = vmatpush1.msra.mxu0 0.0
    %3787 = vmatprep.subr.mxu0 0.0
    %3788 = vmatpush1.msra.mxu0 0.0
    %3789 = vmatprep.subr.mxu0 0.0
    %3790 = vmatpush1.msra.mxu0 0.0
    %3791 = vmatprep.subr.mxu0 0.0
    %3792 = vmatpush1.msra.mxu0 0.0
    %3793 = vmatprep.subr.mxu0 0.0
    %3794 = vmatpush1.msra.mxu0 0.0
    %3795 = vmatprep.subr.mxu0 0.0
    %3796 = vmatpush1.msra.mxu0 0.0
    %3797 = vmatprep.subr.mxu0 0.0
    %3798 = vmatpush1.msra.mxu0 0.0
    %3799 = vmatprep.subr.mxu0 0.0
    %3800 = vmatpush1.msra.mxu0 0.0
    %3801 = vmatprep.subr.mxu0 0.0
    %3802 = vmatpush1.msra.mxu0 0.0
    %3803 = vmatprep.subr.mxu0 0.0
    %3804 = vmatpush1.msra.mxu0 0.0
    %3805 = vmatprep.subr.mxu0 0.0
    %3806 = vmatpush1.msra.mxu0 0.0
    %3807 = vmatprep.subr.mxu0 0.0
    %3808 = vmatpush1.msra.mxu0 0.0
    %3809 = vmatprep.subr.mxu0 0.0
    %3810 = vmatpush1.msra.mxu0 0.0
    %3811 = vmatprep.subr.mxu0 0.0
    %3812 = vmatpush1.msra.mxu0 0.0
    %3813 = vmatprep.subr.mxu0 0.0
    %3814 = vmatpush1.msra.mxu0 0.0
    %3815 = vmatprep.mubr.f32.mxu0 0.0
    %3816 = vmatmul.mubr.f32.gmra.mrb[0].mxu0 %v3749
    %v3817 = vpop.f32.mrb[0].mxu0
    %v3818 = vadd.f32 0.0, %v3817
    %v3819 = vpop.f32.mrb[0].mxu0
    %3820 = vdwg.mxu0
    %v3821 = vadd.f32 %v3663, %v3818
    %v3822 = vld [vmem:[#allocation2 + $0x100] sm:$0xff]
    %v3823 = vld [vmem:[#allocation2 + $0x148] sm:$0xff]
    %v3824 = vld [vmem:[#allocation2 + $0x190] sm:$0xff]
    %3825 = vmatprep.subr.mxu0 0.0
    %3826 = vmatpush1.xpose.msra.mxu0 %v3823
    %3827 = vmatprep.subr.mxu0 0.0
    %3828 = vmatpush1.xpose.msra.mxu0 0.0
    %3829 = vmatprep.subr.mxu0 0.0
    %3830 = vmatpush1.xpose.msra.mxu0 0.0
    %3831 = vmatprep.subr.mxu0 0.0
    %3832 = vmatpush1.xpose.msra.mxu0 0.0
    %3833 = vmatprep.subr.mxu0 0.0
    %3834 = vmatpush1.xpose.msra.mxu0 0.0
    %3835 = vmatprep.subr.mxu0 0.0
    %3836 = vmatpush1.xpose.msra.mxu0 0.0
    %3837 = vmatprep.subr.mxu0 0.0
    %3838 = vmatpush1.xpose.msra.mxu0 0.0
    %3839 = vmatprep.subr.mxu0 0.0
    %3840 = vmatpush1.xpose.msra.mxu0 0.0
    %3841 = vmatprep.subr.mxu0 0.0
    %3842 = vmatpush1.xpose.msra.mxu0 0.0
    %3843 = vmatprep.subr.mxu0 0.0
    %3844 = vmatpush1.xpose.msra.mxu0 0.0
    %3845 = vmatprep.subr.mxu0 0.0
    %3846 = vmatpush1.xpose.msra.mxu0 0.0
    %3847 = vmatprep.subr.mxu0 0.0
    %3848 = vmatpush1.xpose.msra.mxu0 0.0
    %3849 = vmatprep.subr.mxu0 0.0
    %3850 = vmatpush1.xpose.msra.mxu0 0.0
    %3851 = vmatprep.subr.mxu0 0.0
    %3852 = vmatpush1.xpose.msra.mxu0 0.0
    %3853 = vmatprep.subr.mxu0 0.0
    %3854 = vmatpush1.xpose.msra.mxu0 0.0
    %3855 = vmatprep.subr.mxu0 0.0
    %3856 = vmatpush1.xpose.msra.mxu0 0.0
    %3857 = vmatprep.subr.mxu0 0.0
    %3858 = vmatpush1.xpose.msra.mxu0 0.0
    %3859 = vmatprep.subr.mxu0 0.0
    %3860 = vmatpush1.xpose.msra.mxu0 0.0
    %3861 = vmatprep.subr.mxu0 0.0
    %3862 = vmatpush1.xpose.msra.mxu0 0.0
    %3863 = vmatprep.subr.mxu0 0.0
    %3864 = vmatpush1.xpose.msra.mxu0 0.0
    %3865 = vmatprep.subr.mxu0 0.0
    %3866 = vmatpush1.xpose.msra.mxu0 0.0
    %3867 = vmatprep.subr.mxu0 0.0
    %3868 = vmatpush1.xpose.msra.mxu0 0.0
    %3869 = vmatprep.subr.mxu0 0.0
    %3870 = vmatpush1.xpose.msra.mxu0 0.0
    %3871 = vmatprep.subr.mxu0 0.0
    %3872 = vmatpush1.xpose.msra.mxu0 0.0
    %3873 = vmatprep.subr.mxu0 0.0
    %3874 = vmatpush1.xpose.msra.mxu0 0.0
    %3875 = vmatprep.subr.mxu0 0.0
    %3876 = vmatpush1.xpose.msra.mxu0 0.0
    %3877 = vmatprep.subr.mxu0 0.0
    %3878 = vmatpush1.xpose.msra.mxu0 0.0
    %3879 = vmatprep.subr.mxu0 0.0
    %3880 = vmatpush1.xpose.msra.mxu0 0.0
    %3881 = vmatprep.subr.mxu0 0.0
    %3882 = vmatpush1.xpose.msra.mxu0 0.0
    %3883 = vmatprep.subr.mxu0 0.0
    %3884 = vmatpush1.xpose.msra.mxu0 0.0
    %3885 = vmatprep.subr.mxu0 0.0
    %3886 = vmatpush1.xpose.msra.mxu0 0.0
    %3887 = vmatprep.subr.mxu0 0.0
    %3888 = vmatpush1.xpose.msra.mxu0 0.0
    %3889 = vmatprep.mubr.f32.mxu0 0.0
    %3890 = vmatmul.mubr.f32.gmra.mrb[0].mxu0 %v3822
    %v3891 = vpop.f32.mrb[0].mxu0
    %v3892 = vadd.f32 0.0, %v3891
    %v3893 = vpop.f32.mrb[0].mxu0
    %3894 = vdwg.mxu0
    %v3895 = vsel %vm1678, %v3892, -inf
    %3896 = vmax.xlane.f32.xlu0 %v3895
    %v3897 = vpop.xlane.xlu0 %3896
    %v3898 = vsub.f32 %v3892, %v3897
    %v3899 = vmul.f32 %v3898, 1.442695
    %v3900 = vpow.pop %v3899
    %v3901 = vsel %vm1678, %v3900, 0.0
    %3902 = vadd.xlane.f32.xlu0 %v3901
    %v3903 = vpop.xlane.xlu0 %3902
    %v3904 = vrcp.pop %v3903
    %v3905 = vmul.f32 %v3900, %v3904
    %v3907 = vsel %vm1678, %v3905, 0
    %3909 = vmatprep.subr.mxu0 0.0
    %3910 = vmatpush1.msra.mxu0 %v3824
    %3911 = vmatprep.subr.mxu0 0.0
    %3912 = vmatpush1.msra.mxu0 0.0
    %3913 = vmatprep.subr.mxu0 0.0
    %3914 = vmatpush1.msra.mxu0 0.0
    %3915 = vmatprep.subr.mxu0 0.0
    %3916 = vmatpush1.msra.mxu0 0.0
    %3917 = vmatprep.subr.mxu0 0.0
    %3918 = vmatpush1.msra.mxu0 0.0
    %3919 = vmatprep.subr.mxu0 0.0
    %3920 = vmatpush1.msra.mxu0 0.0
    %3921 = vmatprep.subr.mxu0 0.0
    %3922 = vmatpush1.msra.mxu0 0.0
    %3923 = vmatprep.subr.mxu0 0.0
    %3924 = vmatpush1.msra.mxu0 0.0
    %3925 = vmatprep.subr.mxu0 0.0
    %3926 = vmatpush1.msra.mxu0 0.0
    %3927 = vmatprep.subr.mxu0 0.0
    %3928 = vmatpush1.msra.mxu0 0.0
    %3929 = vmatprep.subr.mxu0 0.0
    %3930 = vmatpush1.msra.mxu0 0.0
    %3931 = vmatprep.subr.mxu0 0.0
    %3932 = vmatpush1.msra.mxu0 0.0
    %3933 = vmatprep.subr.mxu0 0.0
    %3934 = vmatpush1.msra.mxu0 0.0
    %3935 = vmatprep.subr.mxu0 0.0
    %3936 = vmatpush1.msra.mxu0 0.0
    %3937 = vmatprep.subr.mxu0 0.0
    %3938 = vmatpush1.msra.mxu0 0.0
    %3939 = vmatprep.subr.mxu0 0.0
    %3940 = vmatpush1.msra.mxu0 0.0
    %3941 = vmatprep.subr.mxu0 0.0
    %3942 = vmatpush1.msra.mxu0 0.0
    %3943 = vmatprep.subr.mxu0 0.0
    %3944 = vmatpush1.msra.mxu0 0.0
    %3945 = vmatprep.subr.mxu0 0.0
    %3946 = vmatpush1.msra.mxu0 0.0
    %3947 = vmatprep.subr.mxu0 0.0
    %3948 = vmatpush1.msra.mxu0 0.0
    %3949 = vmatprep.subr.mxu0 0.0
    %3950 = vmatpush1.msra.mxu0 0.0
    %3951 = vmatprep.subr.mxu0 0.0
    %3952 = vmatpush1.msra.mxu0 0.0
    %3953 = vmatprep.subr.mxu0 0.0
    %3954 = vmatpush1.msra.mxu0 0.0
    %3955 = vmatprep.subr.mxu0 0.0
    %3956 = vmatpush1.msra.mxu0 0.0
    %3957 = vmatprep.subr.mxu0 0.0
    %3958 = vmatpush1.msra.mxu0 0.0
    %3959 = vmatprep.subr.mxu0 0.0
    %3960 = vmatpush1.msra.mxu0 0.0
    %3961 = vmatprep.subr.mxu0 0.0
    %3962 = vmatpush1.msra.mxu0 0.0
    %3963 = vmatprep.subr.mxu0 0.0
    %3964 = vmatpush1.msra.mxu0 0.0
    %3965 = vmatprep.subr.mxu0 0.0
    %3966 = vmatpush1.msra.mxu0 0.0
    %3967 = vmatprep.subr.mxu0 0.0
    %3968 = vmatpush1.msra.mxu0 0.0
    %3969 = vmatprep.subr.mxu0 0.0
    %3970 = vmatpush1.msra.mxu0 0.0
    %3971 = vmatprep.subr.mxu0 0.0
    %3972 = vmatpush1.msra.mxu0 0.0
    %3973 = vmatprep.mubr.f32.mxu0 0.0
    %3974 = vmatmul.mubr.f32.gmra.mrb[0].mxu0 %v3907
    %v3975 = vpop.f32.mrb[0].mxu0
    %v3976 = vadd.f32 0.0, %v3975
    %v3977 = vpop.f32.mrb[0].mxu0
    %3978 = vdwg.mxu0
    %v3979 = vadd.f32 %v3821, %v3976
    %v3980 = vld [vmem:[#allocation2 + $0x108] sm:$0xff]
    %v3981 = vld [vmem:[#allocation2 + $0x150] sm:$0xff]
    %v3982 = vld [vmem:[#allocation2 + $0x198] sm:$0xff]
    %3983 = vmatprep.subr.mxu0 0.0
    %3984 = vmatpush1.xpose.msra.mxu0 %v3981
    %3985 = vmatprep.subr.mxu0 0.0
    %3986 = vmatpush1.xpose.msra.mxu0 0.0
    %3987 = vmatprep.subr.mxu0 0.0
    %3988 = vmatpush1.xpose.msra.mxu0 0.0
    %3989 = vmatprep.subr.mxu0 0.0
    %3990 = vmatpush1.xpose.msra.mxu0 0.0
    %3991 = vmatprep.subr.mxu0 0.0
    %3992 = vmatpush1.xpose.msra.mxu0 0.0
    %3993 = vmatprep.subr.mxu0 0.0
    %3994 = vmatpush1.xpose.msra.mxu0 0.0
    %3995 = vmatprep.subr.mxu0 0.0
    %3996 = vmatpush1.xpose.msra.mxu0 0.0
    %3997 = vmatprep.subr.mxu0 0.0
    %3998 = vmatpush1.xpose.msra.mxu0 0.0
    %3999 = vmatprep.subr.mxu0 0.0
    %4000 = vmatpush1.xpose.msra.mxu0 0.0
    %4001 = vmatprep.subr.mxu0 0.0
    %4002 = vmatpush1.xpose.msra.mxu0 0.0
    %4003 = vmatprep.subr.mxu0 0.0
    %4004 = vmatpush1.xpose.msra.mxu0 0.0
    %4005 = vmatprep.subr.mxu0 0.0
    %4006 = vmatpush1.xpose.msra.mxu0 0.0
    %4007 = vmatprep.subr.mxu0 0.0
    %4008 = vmatpush1.xpose.msra.mxu0 0.0
    %4009 = vmatprep.subr.mxu0 0.0
    %4010 = vmatpush1.xpose.msra.mxu0 0.0
    %4011 = vmatprep.subr.mxu0 0.0
    %4012 = vmatpush1.xpose.msra.mxu0 0.0
    %4013 = vmatprep.subr.mxu0 0.0
    %4014 = vmatpush1.xpose.msra.mxu0 0.0
    %4015 = vmatprep.subr.mxu0 0.0
    %4016 = vmatpush1.xpose.msra.mxu0 0.0
    %4017 = vmatprep.subr.mxu0 0.0
    %4018 = vmatpush1.xpose.msra.mxu0 0.0
    %4019 = vmatprep.subr.mxu0 0.0
    %4020 = vmatpush1.xpose.msra.mxu0 0.0
    %4021 = vmatprep.subr.mxu0 0.0
    %4022 = vmatpush1.xpose.msra.mxu0 0.0
    %4023 = vmatprep.subr.mxu0 0.0
    %4024 = vmatpush1.xpose.msra.mxu0 0.0
    %4025 = vmatprep.subr.mxu0 0.0
    %4026 = vmatpush1.xpose.msra.mxu0 0.0
    %4027 = vmatprep.subr.mxu0 0.0
    %4028 = vmatpush1.xpose.msra.mxu0 0.0
    %4029 = vmatprep.subr.mxu0 0.0
    %4030 = vmatpush1.xpose.msra.mxu0 0.0
    %4031 = vmatprep.subr.mxu0 0.0
    %4032 = vmatpush1.xpose.msra.mxu0 0.0
    %4033 = vmatprep.subr.mxu0 0.0
    %4034 = vmatpush1.xpose.msra.mxu0 0.0
    %4035 = vmatprep.subr.mxu0 0.0
    %4036 = vmatpush1.xpose.msra.mxu0 0.0
    %4037 = vmatprep.subr.mxu0 0.0
    %4038 = vmatpush1.xpose.msra.mxu0 0.0
    %4039 = vmatprep.subr.mxu0 0.0
    %4040 = vmatpush1.xpose.msra.mxu0 0.0
    %4041 = vmatprep.subr.mxu0 0.0
    %4042 = vmatpush1.xpose.msra.mxu0 0.0
    %4043 = vmatprep.subr.mxu0 0.0
    %4044 = vmatpush1.xpose.msra.mxu0 0.0
    %4045 = vmatprep.subr.mxu0 0.0
    %4046 = vmatpush1.xpose.msra.mxu0 0.0
    %4047 = vmatprep.mubr.f32.mxu0 0.0
    %4048 = vmatmul.mubr.f32.gmra.mrb[0].mxu0 %v3980
    %v4049 = vpop.f32.mrb[0].mxu0
    %v4050 = vadd.f32 0.0, %v4049
    %v4051 = vpop.f32.mrb[0].mxu0
    %4052 = vdwg.mxu0
    %v4053 = vsel %vm1678, %v4050, -inf
    %4054 = vmax.xlane.f32.xlu0 %v4053
    %v4055 = vpop.xlane.xlu0 %4054
    %v4056 = vsub.f32 %v4050, %v4055
    %v4057 = vmul.f32 %v4056, 1.442695
    %v4058 = vpow.pop %v4057
    %v4059 = vsel %vm1678, %v4058, 0.0
    %4060 = vadd.xlane.f32.xlu0 %v4059
    %v4061 = vpop.xlane.xlu0 %4060
    %v4062 = vrcp.pop %v4061
    %v4063 = vmul.f32 %v4058, %v4062
    %v4065 = vsel %vm1678, %v4063, 0
    %4067 = vmatprep.subr.mxu0 0.0
    %4068 = vmatpush1.msra.mxu0 %v3982
    %4069 = vmatprep.subr.mxu0 0.0
    %4070 = vmatpush1.msra.mxu0 0.0
    %4071 = vmatprep.subr.mxu0 0.0
    %4072 = vmatpush1.msra.mxu0 0.0
    %4073 = vmatprep.subr.mxu0 0.0
    %4074 = vmatpush1.msra.mxu0 0.0
    %4075 = vmatprep.subr.mxu0 0.0
    %4076 = vmatpush1.msra.mxu0 0.0
    %4077 = vmatprep.subr.mxu0 0.0
    %4078 = vmatpush1.msra.mxu0 0.0
    %4079 = vmatprep.subr.mxu0 0.0
    %4080 = vmatpush1.msra.mxu0 0.0
    %4081 = vmatprep.subr.mxu0 0.0
    %4082 = vmatpush1.msra.mxu0 0.0
    %4083 = vmatprep.subr.mxu0 0.0
    %4084 = vmatpush1.msra.mxu0 0.0
    %4085 = vmatprep.subr.mxu0 0.0
    %4086 = vmatpush1.msra.mxu0 0.0
    %4087 = vmatprep.subr.mxu0 0.0
    %4088 = vmatpush1.msra.mxu0 0.0
    %4089 = vmatprep.subr.mxu0 0.0
    %4090 = vmatpush1.msra.mxu0 0.0
    %4091 = vmatprep.subr.mxu0 0.0
    %4092 = vmatpush1.msra.mxu0 0.0
    %4093 = vmatprep.subr.mxu0 0.0
    %4094 = vmatpush1.msra.mxu0 0.0
    %4095 = vmatprep.subr.mxu0 0.0
    %4096 = vmatpush1.msra.mxu0 0.0
    %4097 = vmatprep.subr.mxu0 0.0
    %4098 = vmatpush1.msra.mxu0 0.0
    %4099 = vmatprep.subr.mxu0 0.0
    %4100 = vmatpush1.msra.mxu0 0.0
    %4101 = vmatprep.subr.mxu0 0.0
    %4102 = vmatpush1.msra.mxu0 0.0
    %4103 = vmatprep.subr.mxu0 0.0
    %4104 = vmatpush1.msra.mxu0 0.0
    %4105 = vmatprep.subr.mxu0 0.0
    %4106 = vmatpush1.msra.mxu0 0.0
    %4107 = vmatprep.subr.mxu0 0.0
    %4108 = vmatpush1.msra.mxu0 0.0
    %4109 = vmatprep.subr.mxu0 0.0
    %4110 = vmatpush1.msra.mxu0 0.0
    %4111 = vmatprep.subr.mxu0 0.0
    %4112 = vmatpush1.msra.mxu0 0.0
    %4113 = vmatprep.subr.mxu0 0.0
    %4114 = vmatpush1.msra.mxu0 0.0
    %4115 = vmatprep.subr.mxu0 0.0
    %4116 = vmatpush1.msra.mxu0 0.0
    %4117 = vmatprep.subr.mxu0 0.0
    %4118 = vmatpush1.msra.mxu0 0.0
    %4119 = vmatprep.subr.mxu0 0.0
    %4120 = vmatpush1.msra.mxu0 0.0
    %4121 = vmatprep.subr.mxu0 0.0
    %4122 = vmatpush1.msra.mxu0 0.0
    %4123 = vmatprep.subr.mxu0 0.0
    %4124 = vmatpush1.msra.mxu0 0.0
    %4125 = vmatprep.subr.mxu0 0.0
    %4126 = vmatpush1.msra.mxu0 0.0
    %4127 = vmatprep.subr.mxu0 0.0
    %4128 = vmatpush1.msra.mxu0 0.0
    %4129 = vmatprep.subr.mxu0 0.0
    %4130 = vmatpush1.msra.mxu0 0.0
    %4131 = vmatprep.mubr.f32.mxu0 0.0
    %4132 = vmatmul.mubr.f32.gmra.mrb[0].mxu0 %v4065
    %v4133 = vpop.f32.mrb[0].mxu0
    %v4134 = vadd.f32 0.0, %v4133
    %v4135 = vpop.f32.mrb[0].mxu0
    %4136 = vdwg.mxu0
    %v4137 = vadd.f32 %v3979, %v4134
    %v4138 = vld [vmem:[#allocation2 + $0x110] sm:$0xff]
    %v4139 = vld [vmem:[#allocation2 + $0x158] sm:$0xff]
    %v4140 = vld [vmem:[#allocation2 + $0x1a0] sm:$0xff]
    %4141 = vmatprep.subr.mxu0 0.0
    %4142 = vmatpush1.xpose.msra.mxu0 %v4139
    %4143 = vmatprep.subr.mxu0 0.0
    %4144 = vmatpush1.xpose.msra.mxu0 0.0
    %4145 = vmatprep.subr.mxu0 0.0
    %4146 = vmatpush1.xpose.msra.mxu0 0.0
    %4147 = vmatprep.subr.mxu0 0.0
    %4148 = vmatpush1.xpose.msra.mxu0 0.0
    %4149 = vmatprep.subr.mxu0 0.0
    %4150 = vmatpush1.xpose.msra.mxu0 0.0
    %4151 = vmatprep.subr.mxu0 0.0
    %4152 = vmatpush1.xpose.msra.mxu0 0.0
    %4153 = vmatprep.subr.mxu0 0.0
    %4154 = vmatpush1.xpose.msra.mxu0 0.0
    %4155 = vmatprep.subr.mxu0 0.0
    %4156 = vmatpush1.xpose.msra.mxu0 0.0
    %4157 = vmatprep.subr.mxu0 0.0
    %4158 = vmatpush1.xpose.msra.mxu0 0.0
    %4159 = vmatprep.subr.mxu0 0.0
    %4160 = vmatpush1.xpose.msra.mxu0 0.0
    %4161 = vmatprep.subr.mxu0 0.0
    %4162 = vmatpush1.xpose.msra.mxu0 0.0
    %4163 = vmatprep.subr.mxu0 0.0
    %4164 = vmatpush1.xpose.msra.mxu0 0.0
    %4165 = vmatprep.subr.mxu0 0.0
    %4166 = vmatpush1.xpose.msra.mxu0 0.0
    %4167 = vmatprep.subr.mxu0 0.0
    %4168 = vmatpush1.xpose.msra.mxu0 0.0
    %4169 = vmatprep.subr.mxu0 0.0
    %4170 = vmatpush1.xpose.msra.mxu0 0.0
    %4171 = vmatprep.subr.mxu0 0.0
    %4172 = vmatpush1.xpose.msra.mxu0 0.0
    %4173 = vmatprep.subr.mxu0 0.0
    %4174 = vmatpush1.xpose.msra.mxu0 0.0
    %4175 = vmatprep.subr.mxu0 0.0
    %4176 = vmatpush1.xpose.msra.mxu0 0.0
    %4177 = vmatprep.subr.mxu0 0.0
    %4178 = vmatpush1.xpose.msra.mxu0 0.0
    %4179 = vmatprep.subr.mxu0 0.0
    %4180 = vmatpush1.xpose.msra.mxu0 0.0
    %4181 = vmatprep.subr.mxu0 0.0
    %4182 = vmatpush1.xpose.msra.mxu0 0.0
    %4183 = vmatprep.subr.mxu0 0.0
    %4184 = vmatpush1.xpose.msra.mxu0 0.0
    %4185 = vmatprep.subr.mxu0 0.0
    %4186 = vmatpush1.xpose.msra.mxu0 0.0
    %4187 = vmatprep.subr.mxu0 0.0
    %4188 = vmatpush1.xpose.msra.mxu0 0.0
    %4189 = vmatprep.subr.mxu0 0.0
    %4190 = vmatpush1.xpose.msra.mxu0 0.0
    %4191 = vmatprep.subr.mxu0 0.0
    %4192 = vmatpush1.xpose.msra.mxu0 0.0
    %4193 = vmatprep.subr.mxu0 0.0
    %4194 = vmatpush1.xpose.msra.mxu0 0.0
    %4195 = vmatprep.subr.mxu0 0.0
    %4196 = vmatpush1.xpose.msra.mxu0 0.0
    %4197 = vmatprep.subr.mxu0 0.0
    %4198 = vmatpush1.xpose.msra.mxu0 0.0
    %4199 = vmatprep.subr.mxu0 0.0
    %4200 = vmatpush1.xpose.msra.mxu0 0.0
    %4201 = vmatprep.subr.mxu0 0.0
    %4202 = vmatpush1.xpose.msra.mxu0 0.0
    %4203 = vmatprep.subr.mxu0 0.0
    %4204 = vmatpush1.xpose.msra.mxu0 0.0
    %4205 = vmatprep.mubr.f32.mxu0 0.0
    %4206 = vmatmul.mubr.f32.gmra.mrb[0].mxu0 %v4138
    %v4207 = vpop.f32.mrb[0].mxu0
    %v4208 = vadd.f32 0.0, %v4207
    %v4209 = vpop.f32.mrb[0].mxu0
    %4210 = vdwg.mxu0
    %v4211 = vsel %vm1678, %v4208, -inf
    %4212 = vmax.xlane.f32.xlu0 %v4211
    %v4213 = vpop.xlane.xlu0 %4212
    %v4214 = vsub.f32 %v4208, %v4213
    %v4215 = vmul.f32 %v4214, 1.442695
    %v4216 = vpow.pop %v4215
    %v4217 = vsel %vm1678, %v4216, 0.0
    %4218 = vadd.xlane.f32.xlu0 %v4217
    %v4219 = vpop.xlane.xlu0 %4218
    %v4220 = vrcp.pop %v4219
    %v4221 = vmul.f32 %v4216, %v4220
    %v4223 = vsel %vm1678, %v4221, 0
    %4225 = vmatprep.subr.mxu0 0.0
    %4226 = vmatpush1.msra.mxu0 %v4140
    %4227 = vmatprep.subr.mxu0 0.0
    %4228 = vmatpush1.msra.mxu0 0.0
    %4229 = vmatprep.subr.mxu0 0.0
    %4230 = vmatpush1.msra.mxu0 0.0
    %4231 = vmatprep.subr.mxu0 0.0
    %4232 = vmatpush1.msra.mxu0 0.0
    %4233 = vmatprep.subr.mxu0 0.0
    %4234 = vmatpush1.msra.mxu0 0.0
    %4235 = vmatprep.subr.mxu0 0.0
    %4236 = vmatpush1.msra.mxu0 0.0
    %4237 = vmatprep.subr.mxu0 0.0
    %4238 = vmatpush1.msra.mxu0 0.0
    %4239 = vmatprep.subr.mxu0 0.0
    %4240 = vmatpush1.msra.mxu0 0.0
    %4241 = vmatprep.subr.mxu0 0.0
    %4242 = vmatpush1.msra.mxu0 0.0
    %4243 = vmatprep.subr.mxu0 0.0
    %4244 = vmatpush1.msra.mxu0 0.0
    %4245 = vmatprep.subr.mxu0 0.0
    %4246 = vmatpush1.msra.mxu0 0.0
    %4247 = vmatprep.subr.mxu0 0.0
    %4248 = vmatpush1.msra.mxu0 0.0
    %4249 = vmatprep.subr.mxu0 0.0
    %4250 = vmatpush1.msra.mxu0 0.0
    %4251 = vmatprep.subr.mxu0 0.0
    %4252 = vmatpush1.msra.mxu0 0.0
    %4253 = vmatprep.subr.mxu0 0.0
    %4254 = vmatpush1.msra.mxu0 0.0
    %4255 = vmatprep.subr.mxu0 0.0
    %4256 = vmatpush1.msra.mxu0 0.0
    %4257 = vmatprep.subr.mxu0 0.0
    %4258 = vmatpush1.msra.mxu0 0.0
    %4259 = vmatprep.subr.mxu0 0.0
    %4260 = vmatpush1.msra.mxu0 0.0
    %4261 = vmatprep.subr.mxu0 0.0
    %4262 = vmatpush1.msra.mxu0 0.0
    %4263 = vmatprep.subr.mxu0 0.0
    %4264 = vmatpush1.msra.mxu0 0.0
    %4265 = vmatprep.subr.mxu0 0.0
    %4266 = vmatpush1.msra.mxu0 0.0
    %4267 = vmatprep.subr.mxu0 0.0
    %4268 = vmatpush1.msra.mxu0 0.0
    %4269 = vmatprep.subr.mxu0 0.0
    %4270 = vmatpush1.msra.mxu0 0.0
    %4271 = vmatprep.subr.mxu0 0.0
    %4272 = vmatpush1.msra.mxu0 0.0
    %4273 = vmatprep.subr.mxu0 0.0
    %4274 = vmatpush1.msra.mxu0 0.0
    %4275 = vmatprep.subr.mxu0 0.0
    %4276 = vmatpush1.msra.mxu0 0.0
    %4277 = vmatprep.subr.mxu0 0.0
    %4278 = vmatpush1.msra.mxu0 0.0
    %4279 = vmatprep.subr.mxu0 0.0
    %4280 = vmatpush1.msra.mxu0 0.0
    %4281 = vmatprep.subr.mxu0 0.0
    %4282 = vmatpush1.msra.mxu0 0.0
    %4283 = vmatprep.subr.mxu0 0.0
    %4284 = vmatpush1.msra.mxu0 0.0
    %4285 = vmatprep.subr.mxu0 0.0
    %4286 = vmatpush1.msra.mxu0 0.0
    %4287 = vmatprep.subr.mxu0 0.0
    %4288 = vmatpush1.msra.mxu0 0.0
    %4289 = vmatprep.mubr.f32.mxu0 0.0
    %4290 = vmatmul.mubr.f32.gmra.mrb[0].mxu0 %v4223
    %v4291 = vpop.f32.mrb[0].mxu0
    %v4292 = vadd.f32 0.0, %v4291
    %v4293 = vpop.f32.mrb[0].mxu0
    %4294 = vdwg.mxu0
    %v4295 = vadd.f32 %v4137, %v4292
    %v4296 = vld [vmem:[#allocation2 + $0x118] sm:$0xff]
    %v4297 = vld [vmem:[#allocation2 + $0x160] sm:$0xff]
    %v4298 = vld [vmem:[#allocation2 + $0x1a8] sm:$0xff]
    %4299 = vmatprep.subr.mxu0 0.0
    %4300 = vmatpush1.xpose.msra.mxu0 %v4297
    %4301 = vmatprep.subr.mxu0 0.0
    %4302 = vmatpush1.xpose.msra.mxu0 0.0
    %4303 = vmatprep.subr.mxu0 0.0
    %4304 = vmatpush1.xpose.msra.mxu0 0.0
    %4305 = vmatprep.subr.mxu0 0.0
    %4306 = vmatpush1.xpose.msra.mxu0 0.0
    %4307 = vmatprep.subr.mxu0 0.0
    %4308 = vmatpush1.xpose.msra.mxu0 0.0
    %4309 = vmatprep.subr.mxu0 0.0
    %4310 = vmatpush1.xpose.msra.mxu0 0.0
    %4311 = vmatprep.subr.mxu0 0.0
    %4312 = vmatpush1.xpose.msra.mxu0 0.0
    %4313 = vmatprep.subr.mxu0 0.0
    %4314 = vmatpush1.xpose.msra.mxu0 0.0
    %4315 = vmatprep.subr.mxu0 0.0
    %4316 = vmatpush1.xpose.msra.mxu0 0.0
    %4317 = vmatprep.subr.mxu0 0.0
    %4318 = vmatpush1.xpose.msra.mxu0 0.0
    %4319 = vmatprep.subr.mxu0 0.0
    %4320 = vmatpush1.xpose.msra.mxu0 0.0
    %4321 = vmatprep.subr.mxu0 0.0
    %4322 = vmatpush1.xpose.msra.mxu0 0.0
    %4323 = vmatprep.subr.mxu0 0.0
    %4324 = vmatpush1.xpose.msra.mxu0 0.0
    %4325 = vmatprep.subr.mxu0 0.0
    %4326 = vmatpush1.xpose.msra.mxu0 0.0
    %4327 = vmatprep.subr.mxu0 0.0
    %4328 = vmatpush1.xpose.msra.mxu0 0.0
    %4329 = vmatprep.subr.mxu0 0.0
    %4330 = vmatpush1.xpose.msra.mxu0 0.0
    %4331 = vmatprep.subr.mxu0 0.0
    %4332 = vmatpush1.xpose.msra.mxu0 0.0
    %4333 = vmatprep.subr.mxu0 0.0
    %4334 = vmatpush1.xpose.msra.mxu0 0.0
    %4335 = vmatprep.subr.mxu0 0.0
    %4336 = vmatpush1.xpose.msra.mxu0 0.0
    %4337 = vmatprep.subr.mxu0 0.0
    %4338 = vmatpush1.xpose.msra.mxu0 0.0
    %4339 = vmatprep.subr.mxu0 0.0
    %4340 = vmatpush1.xpose.msra.mxu0 0.0
    %4341 = vmatprep.subr.mxu0 0.0
    %4342 = vmatpush1.xpose.msra.mxu0 0.0
    %4343 = vmatprep.subr.mxu0 0.0
    %4344 = vmatpush1.xpose.msra.mxu0 0.0
    %4345 = vmatprep.subr.mxu0 0.0
    %4346 = vmatpush1.xpose.msra.mxu0 0.0
    %4347 = vmatprep.subr.mxu0 0.0
    %4348 = vmatpush1.xpose.msra.mxu0 0.0
    %4349 = vmatprep.subr.mxu0 0.0
    %4350 = vmatpush1.xpose.msra.mxu0 0.0
    %4351 = vmatprep.subr.mxu0 0.0
    %4352 = vmatpush1.xpose.msra.mxu0 0.0
    %4353 = vmatprep.subr.mxu0 0.0
    %4354 = vmatpush1.xpose.msra.mxu0 0.0
    %4355 = vmatprep.subr.mxu0 0.0
    %4356 = vmatpush1.xpose.msra.mxu0 0.0
    %4357 = vmatprep.subr.mxu0 0.0
    %4358 = vmatpush1.xpose.msra.mxu0 0.0
    %4359 = vmatprep.subr.mxu0 0.0
    %4360 = vmatpush1.xpose.msra.mxu0 0.0
    %4361 = vmatprep.subr.mxu0 0.0
    %4362 = vmatpush1.xpose.msra.mxu0 0.0
    %4363 = vmatprep.mubr.f32.mxu0 0.0
    %4364 = vmatmul.mubr.f32.gmra.mrb[0].mxu0 %v4296
    %v4365 = vpop.f32.mrb[0].mxu0
    %v4366 = vadd.f32 0.0, %v4365
    %v4367 = vpop.f32.mrb[0].mxu0
    %4368 = vdwg.mxu0
    %v4369 = vsel %vm1678, %v4366, -inf
    %4370 = vmax.xlane.f32.xlu0 %v4369
    %v4371 = vpop.xlane.xlu0 %4370
    %v4372 = vsub.f32 %v4366, %v4371
    %v4373 = vmul.f32 %v4372, 1.442695
    %v4374 = vpow.pop %v4373
    %v4375 = vsel %vm1678, %v4374, 0.0
    %4376 = vadd.xlane.f32.xlu0 %v4375
    %v4377 = vpop.xlane.xlu0 %4376
    %v4378 = vrcp.pop %v4377
    %v4379 = vmul.f32 %v4374, %v4378
    %v4381 = vsel %vm1678, %v4379, 0
    %4383 = vmatprep.subr.mxu0 0.0
    %4384 = vmatpush1.msra.mxu0 %v4298
    %4385 = vmatprep.subr.mxu0 0.0
    %4386 = vmatpush1.msra.mxu0 0.0
    %4387 = vmatprep.subr.mxu0 0.0
    %4388 = vmatpush1.msra.mxu0 0.0
    %4389 = vmatprep.subr.mxu0 0.0
    %4390 = vmatpush1.msra.mxu0 0.0
    %4391 = vmatprep.subr.mxu0 0.0
    %4392 = vmatpush1.msra.mxu0 0.0
    %4393 = vmatprep.subr.mxu0 0.0
    %4394 = vmatpush1.msra.mxu0 0.0
    %4395 = vmatprep.subr.mxu0 0.0
    %4396 = vmatpush1.msra.mxu0 0.0
    %4397 = vmatprep.subr.mxu0 0.0
    %4398 = vmatpush1.msra.mxu0 0.0
    %4399 = vmatprep.subr.mxu0 0.0
    %4400 = vmatpush1.msra.mxu0 0.0
    %4401 = vmatprep.subr.mxu0 0.0
    %4402 = vmatpush1.msra.mxu0 0.0
    %4403 = vmatprep.subr.mxu0 0.0
    %4404 = vmatpush1.msra.mxu0 0.0
    %4405 = vmatprep.subr.mxu0 0.0
    %4406 = vmatpush1.msra.mxu0 0.0
    %4407 = vmatprep.subr.mxu0 0.0
    %4408 = vmatpush1.msra.mxu0 0.0
    %4409 = vmatprep.subr.mxu0 0.0
    %4410 = vmatpush1.msra.mxu0 0.0
    %4411 = vmatprep.subr.mxu0 0.0
    %4412 = vmatpush1.msra.mxu0 0.0
    %4413 = vmatprep.subr.mxu0 0.0
    %4414 = vmatpush1.msra.mxu0 0.0
    %4415 = vmatprep.subr.mxu0 0.0
    %4416 = vmatpush1.msra.mxu0 0.0
    %4417 = vmatprep.subr.mxu0 0.0
    %4418 = vmatpush1.msra.mxu0 0.0
    %4419 = vmatprep.subr.mxu0 0.0
    %4420 = vmatpush1.msra.mxu0 0.0
    %4421 = vmatprep.subr.mxu0 0.0
    %4422 = vmatpush1.msra.mxu0 0.0
    %4423 = vmatprep.subr.mxu0 0.0
    %4424 = vmatpush1.msra.mxu0 0.0
    %4425 = vmatprep.subr.mxu0 0.0
    %4426 = vmatpush1.msra.mxu0 0.0
    %4427 = vmatprep.subr.mxu0 0.0
    %4428 = vmatpush1.msra.mxu0 0.0
    %4429 = vmatprep.subr.mxu0 0.0
    %4430 = vmatpush1.msra.mxu0 0.0
    %4431 = vmatprep.subr.mxu0 0.0
    %4432 = vmatpush1.msra.mxu0 0.0
    %4433 = vmatprep.subr.mxu0 0.0
    %4434 = vmatpush1.msra.mxu0 0.0
    %4435 = vmatprep.subr.mxu0 0.0
    %4436 = vmatpush1.msra.mxu0 0.0
    %4437 = vmatprep.subr.mxu0 0.0
    %4438 = vmatpush1.msra.mxu0 0.0
    %4439 = vmatprep.subr.mxu0 0.0
    %4440 = vmatpush1.msra.mxu0 0.0
    %4441 = vmatprep.subr.mxu0 0.0
    %4442 = vmatpush1.msra.mxu0 0.0
    %4443 = vmatprep.subr.mxu0 0.0
    %4444 = vmatpush1.msra.mxu0 0.0
    %4445 = vmatprep.subr.mxu0 0.0
    %4446 = vmatpush1.msra.mxu0 0.0
    %4447 = vmatprep.mubr.f32.mxu0 0.0
    %4448 = vmatmul.mubr.f32.gmra.mrb[0].mxu0 %v4381
    %v4449 = vpop.f32.mrb[0].mxu0
    %v4450 = vadd.f32 0.0, %v4449
    %v4451 = vpop.f32.mrb[0].mxu0
    %4452 = vdwg.mxu0
    %v4453 = vadd.f32 %v4295, %v4450
    %v4454 = vadd.f32 %v4453, %v3030
    %4455 = vst [vmem:[%s3 + $0x8] sm:$0xff] %v4454
    // Predicated region
    $region22: #{multi_head_attention.1} parent=1 // pred_check
      _
    $region23: #{multi_head_attention.1} parent=1 // pred_check_branch
      %4457 = sbr.rel (0) target = $region25
    $region24: #{multi_head_attention.1} parent=1 // pred_region
      _
    $region25: #{multi_head_attention.1} parent=1 // pred_fallthru
      _
    // Predicated region
    $region26: #{multi_head_attention.1} parent=1 // pred_check
      _
    $region27: #{multi_head_attention.1} parent=1 // pred_check_branch
      %4459 = sbr.rel (0) target = $region29
    $region28: #{multi_head_attention.1} parent=1 // pred_region
      _
    $region29: #{multi_head_attention.1} parent=1 // pred_fallthru
      _
    %4460 = vsyncpa [#allocation4], 1
    %4461 = vsyncpa [#allocation6], 1

</llo_original>
